<compile_context>
chip_gen: v5e
topology: v5e:2x2
jax: 0.10.0
libtpu: 0.0.40
codegen_flags: <defaults>
</compile_context>

<pallas_src>
import functools

import jax
import jax.numpy as jnp
import numpy as np
from jax.experimental import pallas as pl
from jax.experimental.pallas import tpu as pltpu


# ----------------------------------------------------------------------------
# helpers
# ----------------------------------------------------------------------------
def _round_up(x, m):
    return ((x + m - 1) // m) * m


def _choose_tn(N, tn_max):
    """Largest N-tile that is the full N, or a 128-multiple divisor of N."""
    if N <= tn_max:
        return N
    t = (tn_max // 128) * 128
    while t > 128:
        if N % t == 0:
            return t
        t -= 128
    return 128


def _choose_tk(K, tk_keep_whole=2048, tk_tile=1024):
    """Keep K whole if it fits comfortably in VMEM; otherwise tile (zero-pad)."""
    if K <= tk_keep_whole:
        return K, K
    return tk_tile, _round_up(K, tk_tile)


# ----------------------------------------------------------------------------
# Pallas kernels
# ----------------------------------------------------------------------------
def _matmul_bias_kernel(x_ref, w_ref, b_ref, o_ref, acc_ref):
    k = pl.program_id(2)

    @pl.when(k == 0)
    def _init():
        acc_ref[...] = jnp.zeros_like(acc_ref)

    acc_ref[...] += jnp.dot(x_ref[...].astype(jnp.bfloat16), w_ref[...],
                            preferred_element_type=jnp.float32)

    @pl.when(k == pl.num_programs(2) - 1)
    def _store():
        o_ref[...] = (acc_ref[...] + b_ref[...]).astype(o_ref.dtype)


def matmul_bias(x, w, b, *, tm_max=512, tn_max=512):
    """y = x @ w + b, tiled over rows, output columns and (if needed) K.

    x:(M,K) f32, w:(K,N) f32 (cast to bf16 for the MXU), b:(N,) f32.
    Weight / bias column tiles stay resident per (i, j) tile; rows are padded
    to a multiple of 8 so every block is sublane-aligned; K is zero-padded if
    it has to be tiled (zeros contribute nothing to the accumulation).
    """
    M, K = x.shape
    N = w.shape[1]

    tm = min(_round_up(M, 8), tm_max)
    m_pad = _round_up(M, tm)
    if m_pad != M:
        x = jnp.pad(x, ((0, m_pad - M), (0, 0)))
    tn = _choose_tn(N, tn_max)
    tk, k_pad = _choose_tk(K)
    if k_pad != K:
        x = jnp.pad(x, ((0, 0), (0, k_pad - K)))
        w = jnp.pad(w, ((0, k_pad - K), (0, 0)))

    grid = (m_pad // tm, N // tn, k_pad // tk)
    out = pl.pallas_call(
        _matmul_bias_kernel,
        out_shape=jax.ShapeDtypeStruct((m_pad, N), jnp.float32),
        grid=grid,
        in_specs=[pl.BlockSpec((tm, tk), lambda i, j, k: (i, k)),
                  pl.BlockSpec((tk, tn), lambda i, j, k: (k, j)),
                  pl.BlockSpec((1, tn), lambda i, j, k: (0, j))],
        out_specs=pl.BlockSpec((tm, tn), lambda i, j, k: (i, j)),
        scratch_shapes=[pltpu.VMEM((tm, tn), jnp.float32)],
        compiler_params=pltpu.CompilerParams(
            dimension_semantics=("parallel", "parallel", "arbitrary")),
    )(x, w.astype(jnp.bfloat16), b.reshape(1, N).astype(jnp.float32))
    return out[:M]


def _encoder_kernel(tap_ref, itap_ref, h_ref, vec_ref, w_ref, o_ref, acc_ref):
    """One fused (LayerNorm + Linear + residual) block step.

    grid = (row_tiles, depth); the activation tile lives in `acc_ref` (VMEM)
    across the depth axis, so it never round-trips HBM between blocks.
    `tap_ref` (scalar prefetch) drives the output index_map; `itap_ref` gates
    the HBM tap writeback so non-tap blocks do zero output stores.
    """
    del tap_ref
    d = pl.program_id(1)

    @pl.when(d == 0)
    def _init():
        acc_ref[...] = h_ref[...]

    x = acc_ref[...]                                   # f32 (tm, D)
    mu = jnp.mean(x, axis=-1, keepdims=True)
    xc = x - mu
    var = jnp.mean(xc * xc, axis=-1, keepdims=True)
    xn = xc * jax.lax.rsqrt(var + 1e-5)                # PyTorch LN eps
    gamma = vec_ref[0, 0:1, :]
    beta = vec_ref[0, 1:2, :]
    bias = vec_ref[0, 2:3, :]
    hn = xn * gamma + beta
    y = jnp.dot(hn.astype(jnp.bfloat16), w_ref[0],
                preferred_element_type=jnp.float32)
    new = x + y + bias
    acc_ref[...] = new

    # Only tap blocks write the output buffer; the HBM flush happens when the
    # output block index (tap slot) changes, i.e. right after each tap block.
    @pl.when(itap_ref[d] == 1)
    def _tap():
        o_ref[0] = new.astype(o_ref.dtype)


def vim_encoder(h, vecs, ws, out_indices, *, tm_max=512):
    """Run out_indices[-1]+1 fused blocks; return tapped activations
    (n_taps, M, D).  Activation stays resident in VMEM across the depth axis."""
    M, D = h.shape
    out_indices = tuple(int(i) for i in out_indices)
    assert list(out_indices) == sorted(out_indices), "out_indices must be sorted"
    n_taps = len(out_indices)
    eff_depth = out_indices[-1] + 1            # later blocks never affect outputs
    assert eff_depth <= ws.shape[0]

    tm = min(_round_up(M, 8), tm_max)
    m_pad = _round_up(M, tm)
    if m_pad != M:
        h = jnp.pad(h, ((0, m_pad - M), (0, 0)))

    # tap_slot[d] = output buffer holding the activation produced by block d;
    # is_tap[d]   = 1 iff block d is one of out_indices (flush happens right
    #               after it because the output block index then changes).
    idx = np.arange(eff_depth)
    tap_slot = jnp.asarray(
        np.searchsorted(np.asarray(out_indices), idx, side="left").astype(np.int32))
    is_tap = jnp.asarray(np.isin(idx, np.asarray(out_indices)).astype(np.int32))

    grid = (m_pad // tm, eff_depth)
    taps = pl.pallas_call(
        _encoder_kernel,
        out_shape=jax.ShapeDtypeStruct((n_taps, m_pad, D), jnp.float32),
        grid_spec=pltpu.PrefetchScalarGridSpec(
            num_scalar_prefetch=2,
            grid=grid,
            in_specs=[
                pl.BlockSpec((tm, D), lambda i, d, tap, itap: (i, 0)),
                pl.BlockSpec((1, 3, D), lambda i, d, tap, itap: (d, 0, 0)),
                pl.BlockSpec((1, D, D), lambda i, d, tap, itap: (d, 0, 0)),
            ],
            out_specs=pl.BlockSpec((1, tm, D),
                                   lambda i, d, tap, itap: (tap[d], i, 0)),
            scratch_shapes=[pltpu.VMEM((tm, D), jnp.float32)],
        ),
        compiler_params=pltpu.CompilerParams(
            dimension_semantics=("parallel", "arbitrary")),
    )(tap_slot, is_tap, h, vecs, ws.astype(jnp.bfloat16))
    return taps[:, :M, :]


# ----------------------------------------------------------------------------
# Glue: patch extraction / im2col / layout plumbing (plain JAX, boundary ops)
# ----------------------------------------------------------------------------
def extract_patches_nchw(x, p):
    """NCHW -> (B*Hp*Wp, C*p*p) with per-patch (c, ki, kj) ordering."""
    B, C, H, W = x.shape
    Hp, Wp = H // p, W // p
    xr = x.reshape(B, C, Hp, p, Wp, p)
    xr = jnp.transpose(xr, (0, 2, 4, 1, 3, 5))          # (B, Hp, Wp, C, p, p)
    return xr.reshape(B * Hp * Wp, C * p * p), Hp, Wp


def im2col_nhwc(x, k, stride, pad):
    """NHWC -> (B*Ho*Wo, k*k*C) patches with (ki, kj, c) ordering."""
    B, H, W, C = x.shape
    xp = jnp.pad(x, ((0, 0), (pad, pad), (pad, pad), (0, 0)))
    Ho = (H + 2 * pad - k) // stride + 1
    Wo = (W + 2 * pad - k) // stride + 1
    cols = []
    for di in range(k):
        for dj in range(k):
            cols.append(xp[:, di:di + Ho * stride:stride,
                           dj:dj + Wo * stride:stride, :])
    patches = jnp.concatenate(cols, axis=-1)             # (B, Ho, Wo, k*k*C)
    return patches.reshape(B * Ho * Wo, k * k * C), Ho, Wo


# ----------------------------------------------------------------------------
# Parameter initialization (deterministic, synthetic)
# ----------------------------------------------------------------------------
def init_params(key, *, in_chans, embed_dim, patch_size, num_tokens, depth):
    D = embed_dim
    ks = jax.random.split(key, 16)
    p = {}
    p["cls_token"] = 0.02 * jax.random.normal(ks[0], (1, 1, D), jnp.float32)
    p["pos_embed"] = 0.02 * jax.random.normal(ks[1], (1, num_tokens + 1, D),
                                              jnp.float32)
    # patch embed: Conv2d(in_chans, D, patch_size, stride=patch_size)
    p["pe_w"] = 0.02 * jax.random.normal(
        ks[2], (in_chans * patch_size * patch_size, D), jnp.float32)
    p["pe_b"] = jnp.zeros((D,), jnp.float32)
    # encoder blocks (stand-in Vim blocks) — stacked for the fused depth loop
    p["gammas"] = jnp.ones((depth, 1, D), jnp.float32)
    p["betas"] = jnp.zeros((depth, 1, D), jnp.float32)
    p["ws"] = 0.02 * jax.random.normal(ks[3], (depth, D, D), jnp.float32)
    p["bs"] = jnp.zeros((depth, 1, D), jnp.float32)
    # proj_res2: ConvTranspose2d(D, 192, 2, stride=2); pt weight (D, 192, 2, 2)
    w2 = 0.02 * jax.random.normal(ks[4], (D, 192, 2, 2), jnp.float32)
    p["res2_w"] = w2.reshape(D, 192 * 2 * 2)             # cols ordered (o, di, dj)
    p["res2_b"] = 0.01 * jax.random.normal(ks[5], (192,), jnp.float32)
    # proj_res3: Conv2d(D, 256, 1); pt weight (256, D, 1, 1)
    w3 = 0.02 * jax.random.normal(ks[6], (256, D), jnp.float32)
    p["res3_w"] = w3.T
    p["res3_b"] = 0.01 * jax.random.normal(ks[7], (256,), jnp.float32)
    # proj_res4: Conv2d(D, 384, 3, stride=2, padding=1); pt weight (384, D, 3, 3)
    w4 = 0.02 * jax.random.normal(ks[8], (384, D, 3, 3), jnp.float32)
    p["res4_w"] = jnp.transpose(w4, (2, 3, 1, 0)).reshape(3 * 3 * D, 384)
    p["res4_b"] = 0.01 * jax.random.normal(ks[9], (384,), jnp.float32)
    # proj_res5: Conv2d(D, 512, 3, stride=4, padding=1); pt weight (512, D, 3, 3)
    w5 = 0.02 * jax.random.normal(ks[10], (512, D, 3, 3), jnp.float32)
    p["res5_w"] = jnp.transpose(w5, (2, 3, 1, 0)).reshape(3 * 3 * D, 512)
    p["res5_b"] = 0.01 * jax.random.normal(ks[11], (512,), jnp.float32)
    return p


# ----------------------------------------------------------------------------
# Forward pass
# ----------------------------------------------------------------------------
def vim_backbone_forward(params, x, *, img_size, patch_size, embed_dim,
                         depth, out_indices):
    B = x.shape[0]
    H = W = img_size // patch_size
    D = embed_dim
    L = H * W + 1  # tokens + cls
    assert params["ws"].shape[0] == depth

    # --- Vim encoder: patch embed -> cls/pos -> fused block stack (taps) ----
    patches, _, _ = extract_patches_nchw(x, patch_size)           # (B*HW, C*p*p)
    tok = matmul_bias(patches, params["pe_w"], params["pe_b"])    # Pallas matmul
    tok = tok.reshape(B, H * W, D)
    cls = jnp.broadcast_to(params["cls_token"], (B, 1, D))
    tok = jnp.concatenate([cls, tok], axis=1) + params["pos_embed"]  # (B, L, D)

    # pack per-block LN gamma/beta + linear bias into one (depth, 3, D) tensor
    vecs = jnp.concatenate([params["gammas"], params["betas"], params["bs"]],
                           axis=1)
    taps = vim_encoder(tok.reshape(B * L, D), vecs, params["ws"],
                       out_indices)                               # (n_taps, B*L, D)

    # --- strip cls token, tokens -> NHWC feature maps ------------------------
    fmaps_nhwc = []
    for t in range(len(out_indices)):
        f = taps[t].reshape(B, L, D)
        if f.shape[1] == H * W + 1:
            f = f[:, 1:, :]
        fmaps_nhwc.append(f.reshape(B, H, W, D))   # row-major tokens == (i, j)

    # NOTE: everything stays NHWC (lane-dense) until the single boundary
    # transpose per output, which is required because the module's outputs
    # are NCHW feature maps.

    # --- res2: ConvTranspose2d(D, 192, 2, stride=2) as matmul + depth2space --
    x0 = fmaps_nhwc[0].reshape(B * H * W, D)
    y2 = matmul_bias(x0, params["res2_w"], jnp.repeat(params["res2_b"], 4))
    y2 = y2.reshape(B, H, W, 192, 2, 2)
    res2 = jnp.transpose(y2, (0, 3, 1, 4, 2, 5)).reshape(B, 192, 2 * H, 2 * W)

    # --- res3: 1x1 conv ------------------------------------------------------
    x1 = fmaps_nhwc[1].reshape(B * H * W, D)
    y3 = matmul_bias(x1, params["res3_w"], params["res3_b"])
    res3 = jnp.transpose(y3.reshape(B, H, W, 256), (0, 3, 1, 2))

    # --- res4: 3x3 conv, stride 2, pad 1 -------------------------------------
    p4, Ho4, Wo4 = im2col_nhwc(fmaps_nhwc[2], 3, 2, 1)
    y4 = matmul_bias(p4, params["res4_w"], params["res4_b"])
    res4 = jnp.transpose(y4.reshape(B, Ho4, Wo4, 384), (0, 3, 1, 2))

    # --- res5: 3x3 conv, stride 4, pad 1 -------------------------------------
    p5, Ho5, Wo5 = im2col_nhwc(fmaps_nhwc[3], 3, 4, 1)
    y5 = matmul_bias(p5, params["res5_w"], params["res5_b"])
    res5 = jnp.transpose(y5.reshape(B, Ho5, Wo5, 512), (0, 3, 1, 2))

    return {"res2": res2, "res3": res3, "res4": res4, "res5": res5}


# ----------------------------------------------------------------------------
if __name__ == "__main__":
    # Small, module-consistent shapes.
    IMG, PATCH, CIN, D, DEPTH = 16, 4, 3, 32, 8
    OUT_IDX = (1, 3, 5, 7)
    B = 2
    HW = (IMG // PATCH) ** 2

    key = jax.random.PRNGKey(0)
    kx, kp = jax.random.split(key)
    x = jax.random.normal(kx, (B, CIN, IMG, IMG), jnp.float32)   # NCHW input
    params = init_params(kp, in_chans=CIN, embed_dim=D, patch_size=PATCH,
                         num_tokens=HW, depth=DEPTH)

    fwd = jax.jit(functools.partial(
        vim_backbone_forward, img_size=IMG, patch_size=PATCH,
        embed_dim=D, depth=DEPTH, out_indices=OUT_IDX))
    out = fwd(params, x)
    jax.block_until_ready(out)

    H = W = IMG // PATCH
    assert out["res2"].shape == (B, 192, 2 * H, 2 * W)
    assert out["res3"].shape == (B, 256, H, W)
    assert out["res4"].shape == (B, 384, (H + 2 - 3) // 2 + 1, (W + 2 - 3) // 2 + 1)
    assert out["res5"].shape == (B, 512, (H + 2 - 3) // 4 + 1, (W + 2 - 3) // 4 + 1)
    assert all(bool(jnp.all(jnp.isfinite(v))) for v in out.values())
    print("KERNEL_OK")
</pallas_src>

<mosaic_0001>
module attributes {stable_mosaic.version = 11 : i64} {
  func.func @_matmul_bias_kernel(%arg0: i32, %arg1: i32, %arg2: i32, %arg3: memref<32x48xf32, #tpu.memory_space<vmem>>, %arg4: memref<48x32xbf16, #tpu.memory_space<vmem>>, %arg5: memref<1x32xf32, #tpu.memory_space<vmem>>, %arg6: memref<32x32xf32, #tpu.memory_space<vmem>>, %arg7: memref<32x32xf32, #tpu.memory_space<vmem>>) attributes {dimension_semantics = [#tpu.dimension_semantics<parallel>, #tpu.dimension_semantics<parallel>, #tpu.dimension_semantics<arbitrary>], iteration_bounds = array<i64: 1, 1, 1>, scalar_prefetch = 0 : i64, scratch_operands = 1 : i64, tpu.core_type = #tpu.core_type<tc>, window_params = [{transform_indices = @transform_0, window_bounds = array<i64: 32, 48>}, {transform_indices = @transform_1, window_bounds = array<i64: 48, 32>}, {transform_indices = @transform_2, window_bounds = array<i64: 1, 32>}, {transform_indices = @transform_3, window_bounds = array<i64: 32, 32>}]} {
    %c0_i32 = arith.constant 0 : i32
    %0 = arith.cmpi eq, %arg2, %c0_i32 : i32
    %1 = arith.extui %0 : i1 to i32
    %c0_i32_0 = arith.constant 0 : i32
    %2 = arith.cmpi ne, %1, %c0_i32_0 : i32
    scf.if %2 {
      %cst_10 = arith.constant 0.000000e+00 : f32
      %13 = vector.broadcast %cst_10 : f32 to vector<32x32xf32>
      %c0_11 = arith.constant 0 : index
      %c0_12 = arith.constant 0 : index
      %14 = vector.load %arg7[%c0_11, %c0_12] : memref<32x32xf32, #tpu.memory_space<vmem>>, vector<32x32xf32>
      tpu.vector_store %arg7[%c0_11, %c0_12], %13 {strides = array<i32>} : memref<32x32xf32, #tpu.memory_space<vmem>>, vector<32x32xf32>,
    } else {
    }
    %c0 = arith.constant 0 : index
    %c0_1 = arith.constant 0 : index
    %3 = vector.load %arg7[%c0, %c0_1] : memref<32x32xf32, #tpu.memory_space<vmem>>, vector<32x32xf32>
    %c0_2 = arith.constant 0 : index
    %c0_3 = arith.constant 0 : index
    %4 = vector.load %arg3[%c0_2, %c0_3] : memref<32x48xf32, #tpu.memory_space<vmem>>, vector<32x48xf32>
    %5 = arith.truncf %4 : vector<32x48xf32> to vector<32x48xbf16>
    %c0_4 = arith.constant 0 : index
    %c0_5 = arith.constant 0 : index
    %6 = vector.load %arg4[%c0_4, %c0_5] : memref<48x32xbf16, #tpu.memory_space<vmem>>, vector<48x32xbf16>
    %cst = arith.constant dense<0.000000e+00> : vector<32x32xf32>
    %7 = tpu.matmul %5, %6, %cst {dimension_numbers = #tpu.dot_dimension_numbers<[1], [0], [0], [1], [0, 0, 1, 1], [], []>} : vector<32x48xbf16>, vector<48x32xbf16>, vector<32x32xf32> -> vector<32x32xf32>
    %8 = arith.addf %3, %7 : vector<32x32xf32>
    %c0_6 = arith.constant 0 : index
    %c0_7 = arith.constant 0 : index
    %9 = vector.load %arg7[%c0_6, %c0_7] : memref<32x32xf32, #tpu.memory_space<vmem>>, vector<32x32xf32>
    tpu.vector_store %arg7[%c0_6, %c0_7], %8 {strides = array<i32>} : memref<32x32xf32, #tpu.memory_space<vmem>>, vector<32x32xf32>,
    %c0_i32_8 = arith.constant 0 : i32
    %10 = arith.cmpi eq, %arg2, %c0_i32_8 : i32
    %11 = arith.extui %10 : i1 to i32
    %c0_i32_9 = arith.constant 0 : i32
    %12 = arith.cmpi ne, %11, %c0_i32_9 : i32
    scf.if %12 {
      %c0_10 = arith.constant 0 : index
      %c0_11 = arith.constant 0 : index
      %13 = vector.load %arg7[%c0_10, %c0_11] : memref<32x32xf32, #tpu.memory_space<vmem>>, vector<32x32xf32>
      %c0_12 = arith.constant 0 : index
      %c0_13 = arith.constant 0 : index
      %14 = vector.load %arg5[%c0_12, %c0_13] : memref<1x32xf32, #tpu.memory_space<vmem>>, vector<1x32xf32>
      %15 = vector.broadcast %14 : vector<1x32xf32> to vector<32x32xf32>
      %16 = arith.addf %13, %15 : vector<32x32xf32>
      %c0_14 = arith.constant 0 : index
      %c0_15 = arith.constant 0 : index
      %17 = vector.load %arg6[%c0_14, %c0_15] : memref<32x32xf32, #tpu.memory_space<vmem>>, vector<32x32xf32>
      tpu.vector_store %arg6[%c0_14, %c0_15], %16 {strides = array<i32>} : memref<32x32xf32, #tpu.memory_space<vmem>>, vector<32x32xf32>,
    } else {
    }
    return
  }
  func.func @transform_0(%arg0: i32, %arg1: i32, %arg2: i32) -> (i32, i32) {
    %c0_i32 = arith.constant 0 : i32
    return %arg0, %arg2 : i32, i32
  }
  func.func @transform_1(%arg0: i32, %arg1: i32, %arg2: i32) -> (i32, i32) {
    %c0_i32 = arith.constant 0 : i32
    return %arg2, %arg1 : i32, i32
  }
  func.func @transform_2(%arg0: i32, %arg1: i32, %arg2: i32) -> (i32, i32) {
    %c0_i32 = arith.constant 0 : i32
    %c0_i32_0 = arith.constant 0 : i32
    return %c0_i32, %arg1 : i32, i32
  }
  func.func @transform_3(%arg0: i32, %arg1: i32, %arg2: i32) -> (i32, i32) {
    %c0_i32 = arith.constant 0 : i32
    return %arg0, %arg1 : i32, i32
  }
}

module attributes {stable_mosaic.version = 11 : i64} {
  func.func @_encoder_kernel(%arg0: i32, %arg1: i32, %arg2: memref<8xi32, #tpu.memory_space<smem>>, %arg3: memref<8xi32, #tpu.memory_space<smem>>, %arg4: memref<40x32xf32, #tpu.memory_space<vmem>>, %arg5: memref<1x3x32xf32, #tpu.memory_space<vmem>>, %arg6: memref<1x32x32xbf16, #tpu.memory_space<vmem>>, %arg7: memref<1x40x32xf32, #tpu.memory_space<vmem>>, %arg8: memref<40x32xf32, #tpu.memory_space<vmem>>) attributes {dimension_semantics = [#tpu.dimension_semantics<parallel>, #tpu.dimension_semantics<arbitrary>], iteration_bounds = array<i64: 1, 8>, scalar_prefetch = 2 : i64, scratch_operands = 1 : i64, tpu.core_type = #tpu.core_type<tc>, window_params = [{transform_indices = @transform_0, window_bounds = array<i64: 40, 32>}, {transform_indices = @transform_1, window_bounds = array<i64: 1, 3, 32>}, {transform_indices = @transform_2, window_bounds = array<i64: 1, 32, 32>}, {transform_indices = @transform_3, window_bounds = array<i64: 1, 40, 32>}]} {
    %c0_i32 = arith.constant 0 : i32
    %0 = arith.cmpi eq, %arg1, %c0_i32 : i32
    %1 = arith.extui %0 : i1 to i32
    %c0_i32_0 = arith.constant 0 : i32
    %2 = arith.cmpi ne, %1, %c0_i32_0 : i32
    scf.if %2 {
      %c0_20 = arith.constant 0 : index
      %c0_21 = arith.constant 0 : index
      %43 = vector.load %arg4[%c0_20, %c0_21] : memref<40x32xf32, #tpu.memory_space<vmem>>, vector<40x32xf32>
      %c0_22 = arith.constant 0 : index
      %c0_23 = arith.constant 0 : index
      %44 = vector.load %arg8[%c0_22, %c0_23] : memref<40x32xf32, #tpu.memory_space<vmem>>, vector<40x32xf32>
      tpu.vector_store %arg8[%c0_22, %c0_23], %43 {strides = array<i32>} : memref<40x32xf32, #tpu.memory_space<vmem>>, vector<40x32xf32>,
    } else {
    }
    %c0 = arith.constant 0 : index
    %c0_1 = arith.constant 0 : index
    %3 = vector.load %arg8[%c0, %c0_1] : memref<40x32xf32, #tpu.memory_space<vmem>>, vector<40x32xf32>
    %cst = arith.constant dense<0.000000e+00> : vector<40xf32>
    %4 = vector.multi_reduction <add>, %3, %cst [1] : vector<40x32xf32> to vector<40xf32>
    %5 = vector.shape_cast %4 : vector<40xf32> to vector<40x1xf32>
    %cst_2 = arith.constant 3.200000e+01 : f32
    %6 = vector.broadcast %cst_2 : f32 to vector<40x1xf32>
    %7 = arith.divf %5, %6 : vector<40x1xf32>
    %8 = vector.broadcast %7 : vector<40x1xf32> to vector<40x32xf32>
    %9 = arith.subf %3, %8 : vector<40x32xf32>
    %10 = arith.mulf %9, %9 : vector<40x32xf32>
    %cst_3 = arith.constant dense<0.000000e+00> : vector<40xf32>
    %11 = vector.multi_reduction <add>, %10, %cst_3 [1] : vector<40x32xf32> to vector<40xf32>
    %12 = vector.shape_cast %11 : vector<40xf32> to vector<40x1xf32>
    %cst_4 = arith.constant 3.200000e+01 : f32
    %13 = vector.broadcast %cst_4 : f32 to vector<40x1xf32>
    %14 = arith.divf %12, %13 : vector<40x1xf32>
    %cst_5 = arith.constant 9.99999974E-6 : f32
    %15 = vector.broadcast %cst_5 : f32 to vector<40x1xf32>
    %16 = arith.addf %14, %15 : vector<40x1xf32>
    %17 = math.rsqrt %16 : vector<40x1xf32>
    %18 = vector.broadcast %17 : vector<40x1xf32> to vector<40x32xf32>
    %19 = arith.mulf %9, %18 : vector<40x32xf32>
    %c0_6 = arith.constant 0 : index
    %c0_7 = arith.constant 0 : index
    %c0_8 = arith.constant 0 : index
    %20 = vector.load %arg5[%c0_6, %c0_7, %c0_8] : memref<1x3x32xf32, #tpu.memory_space<vmem>>, vector<1x1x32xf32>
    %21 = vector.shape_cast %20 : vector<1x1x32xf32> to vector<1x32xf32>
    %c0_9 = arith.constant 0 : index
    %c1 = arith.constant 1 : index
    %c0_10 = arith.constant 0 : index
    %22 = vector.load %arg5[%c0_9, %c1, %c0_10] : memref<1x3x32xf32, #tpu.memory_space<vmem>>, vector<1x1x32xf32>
    %23 = vector.shape_cast %22 : vector<1x1x32xf32> to vector<1x32xf32>
    %c0_11 = arith.constant 0 : index
    %c2 = arith.constant 2 : index
    %c0_12 = arith.constant 0 : index
    %24 = vector.load %arg5[%c0_11, %c2, %c0_12] : memref<1x3x32xf32, #tpu.memory_space<vmem>>, vector<1x1x32xf32>
    %25 = vector.shape_cast %24 : vector<1x1x32xf32> to vector<1x32xf32>
    %26 = vector.broadcast %21 : vector<1x32xf32> to vector<40x32xf32>
    %27 = arith.mulf %19, %26 : vector<40x32xf32>
    %28 = vector.broadcast %23 : vector<1x32xf32> to vector<40x32xf32>
    %29 = arith.addf %27, %28 : vector<40x32xf32>
    %30 = arith.truncf %29 : vector<40x32xf32> to vector<40x32xbf16>
    %c0_13 = arith.constant 0 : index
    %c0_14 = arith.constant 0 : index
    %c0_15 = arith.constant 0 : index
    %31 = vector.load %arg6[%c0_13, %c0_14, %c0_15] : memref<1x32x32xbf16, #tpu.memory_space<vmem>>, vector<1x32x32xbf16>
    %32 = vector.shape_cast %31 : vector<1x32x32xbf16> to vector<32x32xbf16>
    %cst_16 = arith.constant dense<0.000000e+00> : vector<40x32xf32>
    %33 = tpu.matmul %30, %32, %cst_16 {dimension_numbers = #tpu.dot_dimension_numbers<[1], [0], [0], [1], [0, 0, 1, 1], [], []>} : vector<40x32xbf16>, vector<32x32xbf16>, vector<40x32xf32> -> vector<40x32xf32>
    %34 = arith.addf %3, %33 : vector<40x32xf32>
    %35 = vector.broadcast %25 : vector<1x32xf32> to vector<40x32xf32>
    %36 = arith.addf %34, %35 : vector<40x32xf32>
    %c0_17 = arith.constant 0 : index
    %c0_18 = arith.constant 0 : index
    %37 = vector.load %arg8[%c0_17, %c0_18] : memref<40x32xf32, #tpu.memory_space<vmem>>, vector<40x32xf32>
    tpu.vector_store %arg8[%c0_17, %c0_18], %36 {strides = array<i32>} : memref<40x32xf32, #tpu.memory_space<vmem>>, vector<40x32xf32>,
    %38 = arith.index_cast %arg1 : i32 to index
    %39 = memref.load %arg3[%38] : memref<8xi32, #tpu.memory_space<smem>>
    %c1_i32 = arith.constant 1 : i32
    %40 = arith.cmpi eq, %39, %c1_i32 : i32
    %41 = arith.extui %40 : i1 to i32
    %c0_i32_19 = arith.constant 0 : i32
    %42 = arith.cmpi ne, %41, %c0_i32_19 : i32
    scf.if %42 {
      %c0_20 = arith.constant 0 : index
      %c0_21 = arith.constant 0 : index
      %c0_22 = arith.constant 0 : index
      %43 = vector.load %arg7[%c0_20, %c0_21, %c0_22] : memref<1x40x32xf32, #tpu.memory_space<vmem>>, vector<1x40x32xf32>
      %44 = vector.shape_cast %43 : vector<1x40x32xf32> to vector<40x32xf32>
      %45 = vector.shape_cast %36 : vector<40x32xf32> to vector<1x40x32xf32>
      tpu.vector_store %arg7[%c0_20, %c0_21, %c0_22], %45 {strides = array<i32>} : memref<1x40x32xf32, #tpu.memory_space<vmem>>, vector<1x40x32xf32>,
    } else {
    }
    return
  }
  func.func @transform_0(%arg0: i32, %arg1: i32, %arg2: memref<8xi32, #tpu.memory_space<smem>>, %arg3: memref<8xi32, #tpu.memory_space<smem>>) -> (i32, i32) {
    %c0_i32 = arith.constant 0 : i32
    %c0_i32_0 = arith.constant 0 : i32
    return %arg0, %c0_i32 : i32, i32
  }
  func.func @transform_1(%arg0: i32, %arg1: i32, %arg2: memref<8xi32, #tpu.memory_space<smem>>, %arg3: memref<8xi32, #tpu.memory_space<smem>>) -> (i32, i32, i32) {
    %c0_i32 = arith.constant 0 : i32
    %c0_i32_0 = arith.constant 0 : i32
    %c0_i32_1 = arith.constant 0 : i32
    return %arg1, %c0_i32, %c0_i32_0 : i32, i32, i32
  }
  func.func @transform_2(%arg0: i32, %arg1: i32, %arg2: memref<8xi32, #tpu.memory_space<smem>>, %arg3: memref<8xi32, #tpu.memory_space<smem>>) -> (i32, i32, i32) {
    %c0_i32 = arith.constant 0 : i32
    %c0_i32_0 = arith.constant 0 : i32
    %c0_i32_1 = arith.constant 0 : i32
    return %arg1, %c0_i32, %c0_i32_0 : i32, i32, i32
  }
  func.func @transform_3(%arg0: i32, %arg1: i32, %arg2: memref<8xi32, #tpu.memory_space<smem>>, %arg3: memref<8xi32, #tpu.memory_space<smem>>) -> (i32, i32, i32) {
    %0 = arith.index_cast %arg1 : i32 to index
    %1 = memref.load %arg2[%0] : memref<8xi32, #tpu.memory_space<smem>>
    %c0_i32 = arith.constant 0 : i32
    %c0_i32_0 = arith.constant 0 : i32
    return %1, %arg0, %c0_i32 : i32, i32, i32
  }
}

module attributes {stable_mosaic.version = 11 : i64} {
  func.func @_matmul_bias_kernel(%arg0: i32, %arg1: i32, %arg2: i32, %arg3: memref<8x288xf32, #tpu.memory_space<vmem>>, %arg4: memref<288x384xbf16, #tpu.memory_space<vmem>>, %arg5: memref<1x384xf32, #tpu.memory_space<vmem>>, %arg6: memref<8x384xf32, #tpu.memory_space<vmem>>, %arg7: memref<8x384xf32, #tpu.memory_space<vmem>>) attributes {dimension_semantics = [#tpu.dimension_semantics<parallel>, #tpu.dimension_semantics<parallel>, #tpu.dimension_semantics<arbitrary>], iteration_bounds = array<i64: 1, 1, 1>, scalar_prefetch = 0 : i64, scratch_operands = 1 : i64, tpu.core_type = #tpu.core_type<tc>, window_params = [{transform_indices = @transform_0, window_bounds = array<i64: 8, 288>}, {transform_indices = @transform_1, window_bounds = array<i64: 288, 384>}, {transform_indices = @transform_2, window_bounds = array<i64: 1, 384>}, {transform_indices = @transform_3, window_bounds = array<i64: 8, 384>}]} {
    %c0_i32 = arith.constant 0 : i32
    %0 = arith.cmpi eq, %arg2, %c0_i32 : i32
    %1 = arith.extui %0 : i1 to i32
    %c0_i32_0 = arith.constant 0 : i32
    %2 = arith.cmpi ne, %1, %c0_i32_0 : i32
    scf.if %2 {
      %cst_10 = arith.constant 0.000000e+00 : f32
      %13 = vector.broadcast %cst_10 : f32 to vector<8x384xf32>
      %c0_11 = arith.constant 0 : index
      %c0_12 = arith.constant 0 : index
      %14 = vector.load %arg7[%c0_11, %c0_12] : memref<8x384xf32, #tpu.memory_space<vmem>>, vector<8x384xf32>
      tpu.vector_store %arg7[%c0_11, %c0_12], %13 {strides = array<i32>} : memref<8x384xf32, #tpu.memory_space<vmem>>, vector<8x384xf32>,
    } else {
    }
    %c0 = arith.constant 0 : index
    %c0_1 = arith.constant 0 : index
    %3 = vector.load %arg7[%c0, %c0_1] : memref<8x384xf32, #tpu.memory_space<vmem>>, vector<8x384xf32>
    %c0_2 = arith.constant 0 : index
    %c0_3 = arith.constant 0 : index
    %4 = vector.load %arg3[%c0_2, %c0_3] : memref<8x288xf32, #tpu.memory_space<vmem>>, vector<8x288xf32>
    %5 = arith.truncf %4 : vector<8x288xf32> to vector<8x288xbf16>
    %c0_4 = arith.constant 0 : index
    %c0_5 = arith.constant 0 : index
    %6 = vector.load %arg4[%c0_4, %c0_5] : memref<288x384xbf16, #tpu.memory_space<vmem>>, vector<288x384xbf16>
    %cst = arith.constant dense<0.000000e+00> : vector<8x384xf32>
    %7 = tpu.matmul %5, %6, %cst {dimension_numbers = #tpu.dot_dimension_numbers<[1], [0], [0], [1], [0, 0, 1, 1], [], []>} : vector<8x288xbf16>, vector<288x384xbf16>, vector<8x384xf32> -> vector<8x384xf32>
    %8 = arith.addf %3, %7 : vector<8x384xf32>
    %c0_6 = arith.constant 0 : index
    %c0_7 = arith.constant 0 : index
    %9 = vector.load %arg7[%c0_6, %c0_7] : memref<8x384xf32, #tpu.memory_space<vmem>>, vector<8x384xf32>
    tpu.vector_store %arg7[%c0_6, %c0_7], %8 {strides = array<i32>} : memref<8x384xf32, #tpu.memory_space<vmem>>, vector<8x384xf32>,
    %c0_i32_8 = arith.constant 0 : i32
    %10 = arith.cmpi eq, %arg2, %c0_i32_8 : i32
    %11 = arith.extui %10 : i1 to i32
    %c0_i32_9 = arith.constant 0 : i32
    %12 = arith.cmpi ne, %11, %c0_i32_9 : i32
    scf.if %12 {
      %c0_10 = arith.constant 0 : index
      %c0_11 = arith.constant 0 : index
      %13 = vector.load %arg7[%c0_10, %c0_11] : memref<8x384xf32, #tpu.memory_space<vmem>>, vector<8x384xf32>
      %c0_12 = arith.constant 0 : index
      %c0_13 = arith.constant 0 : index
      %14 = vector.load %arg5[%c0_12, %c0_13] : memref<1x384xf32, #tpu.memory_space<vmem>>, vector<1x384xf32>
      %15 = vector.broadcast %14 : vector<1x384xf32> to vector<8x384xf32>
      %16 = arith.addf %13, %15 : vector<8x384xf32>
      %c0_14 = arith.constant 0 : index
      %c0_15 = arith.constant 0 : index
      %17 = vector.load %arg6[%c0_14, %c0_15] : memref<8x384xf32, #tpu.memory_space<vmem>>, vector<8x384xf32>
      tpu.vector_store %arg6[%c0_14, %c0_15], %16 {strides = array<i32>} : memref<8x384xf32, #tpu.memory_space<vmem>>, vector<8x384xf32>,
    } else {
    }
    return
  }
  func.func @transform_0(%arg0: i32, %arg1: i32, %arg2: i32) -> (i32, i32) {
    %c0_i32 = arith.constant 0 : i32
    return %arg0, %arg2 : i32, i32
  }
  func.func @transform_1(%arg0: i32, %arg1: i32, %arg2: i32) -> (i32, i32) {
    %c0_i32 = arith.constant 0 : i32
    return %arg2, %arg1 : i32, i32
  }
  func.func @transform_2(%arg0: i32, %arg1: i32, %arg2: i32) -> (i32, i32) {
    %c0_i32 = arith.constant 0 : i32
    %c0_i32_0 = arith.constant 0 : i32
    return %c0_i32, %arg1 : i32, i32
  }
  func.func @transform_3(%arg0: i32, %arg1: i32, %arg2: i32) -> (i32, i32) {
    %c0_i32 = arith.constant 0 : i32
    return %arg0, %arg1 : i32, i32
  }
}

module attributes {stable_mosaic.version = 11 : i64} {
  func.func @_matmul_bias_kernel(%arg0: i32, %arg1: i32, %arg2: i32, %arg3: memref<8x288xf32, #tpu.memory_space<vmem>>, %arg4: memref<288x512xbf16, #tpu.memory_space<vmem>>, %arg5: memref<1x512xf32, #tpu.memory_space<vmem>>, %arg6: memref<8x512xf32, #tpu.memory_space<vmem>>, %arg7: memref<8x512xf32, #tpu.memory_space<vmem>>) attributes {dimension_semantics = [#tpu.dimension_semantics<parallel>, #tpu.dimension_semantics<parallel>, #tpu.dimension_semantics<arbitrary>], iteration_bounds = array<i64: 1, 1, 1>, scalar_prefetch = 0 : i64, scratch_operands = 1 : i64, tpu.core_type = #tpu.core_type<tc>, window_params = [{transform_indices = @transform_0, window_bounds = array<i64: 8, 288>}, {transform_indices = @transform_1, window_bounds = array<i64: 288, 512>}, {transform_indices = @transform_2, window_bounds = array<i64: 1, 512>}, {transform_indices = @transform_3, window_bounds = array<i64: 8, 512>}]} {
    %c0_i32 = arith.constant 0 : i32
    %0 = arith.cmpi eq, %arg2, %c0_i32 : i32
    %1 = arith.extui %0 : i1 to i32
    %c0_i32_0 = arith.constant 0 : i32
    %2 = arith.cmpi ne, %1, %c0_i32_0 : i32
    scf.if %2 {
      %cst_10 = arith.constant 0.000000e+00 : f32
      %13 = vector.broadcast %cst_10 : f32 to vector<8x512xf32>
      %c0_11 = arith.constant 0 : index
      %c0_12 = arith.constant 0 : index
      %14 = vector.load %arg7[%c0_11, %c0_12] : memref<8x512xf32, #tpu.memory_space<vmem>>, vector<8x512xf32>
      tpu.vector_store %arg7[%c0_11, %c0_12], %13 {strides = array<i32>} : memref<8x512xf32, #tpu.memory_space<vmem>>, vector<8x512xf32>,
    } else {
    }
    %c0 = arith.constant 0 : index
    %c0_1 = arith.constant 0 : index
    %3 = vector.load %arg7[%c0, %c0_1] : memref<8x512xf32, #tpu.memory_space<vmem>>, vector<8x512xf32>
    %c0_2 = arith.constant 0 : index
    %c0_3 = arith.constant 0 : index
    %4 = vector.load %arg3[%c0_2, %c0_3] : memref<8x288xf32, #tpu.memory_space<vmem>>, vector<8x288xf32>
    %5 = arith.truncf %4 : vector<8x288xf32> to vector<8x288xbf16>
    %c0_4 = arith.constant 0 : index
    %c0_5 = arith.constant 0 : index
    %6 = vector.load %arg4[%c0_4, %c0_5] : memref<288x512xbf16, #tpu.memory_space<vmem>>, vector<288x512xbf16>
    %cst = arith.constant dense<0.000000e+00> : vector<8x512xf32>
    %7 = tpu.matmul %5, %6, %cst {dimension_numbers = #tpu.dot_dimension_numbers<[1], [0], [0], [1], [0, 0, 1, 1], [], []>} : vector<8x288xbf16>, vector<288x512xbf16>, vector<8x512xf32> -> vector<8x512xf32>
    %8 = arith.addf %3, %7 : vector<8x512xf32>
    %c0_6 = arith.constant 0 : index
    %c0_7 = arith.constant 0 : index
    %9 = vector.load %arg7[%c0_6, %c0_7] : memref<8x512xf32, #tpu.memory_space<vmem>>, vector<8x512xf32>
    tpu.vector_store %arg7[%c0_6, %c0_7], %8 {strides = array<i32>} : memref<8x512xf32, #tpu.memory_space<vmem>>, vector<8x512xf32>,
    %c0_i32_8 = arith.constant 0 : i32
    %10 = arith.cmpi eq, %arg2, %c0_i32_8 : i32
    %11 = arith.extui %10 : i1 to i32
    %c0_i32_9 = arith.constant 0 : i32
    %12 = arith.cmpi ne, %11, %c0_i32_9 : i32
    scf.if %12 {
      %c0_10 = arith.constant 0 : index
      %c0_11 = arith.constant 0 : index
      %13 = vector.load %arg7[%c0_10, %c0_11] : memref<8x512xf32, #tpu.memory_space<vmem>>, vector<8x512xf32>
      %c0_12 = arith.constant 0 : index
      %c0_13 = arith.constant 0 : index
      %14 = vector.load %arg5[%c0_12, %c0_13] : memref<1x512xf32, #tpu.memory_space<vmem>>, vector<1x512xf32>
      %15 = vector.broadcast %14 : vector<1x512xf32> to vector<8x512xf32>
      %16 = arith.addf %13, %15 : vector<8x512xf32>
      %c0_14 = arith.constant 0 : index
      %c0_15 = arith.constant 0 : index
      %17 = vector.load %arg6[%c0_14, %c0_15] : memref<8x512xf32, #tpu.memory_space<vmem>>, vector<8x512xf32>
      tpu.vector_store %arg6[%c0_14, %c0_15], %16 {strides = array<i32>} : memref<8x512xf32, #tpu.memory_space<vmem>>, vector<8x512xf32>,
    } else {
    }
    return
  }
  func.func @transform_0(%arg0: i32, %arg1: i32, %arg2: i32) -> (i32, i32) {
    %c0_i32 = arith.constant 0 : i32
    return %arg0, %arg2 : i32, i32
  }
  func.func @transform_1(%arg0: i32, %arg1: i32, %arg2: i32) -> (i32, i32) {
    %c0_i32 = arith.constant 0 : i32
    return %arg2, %arg1 : i32, i32
  }
  func.func @transform_2(%arg0: i32, %arg1: i32, %arg2: i32) -> (i32, i32) {
    %c0_i32 = arith.constant 0 : i32
    %c0_i32_0 = arith.constant 0 : i32
    return %c0_i32, %arg1 : i32, i32
  }
  func.func @transform_3(%arg0: i32, %arg1: i32, %arg2: i32) -> (i32, i32) {
    %c0_i32 = arith.constant 0 : i32
    return %arg0, %arg1 : i32, i32
  }
}

module attributes {stable_mosaic.version = 11 : i64} {
  func.func @_matmul_bias_kernel(%arg0: i32, %arg1: i32, %arg2: i32, %arg3: memref<32x32xf32, #tpu.memory_space<vmem>>, %arg4: memref<32x384xbf16, #tpu.memory_space<vmem>>, %arg5: memref<1x384xf32, #tpu.memory_space<vmem>>, %arg6: memref<32x384xf32, #tpu.memory_space<vmem>>, %arg7: memref<32x384xf32, #tpu.memory_space<vmem>>) attributes {dimension_semantics = [#tpu.dimension_semantics<parallel>, #tpu.dimension_semantics<parallel>, #tpu.dimension_semantics<arbitrary>], iteration_bounds = array<i64: 1, 2, 1>, scalar_prefetch = 0 : i64, scratch_operands = 1 : i64, tpu.core_type = #tpu.core_type<tc>, window_params = [{transform_indices = @transform_0, window_bounds = array<i64: 32, 32>}, {transform_indices = @transform_1, window_bounds = array<i64: 32, 384>}, {transform_indices = @transform_2, window_bounds = array<i64: 1, 384>}, {transform_indices = @transform_3, window_bounds = array<i64: 32, 384>}]} {
    %c0_i32 = arith.constant 0 : i32
    %0 = arith.cmpi eq, %arg2, %c0_i32 : i32
    %1 = arith.extui %0 : i1 to i32
    %c0_i32_0 = arith.constant 0 : i32
    %2 = arith.cmpi ne, %1, %c0_i32_0 : i32
    scf.if %2 {
      %cst_10 = arith.constant 0.000000e+00 : f32
      %13 = vector.broadcast %cst_10 : f32 to vector<32x384xf32>
      %c0_11 = arith.constant 0 : index
      %c0_12 = arith.constant 0 : index
      %14 = vector.load %arg7[%c0_11, %c0_12] : memref<32x384xf32, #tpu.memory_space<vmem>>, vector<32x384xf32>
      tpu.vector_store %arg7[%c0_11, %c0_12], %13 {strides = array<i32>} : memref<32x384xf32, #tpu.memory_space<vmem>>, vector<32x384xf32>,
    } else {
    }
    %c0 = arith.constant 0 : index
    %c0_1 = arith.constant 0 : index
    %3 = vector.load %arg7[%c0, %c0_1] : memref<32x384xf32, #tpu.memory_space<vmem>>, vector<32x384xf32>
    %c0_2 = arith.constant 0 : index
    %c0_3 = arith.constant 0 : index
    %4 = vector.load %arg3[%c0_2, %c0_3] : memref<32x32xf32, #tpu.memory_space<vmem>>, vector<32x32xf32>
    %5 = arith.truncf %4 : vector<32x32xf32> to vector<32x32xbf16>
    %c0_4 = arith.constant 0 : index
    %c0_5 = arith.constant 0 : index
    %6 = vector.load %arg4[%c0_4, %c0_5] : memref<32x384xbf16, #tpu.memory_space<vmem>>, vector<32x384xbf16>
    %cst = arith.constant dense<0.000000e+00> : vector<32x384xf32>
    %7 = tpu.matmul %5, %6, %cst {dimension_numbers = #tpu.dot_dimension_numbers<[1], [0], [0], [1], [0, 0, 1, 1], [], []>} : vector<32x32xbf16>, vector<32x384xbf16>, vector<32x384xf32> -> vector<32x384xf32>
    %8 = arith.addf %3, %7 : vector<32x384xf32>
    %c0_6 = arith.constant 0 : index
    %c0_7 = arith.constant 0 : index
    %9 = vector.load %arg7[%c0_6, %c0_7] : memref<32x384xf32, #tpu.memory_space<vmem>>, vector<32x384xf32>
    tpu.vector_store %arg7[%c0_6, %c0_7], %8 {strides = array<i32>} : memref<32x384xf32, #tpu.memory_space<vmem>>, vector<32x384xf32>,
    %c0_i32_8 = arith.constant 0 : i32
    %10 = arith.cmpi eq, %arg2, %c0_i32_8 : i32
    %11 = arith.extui %10 : i1 to i32
    %c0_i32_9 = arith.constant 0 : i32
    %12 = arith.cmpi ne, %11, %c0_i32_9 : i32
    scf.if %12 {
      %c0_10 = arith.constant 0 : index
      %c0_11 = arith.constant 0 : index
      %13 = vector.load %arg7[%c0_10, %c0_11] : memref<32x384xf32, #tpu.memory_space<vmem>>, vector<32x384xf32>
      %c0_12 = arith.constant 0 : index
      %c0_13 = arith.constant 0 : index
      %14 = vector.load %arg5[%c0_12, %c0_13] : memref<1x384xf32, #tpu.memory_space<vmem>>, vector<1x384xf32>
      %15 = vector.broadcast %14 : vector<1x384xf32> to vector<32x384xf32>
      %16 = arith.addf %13, %15 : vector<32x384xf32>
      %c0_14 = arith.constant 0 : index
      %c0_15 = arith.constant 0 : index
      %17 = vector.load %arg6[%c0_14, %c0_15] : memref<32x384xf32, #tpu.memory_space<vmem>>, vector<32x384xf32>
      tpu.vector_store %arg6[%c0_14, %c0_15], %16 {strides = array<i32>} : memref<32x384xf32, #tpu.memory_space<vmem>>, vector<32x384xf32>,
    } else {
    }
    return
  }
  func.func @transform_0(%arg0: i32, %arg1: i32, %arg2: i32) -> (i32, i32) {
    %c0_i32 = arith.constant 0 : i32
    return %arg0, %arg2 : i32, i32
  }
  func.func @transform_1(%arg0: i32, %arg1: i32, %arg2: i32) -> (i32, i32) {
    %c0_i32 = arith.constant 0 : i32
    return %arg2, %arg1 : i32, i32
  }
  func.func @transform_2(%arg0: i32, %arg1: i32, %arg2: i32) -> (i32, i32) {
    %c0_i32 = arith.constant 0 : i32
    %c0_i32_0 = arith.constant 0 : i32
    return %c0_i32, %arg1 : i32, i32
  }
  func.func @transform_3(%arg0: i32, %arg1: i32, %arg2: i32) -> (i32, i32) {
    %c0_i32 = arith.constant 0 : i32
    return %arg0, %arg1 : i32, i32
  }
}

module attributes {stable_mosaic.version = 11 : i64} {
  func.func @_matmul_bias_kernel(%arg0: i32, %arg1: i32, %arg2: i32, %arg3: memref<32x32xf32, #tpu.memory_space<vmem>>, %arg4: memref<32x256xbf16, #tpu.memory_space<vmem>>, %arg5: memref<1x256xf32, #tpu.memory_space<vmem>>, %arg6: memref<32x256xf32, #tpu.memory_space<vmem>>, %arg7: memref<32x256xf32, #tpu.memory_space<vmem>>) attributes {dimension_semantics = [#tpu.dimension_semantics<parallel>, #tpu.dimension_semantics<parallel>, #tpu.dimension_semantics<arbitrary>], iteration_bounds = array<i64: 1, 1, 1>, scalar_prefetch = 0 : i64, scratch_operands = 1 : i64, tpu.core_type = #tpu.core_type<tc>, window_params = [{transform_indices = @transform_0, window_bounds = array<i64: 32, 32>}, {transform_indices = @transform_1, window_bounds = array<i64: 32, 256>}, {transform_indices = @transform_2, window_bounds = array<i64: 1, 256>}, {transform_indices = @transform_3, window_bounds = array<i64: 32, 256>}]} {
    %c0_i32 = arith.constant 0 : i32
    %0 = arith.cmpi eq, %arg2, %c0_i32 : i32
    %1 = arith.extui %0 : i1 to i32
    %c0_i32_0 = arith.constant 0 : i32
    %2 = arith.cmpi ne, %1, %c0_i32_0 : i32
    scf.if %2 {
      %cst_10 = arith.constant 0.000000e+00 : f32
      %13 = vector.broadcast %cst_10 : f32 to vector<32x256xf32>
      %c0_11 = arith.constant 0 : index
      %c0_12 = arith.constant 0 : index
      %14 = vector.load %arg7[%c0_11, %c0_12] : memref<32x256xf32, #tpu.memory_space<vmem>>, vector<32x256xf32>
      tpu.vector_store %arg7[%c0_11, %c0_12], %13 {strides = array<i32>} : memref<32x256xf32, #tpu.memory_space<vmem>>, vector<32x256xf32>,
    } else {
    }
    %c0 = arith.constant 0 : index
    %c0_1 = arith.constant 0 : index
    %3 = vector.load %arg7[%c0, %c0_1] : memref<32x256xf32, #tpu.memory_space<vmem>>, vector<32x256xf32>
    %c0_2 = arith.constant 0 : index
    %c0_3 = arith.constant 0 : index
    %4 = vector.load %arg3[%c0_2, %c0_3] : memref<32x32xf32, #tpu.memory_space<vmem>>, vector<32x32xf32>
    %5 = arith.truncf %4 : vector<32x32xf32> to vector<32x32xbf16>
    %c0_4 = arith.constant 0 : index
    %c0_5 = arith.constant 0 : index
    %6 = vector.load %arg4[%c0_4, %c0_5] : memref<32x256xbf16, #tpu.memory_space<vmem>>, vector<32x256xbf16>
    %cst = arith.constant dense<0.000000e+00> : vector<32x256xf32>
    %7 = tpu.matmul %5, %6, %cst {dimension_numbers = #tpu.dot_dimension_numbers<[1], [0], [0], [1], [0, 0, 1, 1], [], []>} : vector<32x32xbf16>, vector<32x256xbf16>, vector<32x256xf32> -> vector<32x256xf32>
    %8 = arith.addf %3, %7 : vector<32x256xf32>
    %c0_6 = arith.constant 0 : index
    %c0_7 = arith.constant 0 : index
    %9 = vector.load %arg7[%c0_6, %c0_7] : memref<32x256xf32, #tpu.memory_space<vmem>>, vector<32x256xf32>
    tpu.vector_store %arg7[%c0_6, %c0_7], %8 {strides = array<i32>} : memref<32x256xf32, #tpu.memory_space<vmem>>, vector<32x256xf32>,
    %c0_i32_8 = arith.constant 0 : i32
    %10 = arith.cmpi eq, %arg2, %c0_i32_8 : i32
    %11 = arith.extui %10 : i1 to i32
    %c0_i32_9 = arith.constant 0 : i32
    %12 = arith.cmpi ne, %11, %c0_i32_9 : i32
    scf.if %12 {
      %c0_10 = arith.constant 0 : index
      %c0_11 = arith.constant 0 : index
      %13 = vector.load %arg7[%c0_10, %c0_11] : memref<32x256xf32, #tpu.memory_space<vmem>>, vector<32x256xf32>
      %c0_12 = arith.constant 0 : index
      %c0_13 = arith.constant 0 : index
      %14 = vector.load %arg5[%c0_12, %c0_13] : memref<1x256xf32, #tpu.memory_space<vmem>>, vector<1x256xf32>
      %15 = vector.broadcast %14 : vector<1x256xf32> to vector<32x256xf32>
      %16 = arith.addf %13, %15 : vector<32x256xf32>
      %c0_14 = arith.constant 0 : index
      %c0_15 = arith.constant 0 : index
      %17 = vector.load %arg6[%c0_14, %c0_15] : memref<32x256xf32, #tpu.memory_space<vmem>>, vector<32x256xf32>
      tpu.vector_store %arg6[%c0_14, %c0_15], %16 {strides = array<i32>} : memref<32x256xf32, #tpu.memory_space<vmem>>, vector<32x256xf32>,
    } else {
    }
    return
  }
  func.func @transform_0(%arg0: i32, %arg1: i32, %arg2: i32) -> (i32, i32) {
    %c0_i32 = arith.constant 0 : i32
    return %arg0, %arg2 : i32, i32
  }
  func.func @transform_1(%arg0: i32, %arg1: i32, %arg2: i32) -> (i32, i32) {
    %c0_i32 = arith.constant 0 : i32
    return %arg2, %arg1 : i32, i32
  }
  func.func @transform_2(%arg0: i32, %arg1: i32, %arg2: i32) -> (i32, i32) {
    %c0_i32 = arith.constant 0 : i32
    %c0_i32_0 = arith.constant 0 : i32
    return %c0_i32, %arg1 : i32, i32
  }
  func.func @transform_3(%arg0: i32, %arg1: i32, %arg2: i32) -> (i32, i32) {
    %c0_i32 = arith.constant 0 : i32
    return %arg0, %arg1 : i32, i32
  }
}

</mosaic_0001>

<llo_original>
// kernel: squeeze.6
$region0: #{squeeze.6}
  %s0 = inlined_call_operand.vmem [shape: f32[1,34,32], index: 0, kind: input, shape index: {}]
  %s1 = inlined_call_operand.vmem [shape: f32[2,17,32], index: 1, kind: output, shape index: {}]
  %v2 = vld [vmem:[%s0] sm:$0xff]
  %vm3 = vcmask 261120
  %4 = vst.msk [vmem:[%s1] sm:$0xff] %vm3, %v2
  %s5 = scalar_lea.vmem %s0, 8
  %v6 = vld [vmem:[%s5] sm:$0xff]
  %vm7 = vcmask 261120
  %s8 = scalar_lea.vmem %s1, 8
  %9 = vst.msk [vmem:[%s8] sm:$0xff] %vm7, %v6
  %s10 = scalar_lea.vmem %s0, 16
  %v11 = vld [vmem:[%s10] sm:$0xff]
  %vm12 = vcmask 261120
  %s13 = scalar_lea.vmem %s1, 16
  %14 = vst.msk [vmem:[%s13] ss:$8 sm:$0x3] %vm12, %v11
  %s15 = scalar_lea.vmem %s1, 23
  %16 = vst.msk [vmem:[%s15] sm:$0xfc] %vm12, %v11
  %s17 = scalar_lea.vmem %s0, 24
  %v18 = vld [vmem:[%s17] sm:$0xff]
  %vm19 = vcmask 261120
  %s20 = scalar_lea.vmem %s1, 31
  %21 = vst.msk [vmem:[%s20] sm:$0xff] %vm19, %v18
  %s22 = scalar_lea.vmem %s0, 32
  %v23 = vld [vmem:[%s22] sm:$0x3]
  %vm24 = vcmask 261120
  %s25 = scalar_lea.vmem %s1, 39
  %26 = vst.msk [vmem:[%s25] sm:$0x3] %vm24, %v23

// kernel: vim_backbone_forward.6
$region0: #{vim_backbone_forward.6}
  #allocation0 [shape = 'u32[]', space=smem, size = 0x4, offset = 0x4, fixed_abs, tag = 'smem constant byte address 0x4 - core index']
  #allocation1 [shape = 'u32[72,128]{1,0:T(1,128)}', space=vmem, size = 0x9000, scoped, tag = 'internal scratch']
  #allocation2 [shape = 'f32[32,32]{1,0:T(8,128)}', space=vmem, size = 0x4000, scoped, tag = 'scratch operand']
  %s0 = inlined_call_operand.vmem [shape: f32[32,48], index: 0, kind: input, shape index: {}]
  %s1 = inlined_call_operand.vmem [shape: bf16[48,32], index: 1, kind: input, shape index: {}]
  %s2 = inlined_call_operand.hbm [shape: f32[1,32], index: 2, kind: input, shape index: {}]
  %s3 = inlined_call_operand.vmem [shape: f32[32,32], index: 3, kind: output, shape index: {}]
  %s4 = sld [smem:[#allocation0]]
  $region34: #{vim_backbone_forward.6} parent=0
    _
  %s6 = ssub.s32 1, %s4
  %s7 = scalar_select 0, %s6, %s4
  $region1: #{vim_backbone_forward.6} parent=0
    #allocation3 [shape = 'u8[512]{0}', space=vmem, size = 0x400, scoped, tag = 'input window, operand 2, single buffered']
    #allocation4 [shape = 's32[1]{0}', space=sflag, size = 0x4, scoped, tag = 'scoped memory for vim_backbone_forward.6']
    %8 = vsyncpa [#allocation4], 0
    // Predicated region
    $region2: #{vim_backbone_forward.6} parent=1 // pred_check
      _
    $region3: #{vim_backbone_forward.6} parent=1 // pred_check_branch
      %10 = sbr.rel (0) target = $region5
    $region4: #{vim_backbone_forward.6} parent=1 // pred_region
      _
    $region5: #{vim_backbone_forward.6} parent=1 // pred_fallthru
      _
    // Predicated region
    $region6: #{vim_backbone_forward.6} parent=1 // pred_check
      _
    $region7: #{vim_backbone_forward.6} parent=1 // pred_check_branch
      %12 = sbr.rel (0) target = $region9
    $region8: #{vim_backbone_forward.6} parent=1 // pred_region
      _
    $region9: #{vim_backbone_forward.6} parent=1 // pred_fallthru
      _
    // Predicated region
    $region10: #{vim_backbone_forward.6} parent=1 // pred_check
      _
    $region11: #{vim_backbone_forward.6} parent=1 // pred_check_branch
      %14 = sbr.rel (0) target = $region13
    $region12: #{vim_backbone_forward.6} parent=1 // pred_region
      %16 = vsyncadd [#allocation4], 0
      %s18 = sshll.u32 %s2, 4
      %s19 = int_to_ptr.hbm [resolvable:$true] %s18
      %s20 = sshll.u32 [#allocation3], 4
      %s21 = int_to_ptr.vmem [resolvable:$true] %s20
      %23 = dma.hbm_to_vmem [thread:$0]  %s19, 16, %s21, [#allocation4]
    $region13: #{vim_backbone_forward.6} parent=1 // pred_fallthru
      _
    // Predicated region
    $region14: #{vim_backbone_forward.6} parent=1 // pred_check
      _
    $region15: #{vim_backbone_forward.6} parent=1 // pred_check_branch
      %25 = sbr.rel (0) target = $region17
    $region16: #{vim_backbone_forward.6} parent=1 // pred_region
      %27 = dma.done [#allocation4], 16
    $region17: #{vim_backbone_forward.6} parent=1 // pred_fallthru
      _
    %p29 = scmp.eq.s32.totalorder 0, 0
    // Predicated region
    $region18: #{vim_backbone_forward.6} parent=1 // pred_check
      %p30 = pneg %p29
    $region19: #{vim_backbone_forward.6} parent=1 // pred_check_branch
      %32 = sbr.rel (%p30) target = $region21
    $region20: #{vim_backbone_forward.6} parent=1 // pred_region
      %vm33 = vcmask 261120
      %34 = vst.msk [vmem:[#allocation2] sm:$0xff] %vm33, 0.0
      %35 = vst.msk [vmem:[#allocation2 + $0x8] sm:$0xff] %vm33, 0.0
      %36 = vst.msk [vmem:[#allocation2 + $0x10] sm:$0xff] %vm33, 0.0
      %37 = vst.msk [vmem:[#allocation2 + $0x18] sm:$0xff] %vm33, 0.0
    $region21: #{vim_backbone_forward.6} parent=1 // pred_fallthru
      _
    %v38 = vld [vmem:[#allocation2] sm:$0xff]
    %v39 = vld [vmem:[#allocation2 + $0x8] sm:$0xff]
    %v40 = vld [vmem:[#allocation2 + $0x10] sm:$0xff]
    %v41 = vld [vmem:[#allocation2 + $0x18] sm:$0xff]
    %v42 = vld [vmem:[%s0] sm:$0xff]
    %v43 = vld [vmem:[%s0 + $0x8] sm:$0xff]
    %v44 = vld [vmem:[%s0 + $0x10] sm:$0xff]
    %v45 = vld [vmem:[%s0 + $0x18] sm:$0xff]
    %v46 = vpack.c.bf16 %v43, %v42
    %v47 = vpack.c.bf16 %v45, %v44
    %v48 = vld [vmem:[%s1] sm:$0xf]
    %v49 = vld [vmem:[%s1 + $0x4] sm:$0xf]
    %v50 = vld [vmem:[%s1 + $0x8] sm:$0xf]
    %v51 = vld [vmem:[%s1 + $0xc] sm:$0xf]
    %v52 = vld [vmem:[%s1 + $0x10] sm:$0xf]
    %v53 = vld [vmem:[%s1 + $0x14] sm:$0xf]
    %v60 = vunpack.c.l.b16 %v48
    %v61 = vunpack.c.l.b16 %v49
    %v62 = vunpack.c.l.b16 %v50
    %v63 = vunpack.c.l.b16 %v51
    %v64 = vunpack.c.l.b16 %v52
    %v65 = vunpack.c.l.b16 %v53
    %v66 = vpack.c.b16 %v61, %v60
    %v67 = vpack.c.b16 %v63, %v62
    %v68 = vpack.c.b16 %v65, %v64
    %vm72 = vcmask 392192
    %v74 = vsel %vm72, %v46, 0
    %v77 = vsel %vm72, %v47, 0
    %79 = vmatpush.bf16.msra.mxu0 0
    %80 = vmatpush.bf16.msra.mxu0 0
    %81 = vmatpush.bf16.msra.mxu0 0
    %82 = vmatpush.bf16.msra.mxu0 0
    %83 = vmatpush.bf16.msra.mxu0 0
    %84 = vmatpush.bf16.msra.mxu0 %v68
    %85 = vmatpush.bf16.msra.mxu0 %v67
    %86 = vmatpush.bf16.msra.mxu0 %v66
    %87 = vmatmul.bf16.gmra.mxu0 %v74
    %v88 = vpop.f32.mrf.mxu0
    %v89 = vadd.f32 0.0, %v88
    %v90 = vpop.f32.mrf.mxu0
    %v91 = vadd.f32 0.0, %v90
    %92 = vmatmul.bf16.gmra.mxu0 %v77
    %v93 = vpop.f32.mrf.mxu0
    %v94 = vadd.f32 0.0, %v93
    %v95 = vpop.f32.mrf.mxu0
    %v96 = vadd.f32 0.0, %v95
    %97 = vdwg.mxu0
    %v98 = vadd.f32 %v38, %v89
    %v99 = vadd.f32 %v39, %v91
    %v100 = vadd.f32 %v40, %v94
    %v101 = vadd.f32 %v41, %v96
    %vm102 = vcmask 261120
    %103 = vst.msk [vmem:[#allocation2] sm:$0xff] %vm102, %v98
    %104 = vst.msk [vmem:[#allocation2 + $0x8] sm:$0xff] %vm102, %v99
    %105 = vst.msk [vmem:[#allocation2 + $0x10] sm:$0xff] %vm102, %v100
    %106 = vst.msk [vmem:[#allocation2 + $0x18] sm:$0xff] %vm102, %v101
    // Predicated region
    $region22: #{vim_backbone_forward.6} parent=1 // pred_check
      %p107 = pneg %p29
    $region23: #{vim_backbone_forward.6} parent=1 // pred_check_branch
      %109 = sbr.rel (%p107) target = $region25
    $region24: #{vim_backbone_forward.6} parent=1 // pred_region
      %v110 = vld [vmem:[#allocation2] sm:$0xff]
      %v111 = vld [vmem:[#allocation2 + $0x8] sm:$0xff]
      %v112 = vld [vmem:[#allocation2 + $0x10] sm:$0xff]
      %v113 = vld [vmem:[#allocation2 + $0x18] sm:$0xff]
      %v114 = vld [vmem:[#allocation3] sm:$0x1]
      %v116 = vperm.slane %v114, 0
      %v118 = vadd.f32 %v110, %v116
      %v119 = vadd.f32 %v111, %v116
      %v120 = vadd.f32 %v112, %v116
      %v121 = vadd.f32 %v113, %v116
      %122 = vst.msk [vmem:[%s3] sm:$0xff] %vm102, %v118
      %123 = vst.msk [vmem:[%s3 + $0x8] sm:$0xff] %vm102, %v119
      %124 = vst.msk [vmem:[%s3 + $0x10] sm:$0xff] %vm102, %v120
      %125 = vst.msk [vmem:[%s3 + $0x18] sm:$0xff] %vm102, %v121
    $region25: #{vim_backbone_forward.6} parent=1 // pred_fallthru
      _
    // Predicated region
    $region26: #{vim_backbone_forward.6} parent=1 // pred_check
      _
    $region27: #{vim_backbone_forward.6} parent=1 // pred_check_branch
      %127 = sbr.rel (0) target = $region29
    $region28: #{vim_backbone_forward.6} parent=1 // pred_region
      _
    $region29: #{vim_backbone_forward.6} parent=1 // pred_fallthru
      _
    // Predicated region
    $region30: #{vim_backbone_forward.6} parent=1 // pred_check
      _
    $region31: #{vim_backbone_forward.6} parent=1 // pred_check_branch
      %129 = sbr.rel (0) target = $region33
    $region32: #{vim_backbone_forward.6} parent=1 // pred_region
      _
    $region33: #{vim_backbone_forward.6} parent=1 // pred_fallthru
      _
    %130 = vsyncpa [#allocation4], 1

// kernel: vim_backbone_forward.7
$region0: #{vim_backbone_forward.7}
  #allocation0 [shape = 'u32[]', space=smem, size = 0x4, offset = 0x4, fixed_abs, tag = 'smem constant byte address 0x4 - core index']
  #allocation1 [shape = 'u32[72,128]{1,0:T(1,128)}', space=vmem, size = 0x9000, scoped, tag = 'internal scratch']
  #allocation2 [shape = 'f32[40,32]{1,0:T(8,128)}', space=vmem, size = 0x5000, scoped, tag = 'scratch operand']
  #allocation3 [shape = 's32[1]{0}', space=sflag, size = 0x4, scoped, tag = 'scoped memory for vim_backbone_forward.7']
  #allocation4 [shape = 'u8[512]{0}', space=smem, size = 0x200, scoped, tag = 'prefetched SMEM operand 0']
  #allocation5 [shape = 'u8[512]{0}', space=smem, size = 0x200, scoped, tag = 'prefetched SMEM operand 1']
  %s0 = inlined_call_operand.hbm [shape: s32[8], index: 0, kind: input, shape index: {}]
  %s1 = inlined_call_operand.hbm [shape: s32[8], index: 1, kind: input, shape index: {}]
  %s2 = inlined_call_operand.vmem [shape: f32[40,32], index: 2, kind: input, shape index: {}]
  %s3 = inlined_call_operand.vmem [shape: f32[8,3,32], index: 3, kind: input, shape index: {}]
  %s4 = inlined_call_operand.vmem [shape: bf16[8,32,32], index: 4, kind: input, shape index: {}]
  %s5 = inlined_call_operand.vmem [shape: f32[4,40,32], index: 5, kind: output, shape index: {}]
  %s6 = sld [smem:[#allocation0]]
  $region53: #{vim_backbone_forward.7} parent=0
    _
  %s8 = ssub.s32 1, %s6
  %s9 = scalar_select 0, %s8, %s6
  %s11 = sshll.u32 %s0, 4
  %s12 = int_to_ptr.hbm [resolvable:$true] %s11
  %14 = dma.hbm_to_smem %s12, 16, [#allocation4], [#allocation3]
  %s16 = sshll.u32 %s1, 4
  %s17 = int_to_ptr.hbm [resolvable:$true] %s16
  %19 = dma.hbm_to_smem %s17, 16, [#allocation5], [#allocation3]
  %21 = dma.done [#allocation3], 32
  %22 = sfence
  loop: start=0, step=1, limit=10
  $region2: #{vim_backbone_forward.7} parent=0 // loop_pre_header
    _
  $region3: #{vim_backbone_forward.7} parent=0 // loop_header
    %s24 = sphi 0, %s28
    %p25 = scmp.ge.s32.totalorder %s24, 10
    %s31 = sphi 0, %s43
    %s32 = sphi 0, %s39
    %s33 = sphi 0, %s31
    %s34 = sphi 0, %s32
    %s35 = sphi 0, %s33
    %s36 = sphi 0, %s34
    %s46 = sphi 0, %s48
    %s49 = sphi 0, %s46
    %s50 = sphi 0, %s49
    %s66 = sphi 0, %s50
    %s72 = sphi 0, %s74
    %s75 = sphi 0, %s72
    %s76 = sphi 0, %s75
    %s92 = sphi 0, %s76
    %s98 = sphi 0, %s100
    %s101 = sphi 0, %s98
    %s102 = sphi 0, %s101
    %s118 = sphi 0, %s102
    %s128 = sphi 0, %s130
    %s131 = sphi 0, %s128
    %s132 = sphi 0, %s131
    %s148 = sphi 0, %s132
  $region4: #{vim_backbone_forward.7} parent=0 // loop_header_branch
    %27 = sbr.rel (%p25) target = $region8
  $region5: #{vim_backbone_forward.7} parent=0 // loop_body
    %s29 = ssub.s32 %s24, 1
    %s30 = ssub.s32 %s24, 2
    %s37 = sadd.s32 1, %s32
    %p38 = scmp.ge.s32.totalorder %s37, 8
    %s39 = scalar_select %p38, 0, %s37
    %s40 = sadd.s32 1, %s31
    %s41 = scalar_select %p38, %s40, %s31
    %p42 = scmp.ge.s32.totalorder %s41, 1
    %s43 = scalar_select %p42, 0, %s41
    %s44 = ssub.s32 %s31, %s43
    %p45 = scmp.eq.s32.totalorder %s44, 0
    %s47 = sadd.s32 %s46, 1
    %s48 = scalar_select %p45, %s46, %s47
    %p51 = pneg %p45
    %p52 = scmp.eq.s32.totalorder %s24, 7
    %p53 = por %p51, %p52
    %p54 = scmp.ne.s32.totalorder %s46, %s49
    %p55 = scmp.eq.s32.totalorder %s24, 0
    %p56 = por %p54, %p55
    %p57 = scmp.ne.s32.totalorder %s46, %s49
    %p58 = scmp.eq.s32.totalorder %s29, 7
    %p59 = por %p57, %p58
    %p60 = scmp.ne.s32.totalorder %s49, %s50
    %p61 = scmp.eq.s32.totalorder %s29, 0
    %p62 = por %p60, %p61
    %p63 = scmp.ne.s32.totalorder %s49, %s50
    %p64 = scmp.eq.s32.totalorder %s30, 7
    %p65 = por %p63, %p64
    %p67 = scmp.ne.s32.totalorder %s50, %s66
    %p68 = scmp.eq.s32.totalorder %s30, 0
    %p69 = por %p67, %p68
    %s70 = ssub.s32 %s32, %s39
    %p71 = scmp.eq.s32.totalorder %s70, 0
    %s73 = sadd.s32 %s72, 1
    %s74 = scalar_select %p71, %s72, %s73
    %p77 = pneg %p71
    %p78 = scmp.eq.s32.totalorder %s24, 7
    %p79 = por %p77, %p78
    %p80 = scmp.ne.s32.totalorder %s72, %s75
    %p81 = scmp.eq.s32.totalorder %s24, 0
    %p82 = por %p80, %p81
    %p83 = scmp.ne.s32.totalorder %s72, %s75
    %p84 = scmp.eq.s32.totalorder %s29, 7
    %p85 = por %p83, %p84
    %p86 = scmp.ne.s32.totalorder %s75, %s76
    %p87 = scmp.eq.s32.totalorder %s29, 0
    %p88 = por %p86, %p87
    %p89 = scmp.ne.s32.totalorder %s75, %s76
    %p90 = scmp.eq.s32.totalorder %s30, 7
    %p91 = por %p89, %p90
    %p93 = scmp.ne.s32.totalorder %s76, %s92
    %p94 = scmp.eq.s32.totalorder %s30, 0
    %p95 = por %p93, %p94
    %s96 = ssub.s32 %s32, %s39
    %p97 = scmp.eq.s32.totalorder %s96, 0
    %s99 = sadd.s32 %s98, 1
    %s100 = scalar_select %p97, %s98, %s99
    %p103 = pneg %p97
    %p104 = scmp.eq.s32.totalorder %s24, 7
    %p105 = por %p103, %p104
    %p106 = scmp.ne.s32.totalorder %s98, %s101
    %p107 = scmp.eq.s32.totalorder %s24, 0
    %p108 = por %p106, %p107
    %p109 = scmp.ne.s32.totalorder %s98, %s101
    %p110 = scmp.eq.s32.totalorder %s29, 7
    %p111 = por %p109, %p110
    %p112 = scmp.ne.s32.totalorder %s101, %s102
    %p113 = scmp.eq.s32.totalorder %s29, 0
    %p114 = por %p112, %p113
    %p115 = scmp.ne.s32.totalorder %s101, %s102
    %p116 = scmp.eq.s32.totalorder %s30, 7
    %p117 = por %p115, %p116
    %p119 = scmp.ne.s32.totalorder %s102, %s118
    %p120 = scmp.eq.s32.totalorder %s30, 0
    %p121 = por %p119, %p120
    %s122 = sld [smem:[#allocation4 + %s32]]
    %s123 = sld [smem:[#allocation4 + %s39]]
    %s124 = ssub.s32 %s122, %s123
    %s125 = ssub.s32 %s31, %s43
    %s126 = sor.u32 %s124, %s125
    %p127 = scmp.eq.s32.totalorder %s126, 0
    %s129 = sadd.s32 %s128, 1
    %s130 = scalar_select %p127, %s128, %s129
    %p133 = pneg %p127
    %p134 = scmp.eq.s32.totalorder %s24, 7
    %p135 = por %p133, %p134
    %p136 = scmp.ne.s32.totalorder %s128, %s131
    %p137 = scmp.eq.s32.totalorder %s24, 0
    %p138 = por %p136, %p137
    %p139 = scmp.ne.s32.totalorder %s128, %s131
    %p140 = scmp.eq.s32.totalorder %s29, 7
    %p141 = por %p139, %p140
    %p142 = scmp.ne.s32.totalorder %s131, %s132
    %p143 = scmp.eq.s32.totalorder %s29, 0
    %p144 = por %p142, %p143
    %p145 = scmp.ne.s32.totalorder %s131, %s132
    %p146 = scmp.eq.s32.totalorder %s30, 7
    %p147 = por %p145, %p146
    %p149 = scmp.ne.s32.totalorder %s132, %s148
    %p150 = scmp.eq.s32.totalorder %s30, 0
    %p151 = por %p149, %p150
    %p152 = scmp.le.s32.totalorder 1, %s24
    %p153 = scmp.lt.s32.totalorder %s24, 9
    %p154 = pnand %p152, %p153
    %p155 = pneg %p154
    // Predicated region
    $region9: #{vim_backbone_forward.7} parent=5 // pred_check
      _
    $region10: #{vim_backbone_forward.7} parent=5 // pred_check_branch
      %157 = sbr.rel (%p154) target = $region12
    $region11: #{vim_backbone_forward.7} parent=5 // pred_region
      %s158 = ssub.s32 %s24, 1
      // Predicated region
      $region13: #{vim_backbone_forward.7} parent=11 // pred_check
        %p159 = pneg %p62
      $region14: #{vim_backbone_forward.7} parent=11 // pred_check_branch
        %161 = sbr.rel (%p159) target = $region16
      $region15: #{vim_backbone_forward.7} parent=11 // pred_region
        %s162 = smul.u32 5, %s33
        %p163 = scmp.lt.s32.totalorder %s162, 4
        %s164 = scalar_select %p163, %s162, 4
        %s165 = smul.addr %s164, 8
        %s166 = scalar_lea.vmem %s2, %s165
        %s167 = smul.u32 5, %s33
      $region16: #{vim_backbone_forward.7} parent=11 // pred_fallthru
        _
    $region12: #{vim_backbone_forward.7} parent=5 // pred_fallthru
      _
    %p168 = scmp.lt.s32.totalorder %s24, 8
    // Predicated region
    $region17: #{vim_backbone_forward.7} parent=5 // pred_check
      %p169 = pneg %p168
    $region18: #{vim_backbone_forward.7} parent=5 // pred_check_branch
      %171 = sbr.rel (%p169) target = $region20
    $region19: #{vim_backbone_forward.7} parent=5 // pred_region
      // Predicated region
      $region21: #{vim_backbone_forward.7} parent=19 // pred_check
        %p172 = pneg %p82
      $region22: #{vim_backbone_forward.7} parent=19 // pred_check_branch
        %174 = sbr.rel (%p172) target = $region24
      $region23: #{vim_backbone_forward.7} parent=19 // pred_region
        %p175 = scmp.lt.s32.totalorder %s32, 7
        %s176 = scalar_select %p175, %s32, 7
        %s177 = smul.addr %s176, 4
        %s178 = scalar_lea.vmem %s3, %s177
      $region24: #{vim_backbone_forward.7} parent=19 // pred_fallthru
        _
      // Predicated region
      $region25: #{vim_backbone_forward.7} parent=19 // pred_check
        %p179 = pneg %p108
      $region26: #{vim_backbone_forward.7} parent=19 // pred_check_branch
        %181 = sbr.rel (%p179) target = $region28
      $region27: #{vim_backbone_forward.7} parent=19 // pred_region
        %p182 = scmp.lt.s32.totalorder %s32, 7
        %s183 = scalar_select %p182, %s32, 7
        %s184 = smul.addr %s183, 4
        %s185 = smul.addr %s184, 4
        %s186 = scalar_lea.vmem %s4, %s185
      $region28: #{vim_backbone_forward.7} parent=19 // pred_fallthru
        _
    $region20: #{vim_backbone_forward.7} parent=5 // pred_fallthru
      _
    %p187 = scmp.le.s32.totalorder 1, %s24
    %p188 = scmp.lt.s32.totalorder %s24, 9
    %p189 = pnand %p187, %p188
    %p190 = pneg %p189
    // Predicated region
    $region29: #{vim_backbone_forward.7} parent=5 // pred_check
      _
    $region30: #{vim_backbone_forward.7} parent=5 // pred_check_branch
      %192 = sbr.rel (%p189) target = $region32
    $region31: #{vim_backbone_forward.7} parent=5 // pred_region
      %s193 = ssub.s32 %s24, 1
      %s194 = smul.u32 5, %s33
      %p195 = scmp.lt.s32.totalorder %s194, 4
      %s196 = scalar_select %p195, %s194, 4
      %s197 = smul.addr %s196, 8
      %s198 = scalar_lea.vmem %s2, %s197
      %p199 = pneg %p62
      %p200 = pneg %p59
      %p201 = scmp.lt.s32.totalorder %s34, 7
      %s202 = scalar_select %p201, %s34, 7
      %s203 = smul.addr %s202, 4
      %s204 = scalar_lea.vmem %s3, %s203
      %p205 = pneg %p88
      %p206 = pneg %p85
      %p207 = scmp.lt.s32.totalorder %s34, 7
      %s208 = scalar_select %p207, %s34, 7
      %s209 = smul.addr %s208, 4
      %s210 = smul.addr %s209, 4
      %s211 = scalar_lea.vmem %s4, %s210
      %p212 = pneg %p114
      %p213 = pneg %p111
      %p214 = pneg %p144
      %p215 = pneg %p141
      %s216 = sld [smem:[#allocation4 + %s34]]
      %s217 = smul.u32 5, %s33
      %p218 = scmp.lt.s32.totalorder %s216, 3
      %s219 = scalar_select %p218, %s216, 3
      %p220 = scmp.lt.s32.totalorder %s217, 4
      %s221 = scalar_select %p220, %s217, 4
      %s222 = smul.addr %s219, 5
      %s223 = sadd.s32 %s221, %s222
      %s224 = smul.addr %s223, 8
      %s225 = scalar_lea.vmem %s5, %s224
      %s226 = smul.u32 5, %s33
      %p227 = scmp.lt.s32.totalorder %s226, 4
      %s228 = scalar_select %p227, %s226, 4
      %s229 = smul.addr %s228, 8
      %s230 = scalar_lea.vmem %s2, %s229
      %s231 = smul.u32 5, %s33
      %p232 = scmp.lt.s32.totalorder %s34, 7
      %s233 = scalar_select %p232, %s34, 7
      %s234 = smul.addr %s233, 4
      %s235 = scalar_lea.vmem %s3, %s234
      %p236 = scmp.lt.s32.totalorder %s34, 7
      %s237 = scalar_select %p236, %s34, 7
      %s238 = smul.addr %s237, 4
      %s239 = smul.addr %s238, 4
      %s240 = scalar_lea.vmem %s4, %s239
      %s241 = sld [smem:[#allocation4 + %s34]]
      %s242 = smul.u32 5, %s33
      %p243 = scmp.lt.s32.totalorder %s241, 3
      %s244 = scalar_select %p243, %s241, 3
      %p245 = scmp.lt.s32.totalorder %s242, 4
      %s246 = scalar_select %p245, %s242, 4
      %s247 = smul.addr %s244, 5
      %s248 = sadd.s32 %s246, %s247
      %s249 = smul.addr %s248, 8
      %s250 = scalar_lea.vmem %s5, %s249
      %s251 = sld [smem:[#allocation4 + %s34]]
      %s252 = smul.u32 5, %s33
      %p254 = scmp.eq.s32.totalorder %s34, 0
      // Predicated region
      $region33: #{vim_backbone_forward.7} parent=31 // pred_check
        %p255 = pneg %p254
      $region34: #{vim_backbone_forward.7} parent=31 // pred_check_branch
        %257 = sbr.rel (%p255) target = $region36
      $region35: #{vim_backbone_forward.7} parent=31 // pred_region
        %v258 = vld [vmem:[%s230] sm:$0xff]
        %v259 = vld [vmem:[%s230 + $0x8] sm:$0xff]
        %v260 = vld [vmem:[%s230 + $0x10] sm:$0xff]
        %v261 = vld [vmem:[%s230 + $0x18] sm:$0xff]
        %v262 = vld [vmem:[%s230 + $0x20] sm:$0xff]
        %vm263 = vcmask 261120
        %264 = vst.msk [vmem:[#allocation2] sm:$0xff] %vm263, %v258
        %265 = vst.msk [vmem:[#allocation2 + $0x8] sm:$0xff] %vm263, %v259
        %266 = vst.msk [vmem:[#allocation2 + $0x10] sm:$0xff] %vm263, %v260
        %267 = vst.msk [vmem:[#allocation2 + $0x18] sm:$0xff] %vm263, %v261
        %268 = vst.msk [vmem:[#allocation2 + $0x20] sm:$0xff] %vm263, %v262
      $region36: #{vim_backbone_forward.7} parent=31 // pred_fallthru
        _
      %v269 = vld [vmem:[#allocation2] sm:$0xff]
      %v270 = vld [vmem:[#allocation2 + $0x8] sm:$0xff]
      %v271 = vld [vmem:[#allocation2 + $0x10] sm:$0xff]
      %v272 = vld [vmem:[#allocation2 + $0x18] sm:$0xff]
      %v273 = vld [vmem:[#allocation2 + $0x20] sm:$0xff]
      %vm274 = vcmask 261120
      %v275 = vsel %vm274, %v269, 0.0
      %276 = vadd.xlane.f32.xlu0 %v275
      %v277 = vpop.xlane.xlu0 %276
      %v278 = vsel %vm274, %v270, 0.0
      %279 = vadd.xlane.f32.xlu0 %v278
      %v280 = vpop.xlane.xlu0 %279
      %v281 = vsel %vm274, %v271, 0.0
      %282 = vadd.xlane.f32.xlu0 %v281
      %v283 = vpop.xlane.xlu0 %282
      %v284 = vsel %vm274, %v272, 0.0
      %285 = vadd.xlane.f32.xlu0 %v284
      %v286 = vpop.xlane.xlu0 %285
      %v287 = vsel %vm274, %v273, 0.0
      %288 = vadd.xlane.f32.xlu0 %v287
      %v289 = vpop.xlane.xlu0 %288
      %v290 = vrcp.pop 32.0
      %v291 = vmul.f32 32.0, %v290
      %v292 = vsub.f32 1.0, %v291
      %v293 = vmul.f32 %v290, %v292
      %v294 = vadd.f32 %v290, %v293
      %vm295 = vweird.f32 %v290
      %v296 = vsel %vm295, %v290, %v294
      %v297 = vmul.f32 %v277, %v296
      %v298 = vmul.f32 %v280, %v296
      %v299 = vmul.f32 %v283, %v296
      %v300 = vmul.f32 %v286, %v296
      %v301 = vmul.f32 %v289, %v296
      %v302 = vsub.f32 %v269, %v297
      %v303 = vsub.f32 %v270, %v298
      %v304 = vsub.f32 %v271, %v299
      %v305 = vsub.f32 %v272, %v300
      %v306 = vsub.f32 %v273, %v301
      %v307 = vmul.f32 %v302, %v302
      %v308 = vmul.f32 %v303, %v303
      %v309 = vmul.f32 %v304, %v304
      %v310 = vmul.f32 %v305, %v305
      %v311 = vmul.f32 %v306, %v306
      %v312 = vsel %vm274, %v307, 0.0
      %313 = vadd.xlane.f32.xlu0 %v312
      %v314 = vpop.xlane.xlu0 %313
      %v315 = vsel %vm274, %v308, 0.0
      %316 = vadd.xlane.f32.xlu0 %v315
      %v317 = vpop.xlane.xlu0 %316
      %v318 = vsel %vm274, %v309, 0.0
      %319 = vadd.xlane.f32.xlu0 %v318
      %v320 = vpop.xlane.xlu0 %319
      %v321 = vsel %vm274, %v310, 0.0
      %322 = vadd.xlane.f32.xlu0 %v321
      %v323 = vpop.xlane.xlu0 %322
      %v324 = vsel %vm274, %v311, 0.0
      %325 = vadd.xlane.f32.xlu0 %v324
      %v326 = vpop.xlane.xlu0 %325
      %v327 = vmul.f32 %v314, %v296
      %v328 = vmul.f32 %v317, %v296
      %v329 = vmul.f32 %v320, %v296
      %v330 = vmul.f32 %v323, %v296
      %v331 = vmul.f32 %v326, %v296
      %v332 = vadd.f32 %v327, 1e-05
      %v333 = vadd.f32 %v328, 1e-05
      %v334 = vadd.f32 %v329, 1e-05
      %v335 = vadd.f32 %v330, 1e-05
      %v336 = vadd.f32 %v331, 1e-05
      %v337 = vrsqrt.pop %v332
      %v338 = vmul.f32 %v337, %v332
      %v339 = vmul.f32 %v338, %v337
      %v340 = vmul.f32 0.5, %v339
      %v341 = vsub.f32 1.5, %v340
      %v342 = vmul.f32 %v337, %v341
      %vm343 = vweird.f32 %v332
      %vm344 = vweird.f32 %v337
      %vm345 = vmor %vm343, %vm344
      %v346 = vsel %vm345, %v337, %v342
      %v347 = vrsqrt.pop %v333
      %v348 = vmul.f32 %v347, %v333
      %v349 = vmul.f32 %v348, %v347
      %v350 = vmul.f32 0.5, %v349
      %v351 = vsub.f32 1.5, %v350
      %v352 = vmul.f32 %v347, %v351
      %vm353 = vweird.f32 %v333
      %vm354 = vweird.f32 %v347
      %vm355 = vmor %vm353, %vm354
      %v356 = vsel %vm355, %v347, %v352
      %v357 = vrsqrt.pop %v334
      %v358 = vmul.f32 %v357, %v334
      %v359 = vmul.f32 %v358, %v357
      %v360 = vmul.f32 0.5, %v359
      %v361 = vsub.f32 1.5, %v360
      %v362 = vmul.f32 %v357, %v361
      %vm363 = vweird.f32 %v334
      %vm364 = vweird.f32 %v357
      %vm365 = vmor %vm363, %vm364
      %v366 = vsel %vm365, %v357, %v362
      %v367 = vrsqrt.pop %v335
      %v368 = vmul.f32 %v367, %v335
      %v369 = vmul.f32 %v368, %v367
      %v370 = vmul.f32 0.5, %v369
      %v371 = vsub.f32 1.5, %v370
      %v372 = vmul.f32 %v367, %v371
      %vm373 = vweird.f32 %v335
      %vm374 = vweird.f32 %v367
      %vm375 = vmor %vm373, %vm374
      %v376 = vsel %vm375, %v367, %v372
      %v377 = vrsqrt.pop %v336
      %v378 = vmul.f32 %v377, %v336
      %v379 = vmul.f32 %v378, %v377
      %v380 = vmul.f32 0.5, %v379
      %v381 = vsub.f32 1.5, %v380
      %v382 = vmul.f32 %v377, %v381
      %vm383 = vweird.f32 %v336
      %vm384 = vweird.f32 %v377
      %vm385 = vmor %vm383, %vm384
      %v386 = vsel %vm385, %v377, %v382
      %v387 = vmul.f32 %v302, %v346
      %v388 = vmul.f32 %v303, %v356
      %v389 = vmul.f32 %v304, %v366
      %v390 = vmul.f32 %v305, %v376
      %v391 = vmul.f32 %v306, %v386
      %v392 = vld [vmem:[%s235] sm:$0x1]
      %v393 = vld [vmem:[%s235 + $0x1] sm:$0x1]
      %v394 = vld [vmem:[%s235 + $0x2] sm:$0x1]
      %v395 = vperm.slane %v392, 0
      %v396 = vmul.f32 %v387, %v395
      %v397 = vmul.f32 %v388, %v395
      %v398 = vmul.f32 %v389, %v395
      %v399 = vmul.f32 %v390, %v395
      %v400 = vmul.f32 %v391, %v395
      %v401 = vperm.slane %v393, 0
      %v402 = vadd.f32 %v396, %v401
      %v403 = vadd.f32 %v397, %v401
      %v404 = vadd.f32 %v398, %v401
      %v405 = vadd.f32 %v399, %v401
      %v406 = vadd.f32 %v400, %v401
      %v407 = vpack.c.bf16 %v403, %v402
      %v408 = vpack.c.bf16 %v405, %v404
      %v409 = vpack.c.bf16 %v406, %v406
      %v410 = vld [vmem:[%s240] sm:$0xf]
      %v411 = vld [vmem:[%s240 + $0x4] sm:$0xf]
      %v412 = vld [vmem:[%s240 + $0x8] sm:$0xf]
      %v413 = vld [vmem:[%s240 + $0xc] sm:$0xf]
      %v418 = vunpack.c.l.b16 %v410
      %v419 = vunpack.c.l.b16 %v411
      %v420 = vunpack.c.l.b16 %v412
      %v421 = vunpack.c.l.b16 %v413
      %v422 = vpack.c.b16 %v419, %v418
      %v423 = vpack.c.b16 %v421, %v420
      %v427 = vsel %vm274, %v407, 0
      %v430 = vsel %vm274, %v408, 0
      %v433 = vsel %vm274, %v409, 0
      %435 = vmatpush.bf16.msra.mxu0 0
      %436 = vmatpush.bf16.msra.mxu0 0
      %437 = vmatpush.bf16.msra.mxu0 0
      %438 = vmatpush.bf16.msra.mxu0 0
      %439 = vmatpush.bf16.msra.mxu0 0
      %440 = vmatpush.bf16.msra.mxu0 0
      %441 = vmatpush.bf16.msra.mxu0 %v423
      %442 = vmatpush.bf16.msra.mxu0 %v422
      %443 = vmatmul.bf16.gmra.mxu0 %v427
      %v444 = vpop.f32.mrf.mxu0
      %v445 = vadd.f32 0.0, %v444
      %v446 = vpop.f32.mrf.mxu0
      %v447 = vadd.f32 0.0, %v446
      %448 = vmatmul.bf16.gmra.mxu0 %v430
      %v449 = vpop.f32.mrf.mxu0
      %v450 = vadd.f32 0.0, %v449
      %v451 = vpop.f32.mrf.mxu0
      %v452 = vadd.f32 0.0, %v451
      %453 = vmatmul.bf16.gmra.mxu0 %v433
      %v454 = vpop.f32.mrf.mxu0
      %v455 = vadd.f32 0.0, %v454
      %v456 = vpop.f32.mrf.mxu0
      %457 = vdwg.mxu0
      %v458 = vadd.f32 %v269, %v445
      %v459 = vadd.f32 %v270, %v447
      %v460 = vadd.f32 %v271, %v450
      %v461 = vadd.f32 %v272, %v452
      %v462 = vadd.f32 %v273, %v455
      %v463 = vperm.slane %v394, 0
      %v464 = vadd.f32 %v458, %v463
      %v465 = vadd.f32 %v459, %v463
      %v466 = vadd.f32 %v460, %v463
      %v467 = vadd.f32 %v461, %v463
      %v468 = vadd.f32 %v462, %v463
      %469 = vst.msk [vmem:[#allocation2] sm:$0xff] %vm274, %v464
      %470 = vst.msk [vmem:[#allocation2 + $0x8] sm:$0xff] %vm274, %v465
      %471 = vst.msk [vmem:[#allocation2 + $0x10] sm:$0xff] %vm274, %v466
      %472 = vst.msk [vmem:[#allocation2 + $0x18] sm:$0xff] %vm274, %v467
      %473 = vst.msk [vmem:[#allocation2 + $0x20] sm:$0xff] %vm274, %v468
      %s474 = sld [smem:[#allocation5 + %s34]]
      %p475 = scmp.eq.s32.totalorder %s474, 1
      // Predicated region
      $region37: #{vim_backbone_forward.7} parent=31 // pred_check
        %p476 = pneg %p475
      $region38: #{vim_backbone_forward.7} parent=31 // pred_check_branch
        %478 = sbr.rel (%p476) target = $region40
      $region39: #{vim_backbone_forward.7} parent=31 // pred_region
        %479 = vst.msk [vmem:[%s250] sm:$0xff] %vm274, %v464
        %480 = vst.msk [vmem:[%s250 + $0x8] sm:$0xff] %vm274, %v465
        %481 = vst.msk [vmem:[%s250 + $0x10] sm:$0xff] %vm274, %v466
        %482 = vst.msk [vmem:[%s250 + $0x18] sm:$0xff] %vm274, %v467
        %483 = vst.msk [vmem:[%s250 + $0x20] sm:$0xff] %vm274, %v468
      $region40: #{vim_backbone_forward.7} parent=31 // pred_fallthru
        _
      %s484 = sld [smem:[#allocation4 + %s34]]
      %s485 = smul.u32 5, %s33
      %p486 = scmp.lt.s32.totalorder %s484, 3
      %s487 = scalar_select %p486, %s484, 3
      %p488 = scmp.lt.s32.totalorder %s485, 4
      %s489 = scalar_select %p488, %s485, 4
      %s490 = smul.addr %s487, 5
      %s491 = sadd.s32 %s489, %s490
      %s492 = smul.addr %s491, 8
      %s493 = scalar_lea.vmem %s5, %s492
      // Predicated region
      $region41: #{vim_backbone_forward.7} parent=31 // pred_check
        %p494 = pneg %p141
      $region42: #{vim_backbone_forward.7} parent=31 // pred_check_branch
        %496 = sbr.rel (%p494) target = $region44
      $region43: #{vim_backbone_forward.7} parent=31 // pred_region
        %s497 = sld [smem:[#allocation4 + %s34]]
        %s498 = smul.u32 5, %s33
      $region44: #{vim_backbone_forward.7} parent=31 // pred_fallthru
        _
    $region32: #{vim_backbone_forward.7} parent=5 // pred_fallthru
      _
    %p499 = scmp.le.s32.totalorder 2, %s24
    // Predicated region
    $region45: #{vim_backbone_forward.7} parent=5 // pred_check
      %p500 = pneg %p499
    $region46: #{vim_backbone_forward.7} parent=5 // pred_check_branch
      %502 = sbr.rel (%p500) target = $region48
    $region47: #{vim_backbone_forward.7} parent=5 // pred_region
      %s503 = ssub.s32 %s24, 2
      // Predicated region
      $region49: #{vim_backbone_forward.7} parent=47 // pred_check
        %p504 = pneg %p147
      $region50: #{vim_backbone_forward.7} parent=47 // pred_check_branch
        %506 = sbr.rel (%p504) target = $region52
      $region51: #{vim_backbone_forward.7} parent=47 // pred_region
        %s507 = sld [smem:[#allocation4 + %s36]]
        %s508 = smul.u32 5, %s35
        %p509 = scmp.lt.s32.totalorder %s507, 3
        %s510 = scalar_select %p509, %s507, 3
        %p511 = scmp.lt.s32.totalorder %s508, 4
        %s512 = scalar_select %p511, %s508, 4
        %s513 = smul.addr %s510, 5
        %s514 = sadd.s32 %s512, %s513
        %s515 = smul.addr %s514, 8
        %s516 = scalar_lea.vmem %s5, %s515
      $region52: #{vim_backbone_forward.7} parent=47 // pred_fallthru
        _
    $region48: #{vim_backbone_forward.7} parent=5 // pred_fallthru
      _
  $region6: #{vim_backbone_forward.7} parent=0 // loop_footer
    %s28 = sadd.s32 1, %s24
  $region7: #{vim_backbone_forward.7} parent=0 // loop_footer_branch
    %23 = sbr.rel target = $region3
  $region8: #{vim_backbone_forward.7} parent=0 // loop_exit
    _

// kernel: vim_backbone_forward.10
$region0: #{vim_backbone_forward.10}
  #allocation0 [shape = 'u32[]', space=smem, size = 0x4, offset = 0x4, fixed_abs, tag = 'smem constant byte address 0x4 - core index']
  #allocation1 [shape = 'u32[72,128]{1,0:T(1,128)}', space=vmem, size = 0x9000, scoped, tag = 'internal scratch']
  #allocation2 [shape = 'f32[8,384]{1,0:T(8,128)}', space=vmem, size = 0x3000, scoped, tag = 'scratch operand']
  %s0 = inlined_call_operand.vmem [shape: f32[8,288], index: 0, kind: input, shape index: {}]
  %s1 = inlined_call_operand.vmem [shape: bf16[288,384], index: 1, kind: input, shape index: {}]
  %s2 = inlined_call_operand.vmem [shape: f32[1,384], index: 2, kind: input, shape index: {}]
  %s3 = inlined_call_operand.vmem [shape: f32[8,384], index: 3, kind: output, shape index: {}]
  %s4 = sld [smem:[#allocation0]]
  $region30: #{vim_backbone_forward.10} parent=0
    _
  %s6 = ssub.s32 1, %s4
  %s7 = scalar_select 0, %s6, %s4
  // Predicated region
  $region2: #{vim_backbone_forward.10} parent=0 // pred_check
    _
  $region3: #{vim_backbone_forward.10} parent=0 // pred_check_branch
    %9 = sbr.rel (0) target = $region5
  $region4: #{vim_backbone_forward.10} parent=0 // pred_region
    _
  $region5: #{vim_backbone_forward.10} parent=0 // pred_fallthru
    _
  // Predicated region
  $region6: #{vim_backbone_forward.10} parent=0 // pred_check
    _
  $region7: #{vim_backbone_forward.10} parent=0 // pred_check_branch
    %11 = sbr.rel (0) target = $region9
  $region8: #{vim_backbone_forward.10} parent=0 // pred_region
    _
  $region9: #{vim_backbone_forward.10} parent=0 // pred_fallthru
    _
  // Predicated region
  $region10: #{vim_backbone_forward.10} parent=0 // pred_check
    _
  $region11: #{vim_backbone_forward.10} parent=0 // pred_check_branch
    %13 = sbr.rel (0) target = $region13
  $region12: #{vim_backbone_forward.10} parent=0 // pred_region
    _
  $region13: #{vim_backbone_forward.10} parent=0 // pred_fallthru
    _
  %p15 = scmp.eq.s32.totalorder 0, 0
  // Predicated region
  $region14: #{vim_backbone_forward.10} parent=0 // pred_check
    %p16 = pneg %p15
  $region15: #{vim_backbone_forward.10} parent=0 // pred_check_branch
    %18 = sbr.rel (%p16) target = $region17
  $region16: #{vim_backbone_forward.10} parent=0 // pred_region
    %19 = vst [vmem:[#allocation2] sm:$0xff] 0.0
    %20 = vst [vmem:[#allocation2 + $0x8] sm:$0xff] 0.0
    %21 = vst [vmem:[#allocation2 + $0x10] sm:$0xff] 0.0
  $region17: #{vim_backbone_forward.10} parent=0 // pred_fallthru
    _
  %v22 = vld [vmem:[#allocation2] sm:$0xff]
  %v23 = vld [vmem:[#allocation2 + $0x8] sm:$0xff]
  %v24 = vld [vmem:[#allocation2 + $0x10] sm:$0xff]
  %v25 = vld [vmem:[%s0] sm:$0xff]
  %v26 = vld [vmem:[%s0 + $0x8] sm:$0xff]
  %v27 = vld [vmem:[%s0 + $0x10] sm:$0xff]
  %v28 = vpack.c.bf16 %v25, %v25
  %v29 = vpack.c.bf16 %v26, %v26
  %v30 = vpack.c.bf16 %v27, %v27
  %v31 = vld [vmem:[%s1] sm:$0xff]
  %v32 = vld [vmem:[%s1 + $0x8] sm:$0xf]
  %v33 = vld [vmem:[%s1 + $0xc] sm:$0xff]
  %v34 = vld [vmem:[%s1 + $0x14] sm:$0xf]
  %v35 = vld [vmem:[%s1 + $0x18] sm:$0xff]
  %v36 = vld [vmem:[%s1 + $0x20] sm:$0xf]
  %v37 = vld [vmem:[%s1 + $0x24] sm:$0xff]
  %v38 = vld [vmem:[%s1 + $0x2c] sm:$0xf]
  %v39 = vld [vmem:[%s1 + $0x30] sm:$0xff]
  %v40 = vld [vmem:[%s1 + $0x38] sm:$0xf]
  %v41 = vld [vmem:[%s1 + $0x3c] sm:$0xff]
  %v42 = vld [vmem:[%s1 + $0x44] sm:$0xf]
  %v43 = vld [vmem:[%s1 + $0x48] sm:$0xff]
  %v44 = vld [vmem:[%s1 + $0x50] sm:$0xf]
  %v45 = vld [vmem:[%s1 + $0x54] sm:$0xff]
  %v46 = vld [vmem:[%s1 + $0x5c] sm:$0xf]
  %v47 = vld [vmem:[%s1 + $0x60] sm:$0xff]
  %v48 = vld [vmem:[%s1 + $0x68] sm:$0xf]
  %v49 = vld [vmem:[%s1 + $0x6c] sm:$0xff]
  %v50 = vld [vmem:[%s1 + $0x74] sm:$0xf]
  %v51 = vld [vmem:[%s1 + $0x78] sm:$0xff]
  %v52 = vld [vmem:[%s1 + $0x80] sm:$0xf]
  %v53 = vld [vmem:[%s1 + $0x84] sm:$0xff]
  %v54 = vld [vmem:[%s1 + $0x8c] sm:$0xf]
  %v55 = vld [vmem:[%s1 + $0x90] sm:$0xff]
  %v56 = vld [vmem:[%s1 + $0x98] sm:$0xf]
  %v57 = vld [vmem:[%s1 + $0x9c] sm:$0xff]
  %v58 = vld [vmem:[%s1 + $0xa4] sm:$0xf]
  %v59 = vld [vmem:[%s1 + $0xa8] sm:$0xff]
  %v60 = vld [vmem:[%s1 + $0xb0] sm:$0xf]
  %v61 = vld [vmem:[%s1 + $0xb4] sm:$0xff]
  %v62 = vld [vmem:[%s1 + $0xbc] sm:$0xf]
  %v63 = vld [vmem:[%s1 + $0xc0] sm:$0xff]
  %v64 = vld [vmem:[%s1 + $0xc8] sm:$0xf]
  %v65 = vld [vmem:[%s1 + $0xcc] sm:$0xff]
  %v66 = vld [vmem:[%s1 + $0xd4] sm:$0xf]
  %v67 = vld [vmem:[%s1 + $0xd8] sm:$0xff]
  %v68 = vld [vmem:[%s1 + $0xe0] sm:$0xf]
  %v69 = vld [vmem:[%s1 + $0xe4] sm:$0xff]
  %v70 = vld [vmem:[%s1 + $0xec] sm:$0xf]
  %v71 = vld [vmem:[%s1 + $0xf0] sm:$0xff]
  %v72 = vld [vmem:[%s1 + $0xf8] sm:$0xf]
  %v73 = vld [vmem:[%s1 + $0xfc] sm:$0xff]
  %v74 = vld [vmem:[%s1 + $0x104] sm:$0xf]
  %v75 = vld [vmem:[%s1 + $0x108] sm:$0xff]
  %v76 = vld [vmem:[%s1 + $0x110] sm:$0xf]
  %v77 = vld [vmem:[%s1 + $0x114] sm:$0xff]
  %v78 = vld [vmem:[%s1 + $0x11c] sm:$0xf]
  %v79 = vld [vmem:[%s1 + $0x120] sm:$0xff]
  %v80 = vld [vmem:[%s1 + $0x128] sm:$0xf]
  %v81 = vld [vmem:[%s1 + $0x12c] sm:$0xff]
  %v82 = vld [vmem:[%s1 + $0x134] sm:$0xf]
  %v83 = vld [vmem:[%s1 + $0x138] sm:$0xff]
  %v84 = vld [vmem:[%s1 + $0x140] sm:$0xf]
  %v85 = vld [vmem:[%s1 + $0x144] sm:$0xff]
  %v86 = vld [vmem:[%s1 + $0x14c] sm:$0xf]
  %v87 = vld [vmem:[%s1 + $0x150] sm:$0xff]
  %v88 = vld [vmem:[%s1 + $0x158] sm:$0xf]
  %v89 = vld [vmem:[%s1 + $0x15c] sm:$0xff]
  %v90 = vld [vmem:[%s1 + $0x164] sm:$0xf]
  %v91 = vld [vmem:[%s1 + $0x168] sm:$0xff]
  %v92 = vld [vmem:[%s1 + $0x170] sm:$0xf]
  %v93 = vld [vmem:[%s1 + $0x174] sm:$0xff]
  %v94 = vld [vmem:[%s1 + $0x17c] sm:$0xf]
  %v95 = vld [vmem:[%s1 + $0x180] sm:$0xff]
  %v96 = vld [vmem:[%s1 + $0x188] sm:$0xf]
  %v97 = vld [vmem:[%s1 + $0x18c] sm:$0xff]
  %v98 = vld [vmem:[%s1 + $0x194] sm:$0xf]
  %v99 = vld [vmem:[%s1 + $0x198] sm:$0xff]
  %v100 = vld [vmem:[%s1 + $0x1a0] sm:$0xf]
  %v101 = vld [vmem:[%s1 + $0x1a4] sm:$0xff]
  %v102 = vld [vmem:[%s1 + $0x1ac] sm:$0xf]
  %v175 = vunpack.c.l.b16 %v31
  %v176 = vunpack.c.h.b16 %v31
  %v177 = vunpack.c.l.b16 %v32
  %v178 = vunpack.c.l.b16 %v33
  %v179 = vunpack.c.h.b16 %v33
  %v180 = vunpack.c.l.b16 %v34
  %v181 = vunpack.c.l.b16 %v35
  %v182 = vunpack.c.h.b16 %v35
  %v183 = vunpack.c.l.b16 %v36
  %v184 = vunpack.c.l.b16 %v37
  %v185 = vunpack.c.h.b16 %v37
  %v186 = vunpack.c.l.b16 %v38
  %v187 = vunpack.c.l.b16 %v39
  %v188 = vunpack.c.h.b16 %v39
  %v189 = vunpack.c.l.b16 %v40
  %v190 = vunpack.c.l.b16 %v41
  %v191 = vunpack.c.h.b16 %v41
  %v192 = vunpack.c.l.b16 %v42
  %v193 = vunpack.c.l.b16 %v43
  %v194 = vunpack.c.h.b16 %v43
  %v195 = vunpack.c.l.b16 %v44
  %v196 = vunpack.c.l.b16 %v45
  %v197 = vunpack.c.h.b16 %v45
  %v198 = vunpack.c.l.b16 %v46
  %v199 = vunpack.c.l.b16 %v47
  %v200 = vunpack.c.h.b16 %v47
  %v201 = vunpack.c.l.b16 %v48
  %v202 = vunpack.c.l.b16 %v49
  %v203 = vunpack.c.h.b16 %v49
  %v204 = vunpack.c.l.b16 %v50
  %v205 = vunpack.c.l.b16 %v51
  %v206 = vunpack.c.h.b16 %v51
  %v207 = vunpack.c.l.b16 %v52
  %v208 = vunpack.c.l.b16 %v53
  %v209 = vunpack.c.h.b16 %v53
  %v210 = vunpack.c.l.b16 %v54
  %v211 = vunpack.c.l.b16 %v55
  %v212 = vunpack.c.h.b16 %v55
  %v213 = vunpack.c.l.b16 %v56
  %v214 = vunpack.c.l.b16 %v57
  %v215 = vunpack.c.h.b16 %v57
  %v216 = vunpack.c.l.b16 %v58
  %v217 = vunpack.c.l.b16 %v59
  %v218 = vunpack.c.h.b16 %v59
  %v219 = vunpack.c.l.b16 %v60
  %v220 = vunpack.c.l.b16 %v61
  %v221 = vunpack.c.h.b16 %v61
  %v222 = vunpack.c.l.b16 %v62
  %v223 = vunpack.c.l.b16 %v63
  %v224 = vunpack.c.h.b16 %v63
  %v225 = vunpack.c.l.b16 %v64
  %v226 = vunpack.c.l.b16 %v65
  %v227 = vunpack.c.h.b16 %v65
  %v228 = vunpack.c.l.b16 %v66
  %v229 = vunpack.c.l.b16 %v67
  %v230 = vunpack.c.h.b16 %v67
  %v231 = vunpack.c.l.b16 %v68
  %v232 = vunpack.c.l.b16 %v69
  %v233 = vunpack.c.h.b16 %v69
  %v234 = vunpack.c.l.b16 %v70
  %v235 = vunpack.c.l.b16 %v71
  %v236 = vunpack.c.h.b16 %v71
  %v237 = vunpack.c.l.b16 %v72
  %v238 = vunpack.c.l.b16 %v73
  %v239 = vunpack.c.h.b16 %v73
  %v240 = vunpack.c.l.b16 %v74
  %v241 = vunpack.c.l.b16 %v75
  %v242 = vunpack.c.h.b16 %v75
  %v243 = vunpack.c.l.b16 %v76
  %v244 = vunpack.c.l.b16 %v77
  %v245 = vunpack.c.h.b16 %v77
  %v246 = vunpack.c.l.b16 %v78
  %v247 = vunpack.c.l.b16 %v79
  %v248 = vunpack.c.h.b16 %v79
  %v249 = vunpack.c.l.b16 %v80
  %v250 = vunpack.c.l.b16 %v81
  %v251 = vunpack.c.h.b16 %v81
  %v252 = vunpack.c.l.b16 %v82
  %v253 = vunpack.c.l.b16 %v83
  %v254 = vunpack.c.h.b16 %v83
  %v255 = vunpack.c.l.b16 %v84
  %v256 = vunpack.c.l.b16 %v85
  %v257 = vunpack.c.h.b16 %v85
  %v258 = vunpack.c.l.b16 %v86
  %v259 = vunpack.c.l.b16 %v87
  %v260 = vunpack.c.h.b16 %v87
  %v261 = vunpack.c.l.b16 %v88
  %v262 = vunpack.c.l.b16 %v89
  %v263 = vunpack.c.h.b16 %v89
  %v264 = vunpack.c.l.b16 %v90
  %v265 = vunpack.c.l.b16 %v91
  %v266 = vunpack.c.h.b16 %v91
  %v267 = vunpack.c.l.b16 %v92
  %v268 = vunpack.c.l.b16 %v93
  %v269 = vunpack.c.h.b16 %v93
  %v270 = vunpack.c.l.b16 %v94
  %v271 = vunpack.c.l.b16 %v95
  %v272 = vunpack.c.h.b16 %v95
  %v273 = vunpack.c.l.b16 %v96
  %v274 = vunpack.c.l.b16 %v97
  %v275 = vunpack.c.h.b16 %v97
  %v276 = vunpack.c.l.b16 %v98
  %v277 = vunpack.c.l.b16 %v99
  %v278 = vunpack.c.h.b16 %v99
  %v279 = vunpack.c.l.b16 %v100
  %v280 = vunpack.c.l.b16 %v101
  %v281 = vunpack.c.h.b16 %v101
  %v282 = vunpack.c.l.b16 %v102
  %v283 = vpack.c.b16 %v178, %v175
  %v284 = vpack.c.b16 %v179, %v176
  %v285 = vpack.c.b16 %v180, %v177
  %v286 = vpack.c.b16 %v184, %v181
  %v287 = vpack.c.b16 %v185, %v182
  %v288 = vpack.c.b16 %v186, %v183
  %v289 = vpack.c.b16 %v190, %v187
  %v290 = vpack.c.b16 %v191, %v188
  %v291 = vpack.c.b16 %v192, %v189
  %v292 = vpack.c.b16 %v196, %v193
  %v293 = vpack.c.b16 %v197, %v194
  %v294 = vpack.c.b16 %v198, %v195
  %v295 = vpack.c.b16 %v202, %v199
  %v296 = vpack.c.b16 %v203, %v200
  %v297 = vpack.c.b16 %v204, %v201
  %v298 = vpack.c.b16 %v208, %v205
  %v299 = vpack.c.b16 %v209, %v206
  %v300 = vpack.c.b16 %v210, %v207
  %v301 = vpack.c.b16 %v214, %v211
  %v302 = vpack.c.b16 %v215, %v212
  %v303 = vpack.c.b16 %v216, %v213
  %v304 = vpack.c.b16 %v220, %v217
  %v305 = vpack.c.b16 %v221, %v218
  %v306 = vpack.c.b16 %v222, %v219
  %v307 = vpack.c.b16 %v226, %v223
  %v308 = vpack.c.b16 %v227, %v224
  %v309 = vpack.c.b16 %v228, %v225
  %v310 = vpack.c.b16 %v232, %v229
  %v311 = vpack.c.b16 %v233, %v230
  %v312 = vpack.c.b16 %v234, %v231
  %v313 = vpack.c.b16 %v238, %v235
  %v314 = vpack.c.b16 %v239, %v236
  %v315 = vpack.c.b16 %v240, %v237
  %v316 = vpack.c.b16 %v244, %v241
  %v317 = vpack.c.b16 %v245, %v242
  %v318 = vpack.c.b16 %v246, %v243
  %v319 = vpack.c.b16 %v250, %v247
  %v320 = vpack.c.b16 %v251, %v248
  %v321 = vpack.c.b16 %v252, %v249
  %v322 = vpack.c.b16 %v256, %v253
  %v323 = vpack.c.b16 %v257, %v254
  %v324 = vpack.c.b16 %v258, %v255
  %v325 = vpack.c.b16 %v262, %v259
  %v326 = vpack.c.b16 %v263, %v260
  %v327 = vpack.c.b16 %v264, %v261
  %v328 = vpack.c.b16 %v268, %v265
  %v329 = vpack.c.b16 %v269, %v266
  %v330 = vpack.c.b16 %v270, %v267
  %v331 = vpack.c.b16 %v274, %v271
  %v332 = vpack.c.b16 %v275, %v272
  %v333 = vpack.c.b16 %v276, %v273
  %v334 = vpack.c.b16 %v280, %v277
  %v335 = vpack.c.b16 %v281, %v278
  %v336 = vpack.c.b16 %v282, %v279
  %vm391 = vcmask 261120
  %v393 = vsel %vm391, %v30, 0
  %395 = vmatpush.bf16.msra.mxu0 %v304
  %396 = vmatpush.bf16.msra.mxu0 %v301
  %397 = vmatpush.bf16.msra.mxu0 %v298
  %398 = vmatpush.bf16.msra.mxu0 %v295
  %399 = vmatpush.bf16.msra.mxu0 %v292
  %400 = vmatpush.bf16.msra.mxu0 %v289
  %401 = vmatpush.bf16.msra.mxu0 %v286
  %402 = vmatpush.bf16.msra.mxu0 %v283
  %403 = vmatmul.bf16.gmra.mxu0 %v28
  %v404 = vpop.f32.mrf.mxu0
  %v405 = vadd.f32 0.0, %v404
  %v406 = vpop.f32.mrf.mxu0
  %407 = vdwg.mxu0
  %408 = vmatpush.bf16.msra.mxu0 %v328
  %409 = vmatpush.bf16.msra.mxu0 %v325
  %410 = vmatpush.bf16.msra.mxu0 %v322
  %411 = vmatpush.bf16.msra.mxu0 %v319
  %412 = vmatpush.bf16.msra.mxu0 %v316
  %413 = vmatpush.bf16.msra.mxu0 %v313
  %414 = vmatpush.bf16.msra.mxu0 %v310
  %415 = vmatpush.bf16.msra.mxu0 %v307
  %416 = vmatmul.bf16.gmra.mxu0 %v29
  %v417 = vpop.f32.mrf.mxu0
  %v418 = vadd.f32 %v405, %v417
  %v419 = vpop.f32.mrf.mxu0
  %420 = vdwg.mxu0
  %421 = vmatpush.bf16.msra.mxu0 0
  %422 = vmatpush.bf16.msra.mxu0 0
  %423 = vmatpush.bf16.msra.mxu0 0
  %424 = vmatpush.bf16.msra.mxu0 0
  %425 = vmatpush.bf16.msra.mxu0 0
  %426 = vmatpush.bf16.msra.mxu0 0
  %427 = vmatpush.bf16.msra.mxu0 %v334
  %428 = vmatpush.bf16.msra.mxu0 %v331
  %429 = vmatmul.bf16.gmra.mxu0 %v393
  %v430 = vpop.f32.mrf.mxu0
  %v431 = vadd.f32 %v418, %v430
  %v432 = vpop.f32.mrf.mxu0
  %433 = vdwg.mxu0
  %434 = vmatpush.bf16.msra.mxu0 %v305
  %435 = vmatpush.bf16.msra.mxu0 %v302
  %436 = vmatpush.bf16.msra.mxu0 %v299
  %437 = vmatpush.bf16.msra.mxu0 %v296
  %438 = vmatpush.bf16.msra.mxu0 %v293
  %439 = vmatpush.bf16.msra.mxu0 %v290
  %440 = vmatpush.bf16.msra.mxu0 %v287
  %441 = vmatpush.bf16.msra.mxu0 %v284
  %442 = vmatmul.bf16.gmra.mxu0 %v28
  %v443 = vpop.f32.mrf.mxu0
  %v444 = vadd.f32 0.0, %v443
  %v445 = vpop.f32.mrf.mxu0
  %446 = vdwg.mxu0
  %447 = vmatpush.bf16.msra.mxu0 %v329
  %448 = vmatpush.bf16.msra.mxu0 %v326
  %449 = vmatpush.bf16.msra.mxu0 %v323
  %450 = vmatpush.bf16.msra.mxu0 %v320
  %451 = vmatpush.bf16.msra.mxu0 %v317
  %452 = vmatpush.bf16.msra.mxu0 %v314
  %453 = vmatpush.bf16.msra.mxu0 %v311
  %454 = vmatpush.bf16.msra.mxu0 %v308
  %455 = vmatmul.bf16.gmra.mxu0 %v29
  %v456 = vpop.f32.mrf.mxu0
  %v457 = vadd.f32 %v444, %v456
  %v458 = vpop.f32.mrf.mxu0
  %459 = vdwg.mxu0
  %460 = vmatpush.bf16.msra.mxu0 0
  %461 = vmatpush.bf16.msra.mxu0 0
  %462 = vmatpush.bf16.msra.mxu0 0
  %463 = vmatpush.bf16.msra.mxu0 0
  %464 = vmatpush.bf16.msra.mxu0 0
  %465 = vmatpush.bf16.msra.mxu0 0
  %466 = vmatpush.bf16.msra.mxu0 %v335
  %467 = vmatpush.bf16.msra.mxu0 %v332
  %468 = vmatmul.bf16.gmra.mxu0 %v393
  %v469 = vpop.f32.mrf.mxu0
  %v470 = vadd.f32 %v457, %v469
  %v471 = vpop.f32.mrf.mxu0
  %472 = vdwg.mxu0
  %473 = vmatpush.bf16.msra.mxu0 %v306
  %474 = vmatpush.bf16.msra.mxu0 %v303
  %475 = vmatpush.bf16.msra.mxu0 %v300
  %476 = vmatpush.bf16.msra.mxu0 %v297
  %477 = vmatpush.bf16.msra.mxu0 %v294
  %478 = vmatpush.bf16.msra.mxu0 %v291
  %479 = vmatpush.bf16.msra.mxu0 %v288
  %480 = vmatpush.bf16.msra.mxu0 %v285
  %481 = vmatmul.bf16.gmra.mxu0 %v28
  %v482 = vpop.f32.mrf.mxu0
  %v483 = vadd.f32 0.0, %v482
  %v484 = vpop.f32.mrf.mxu0
  %485 = vdwg.mxu0
  %486 = vmatpush.bf16.msra.mxu0 %v330
  %487 = vmatpush.bf16.msra.mxu0 %v327
  %488 = vmatpush.bf16.msra.mxu0 %v324
  %489 = vmatpush.bf16.msra.mxu0 %v321
  %490 = vmatpush.bf16.msra.mxu0 %v318
  %491 = vmatpush.bf16.msra.mxu0 %v315
  %492 = vmatpush.bf16.msra.mxu0 %v312
  %493 = vmatpush.bf16.msra.mxu0 %v309
  %494 = vmatmul.bf16.gmra.mxu0 %v29
  %v495 = vpop.f32.mrf.mxu0
  %v496 = vadd.f32 %v483, %v495
  %v497 = vpop.f32.mrf.mxu0
  %498 = vdwg.mxu0
  %499 = vmatpush.bf16.msra.mxu0 0
  %500 = vmatpush.bf16.msra.mxu0 0
  %501 = vmatpush.bf16.msra.mxu0 0
  %502 = vmatpush.bf16.msra.mxu0 0
  %503 = vmatpush.bf16.msra.mxu0 0
  %504 = vmatpush.bf16.msra.mxu0 0
  %505 = vmatpush.bf16.msra.mxu0 %v336
  %506 = vmatpush.bf16.msra.mxu0 %v333
  %507 = vmatmul.bf16.gmra.mxu0 %v393
  %v508 = vpop.f32.mrf.mxu0
  %v509 = vadd.f32 %v496, %v508
  %v510 = vpop.f32.mrf.mxu0
  %511 = vdwg.mxu0
  %v512 = vadd.f32 %v22, %v431
  %v513 = vadd.f32 %v23, %v470
  %v514 = vadd.f32 %v24, %v509
  %515 = vst [vmem:[#allocation2] sm:$0xff] %v512
  %516 = vst [vmem:[#allocation2 + $0x8] sm:$0xff] %v513
  %517 = vst [vmem:[#allocation2 + $0x10] sm:$0xff] %v514
  // Predicated region
  $region18: #{vim_backbone_forward.10} parent=0 // pred_check
    %p518 = pneg %p15
  $region19: #{vim_backbone_forward.10} parent=0 // pred_check_branch
    %520 = sbr.rel (%p518) target = $region21
  $region20: #{vim_backbone_forward.10} parent=0 // pred_region
    %v521 = vld [vmem:[#allocation2] sm:$0xff]
    %v522 = vld [vmem:[#allocation2 + $0x8] sm:$0xff]
    %v523 = vld [vmem:[#allocation2 + $0x10] sm:$0xff]
    %v524 = vld [vmem:[%s2] sm:$0x7]
    %v526 = vperm.slane %v524, 0
    %v527 = vperm.slane %v524, 1
    %v528 = vperm.slane %v524, 2
    %v532 = vadd.f32 %v521, %v526
    %v533 = vadd.f32 %v522, %v527
    %v534 = vadd.f32 %v523, %v528
    %535 = vst [vmem:[%s3] sm:$0xff] %v532
    %536 = vst [vmem:[%s3 + $0x8] sm:$0xff] %v533
    %537 = vst [vmem:[%s3 + $0x10] sm:$0xff] %v534
  $region21: #{vim_backbone_forward.10} parent=0 // pred_fallthru
    _
  // Predicated region
  $region22: #{vim_backbone_forward.10} parent=0 // pred_check
    _
  $region23: #{vim_backbone_forward.10} parent=0 // pred_check_branch
    %539 = sbr.rel (0) target = $region25
  $region24: #{vim_backbone_forward.10} parent=0 // pred_region
    _
  $region25: #{vim_backbone_forward.10} parent=0 // pred_fallthru
    _
  // Predicated region
  $region26: #{vim_backbone_forward.10} parent=0 // pred_check
    _
  $region27: #{vim_backbone_forward.10} parent=0 // pred_check_branch
    %541 = sbr.rel (0) target = $region29
  $region28: #{vim_backbone_forward.10} parent=0 // pred_region
    _
  $region29: #{vim_backbone_forward.10} parent=0 // pred_fallthru
    _

// kernel: vim_backbone_forward.11
$region0: #{vim_backbone_forward.11}
  #allocation0 [shape = 'u32[]', space=smem, size = 0x4, offset = 0x4, fixed_abs, tag = 'smem constant byte address 0x4 - core index']
  #allocation1 [shape = 'u32[72,128]{1,0:T(1,128)}', space=vmem, size = 0x9000, scoped, tag = 'internal scratch']
  #allocation2 [shape = 'f32[8,512]{1,0:T(8,128)}', space=vmem, size = 0x4000, scoped, tag = 'scratch operand']
  %s0 = inlined_call_operand.vmem [shape: f32[8,288], index: 0, kind: input, shape index: {}]
  %s1 = inlined_call_operand.vmem [shape: bf16[288,512], index: 1, kind: input, shape index: {}]
  %s2 = inlined_call_operand.vmem [shape: f32[1,512], index: 2, kind: input, shape index: {}]
  %s3 = inlined_call_operand.vmem [shape: f32[8,512], index: 3, kind: output, shape index: {}]
  %s4 = sld [smem:[#allocation0]]
  $region30: #{vim_backbone_forward.11} parent=0
    _
  %s6 = ssub.s32 1, %s4
  %s7 = scalar_select 0, %s6, %s4
  // Predicated region
  $region2: #{vim_backbone_forward.11} parent=0 // pred_check
    _
  $region3: #{vim_backbone_forward.11} parent=0 // pred_check_branch
    %9 = sbr.rel (0) target = $region5
  $region4: #{vim_backbone_forward.11} parent=0 // pred_region
    _
  $region5: #{vim_backbone_forward.11} parent=0 // pred_fallthru
    _
  // Predicated region
  $region6: #{vim_backbone_forward.11} parent=0 // pred_check
    _
  $region7: #{vim_backbone_forward.11} parent=0 // pred_check_branch
    %11 = sbr.rel (0) target = $region9
  $region8: #{vim_backbone_forward.11} parent=0 // pred_region
    _
  $region9: #{vim_backbone_forward.11} parent=0 // pred_fallthru
    _
  // Predicated region
  $region10: #{vim_backbone_forward.11} parent=0 // pred_check
    _
  $region11: #{vim_backbone_forward.11} parent=0 // pred_check_branch
    %13 = sbr.rel (0) target = $region13
  $region12: #{vim_backbone_forward.11} parent=0 // pred_region
    _
  $region13: #{vim_backbone_forward.11} parent=0 // pred_fallthru
    _
  %p15 = scmp.eq.s32.totalorder 0, 0
  // Predicated region
  $region14: #{vim_backbone_forward.11} parent=0 // pred_check
    %p16 = pneg %p15
  $region15: #{vim_backbone_forward.11} parent=0 // pred_check_branch
    %18 = sbr.rel (%p16) target = $region17
  $region16: #{vim_backbone_forward.11} parent=0 // pred_region
    %19 = vst [vmem:[#allocation2] sm:$0xff] 0.0
    %20 = vst [vmem:[#allocation2 + $0x8] sm:$0xff] 0.0
    %21 = vst [vmem:[#allocation2 + $0x10] sm:$0xff] 0.0
    %22 = vst [vmem:[#allocation2 + $0x18] sm:$0xff] 0.0
  $region17: #{vim_backbone_forward.11} parent=0 // pred_fallthru
    _
  %v23 = vld [vmem:[#allocation2] sm:$0xff]
  %v24 = vld [vmem:[#allocation2 + $0x8] sm:$0xff]
  %v25 = vld [vmem:[#allocation2 + $0x10] sm:$0xff]
  %v26 = vld [vmem:[#allocation2 + $0x18] sm:$0xff]
  %v27 = vld [vmem:[%s0] sm:$0xff]
  %v28 = vld [vmem:[%s0 + $0x8] sm:$0xff]
  %v29 = vld [vmem:[%s0 + $0x10] sm:$0xff]
  %v30 = vpack.c.bf16 %v27, %v27
  %v31 = vpack.c.bf16 %v28, %v28
  %v32 = vpack.c.bf16 %v29, %v29
  %v33 = vld [vmem:[%s1] sm:$0xff]
  %v34 = vld [vmem:[%s1 + $0x8] sm:$0xff]
  %v35 = vld [vmem:[%s1 + $0x10] sm:$0xff]
  %v36 = vld [vmem:[%s1 + $0x18] sm:$0xff]
  %v37 = vld [vmem:[%s1 + $0x20] sm:$0xff]
  %v38 = vld [vmem:[%s1 + $0x28] sm:$0xff]
  %v39 = vld [vmem:[%s1 + $0x30] sm:$0xff]
  %v40 = vld [vmem:[%s1 + $0x38] sm:$0xff]
  %v41 = vld [vmem:[%s1 + $0x40] sm:$0xff]
  %v42 = vld [vmem:[%s1 + $0x48] sm:$0xff]
  %v43 = vld [vmem:[%s1 + $0x50] sm:$0xff]
  %v44 = vld [vmem:[%s1 + $0x58] sm:$0xff]
  %v45 = vld [vmem:[%s1 + $0x60] sm:$0xff]
  %v46 = vld [vmem:[%s1 + $0x68] sm:$0xff]
  %v47 = vld [vmem:[%s1 + $0x70] sm:$0xff]
  %v48 = vld [vmem:[%s1 + $0x78] sm:$0xff]
  %v49 = vld [vmem:[%s1 + $0x80] sm:$0xff]
  %v50 = vld [vmem:[%s1 + $0x88] sm:$0xff]
  %v51 = vld [vmem:[%s1 + $0x90] sm:$0xff]
  %v52 = vld [vmem:[%s1 + $0x98] sm:$0xff]
  %v53 = vld [vmem:[%s1 + $0xa0] sm:$0xff]
  %v54 = vld [vmem:[%s1 + $0xa8] sm:$0xff]
  %v55 = vld [vmem:[%s1 + $0xb0] sm:$0xff]
  %v56 = vld [vmem:[%s1 + $0xb8] sm:$0xff]
  %v57 = vld [vmem:[%s1 + $0xc0] sm:$0xff]
  %v58 = vld [vmem:[%s1 + $0xc8] sm:$0xff]
  %v59 = vld [vmem:[%s1 + $0xd0] sm:$0xff]
  %v60 = vld [vmem:[%s1 + $0xd8] sm:$0xff]
  %v61 = vld [vmem:[%s1 + $0xe0] sm:$0xff]
  %v62 = vld [vmem:[%s1 + $0xe8] sm:$0xff]
  %v63 = vld [vmem:[%s1 + $0xf0] sm:$0xff]
  %v64 = vld [vmem:[%s1 + $0xf8] sm:$0xff]
  %v65 = vld [vmem:[%s1 + $0x100] sm:$0xff]
  %v66 = vld [vmem:[%s1 + $0x108] sm:$0xff]
  %v67 = vld [vmem:[%s1 + $0x110] sm:$0xff]
  %v68 = vld [vmem:[%s1 + $0x118] sm:$0xff]
  %v69 = vld [vmem:[%s1 + $0x120] sm:$0xff]
  %v70 = vld [vmem:[%s1 + $0x128] sm:$0xff]
  %v71 = vld [vmem:[%s1 + $0x130] sm:$0xff]
  %v72 = vld [vmem:[%s1 + $0x138] sm:$0xff]
  %v73 = vld [vmem:[%s1 + $0x140] sm:$0xff]
  %v74 = vld [vmem:[%s1 + $0x148] sm:$0xff]
  %v75 = vld [vmem:[%s1 + $0x150] sm:$0xff]
  %v76 = vld [vmem:[%s1 + $0x158] sm:$0xff]
  %v77 = vld [vmem:[%s1 + $0x160] sm:$0xff]
  %v78 = vld [vmem:[%s1 + $0x168] sm:$0xff]
  %v79 = vld [vmem:[%s1 + $0x170] sm:$0xff]
  %v80 = vld [vmem:[%s1 + $0x178] sm:$0xff]
  %v81 = vld [vmem:[%s1 + $0x180] sm:$0xff]
  %v82 = vld [vmem:[%s1 + $0x188] sm:$0xff]
  %v83 = vld [vmem:[%s1 + $0x190] sm:$0xff]
  %v84 = vld [vmem:[%s1 + $0x198] sm:$0xff]
  %v85 = vld [vmem:[%s1 + $0x1a0] sm:$0xff]
  %v86 = vld [vmem:[%s1 + $0x1a8] sm:$0xff]
  %v87 = vld [vmem:[%s1 + $0x1b0] sm:$0xff]
  %v88 = vld [vmem:[%s1 + $0x1b8] sm:$0xff]
  %v89 = vld [vmem:[%s1 + $0x1c0] sm:$0xff]
  %v90 = vld [vmem:[%s1 + $0x1c8] sm:$0xff]
  %v91 = vld [vmem:[%s1 + $0x1d0] sm:$0xff]
  %v92 = vld [vmem:[%s1 + $0x1d8] sm:$0xff]
  %v93 = vld [vmem:[%s1 + $0x1e0] sm:$0xff]
  %v94 = vld [vmem:[%s1 + $0x1e8] sm:$0xff]
  %v95 = vld [vmem:[%s1 + $0x1f0] sm:$0xff]
  %v96 = vld [vmem:[%s1 + $0x1f8] sm:$0xff]
  %v97 = vld [vmem:[%s1 + $0x200] sm:$0xff]
  %v98 = vld [vmem:[%s1 + $0x208] sm:$0xff]
  %v99 = vld [vmem:[%s1 + $0x210] sm:$0xff]
  %v100 = vld [vmem:[%s1 + $0x218] sm:$0xff]
  %v101 = vld [vmem:[%s1 + $0x220] sm:$0xff]
  %v102 = vld [vmem:[%s1 + $0x228] sm:$0xff]
  %v103 = vld [vmem:[%s1 + $0x230] sm:$0xff]
  %v104 = vld [vmem:[%s1 + $0x238] sm:$0xff]
  %v177 = vunpack.c.l.b16 %v33
  %v178 = vunpack.c.h.b16 %v33
  %v179 = vunpack.c.l.b16 %v34
  %v180 = vunpack.c.h.b16 %v34
  %v181 = vunpack.c.l.b16 %v35
  %v182 = vunpack.c.h.b16 %v35
  %v183 = vunpack.c.l.b16 %v36
  %v184 = vunpack.c.h.b16 %v36
  %v185 = vunpack.c.l.b16 %v37
  %v186 = vunpack.c.h.b16 %v37
  %v187 = vunpack.c.l.b16 %v38
  %v188 = vunpack.c.h.b16 %v38
  %v189 = vunpack.c.l.b16 %v39
  %v190 = vunpack.c.h.b16 %v39
  %v191 = vunpack.c.l.b16 %v40
  %v192 = vunpack.c.h.b16 %v40
  %v193 = vunpack.c.l.b16 %v41
  %v194 = vunpack.c.h.b16 %v41
  %v195 = vunpack.c.l.b16 %v42
  %v196 = vunpack.c.h.b16 %v42
  %v197 = vunpack.c.l.b16 %v43
  %v198 = vunpack.c.h.b16 %v43
  %v199 = vunpack.c.l.b16 %v44
  %v200 = vunpack.c.h.b16 %v44
  %v201 = vunpack.c.l.b16 %v45
  %v202 = vunpack.c.h.b16 %v45
  %v203 = vunpack.c.l.b16 %v46
  %v204 = vunpack.c.h.b16 %v46
  %v205 = vunpack.c.l.b16 %v47
  %v206 = vunpack.c.h.b16 %v47
  %v207 = vunpack.c.l.b16 %v48
  %v208 = vunpack.c.h.b16 %v48
  %v209 = vunpack.c.l.b16 %v49
  %v210 = vunpack.c.h.b16 %v49
  %v211 = vunpack.c.l.b16 %v50
  %v212 = vunpack.c.h.b16 %v50
  %v213 = vunpack.c.l.b16 %v51
  %v214 = vunpack.c.h.b16 %v51
  %v215 = vunpack.c.l.b16 %v52
  %v216 = vunpack.c.h.b16 %v52
  %v217 = vunpack.c.l.b16 %v53
  %v218 = vunpack.c.h.b16 %v53
  %v219 = vunpack.c.l.b16 %v54
  %v220 = vunpack.c.h.b16 %v54
  %v221 = vunpack.c.l.b16 %v55
  %v222 = vunpack.c.h.b16 %v55
  %v223 = vunpack.c.l.b16 %v56
  %v224 = vunpack.c.h.b16 %v56
  %v225 = vunpack.c.l.b16 %v57
  %v226 = vunpack.c.h.b16 %v57
  %v227 = vunpack.c.l.b16 %v58
  %v228 = vunpack.c.h.b16 %v58
  %v229 = vunpack.c.l.b16 %v59
  %v230 = vunpack.c.h.b16 %v59
  %v231 = vunpack.c.l.b16 %v60
  %v232 = vunpack.c.h.b16 %v60
  %v233 = vunpack.c.l.b16 %v61
  %v234 = vunpack.c.h.b16 %v61
  %v235 = vunpack.c.l.b16 %v62
  %v236 = vunpack.c.h.b16 %v62
  %v237 = vunpack.c.l.b16 %v63
  %v238 = vunpack.c.h.b16 %v63
  %v239 = vunpack.c.l.b16 %v64
  %v240 = vunpack.c.h.b16 %v64
  %v241 = vunpack.c.l.b16 %v65
  %v242 = vunpack.c.h.b16 %v65
  %v243 = vunpack.c.l.b16 %v66
  %v244 = vunpack.c.h.b16 %v66
  %v245 = vunpack.c.l.b16 %v67
  %v246 = vunpack.c.h.b16 %v67
  %v247 = vunpack.c.l.b16 %v68
  %v248 = vunpack.c.h.b16 %v68
  %v249 = vunpack.c.l.b16 %v69
  %v250 = vunpack.c.h.b16 %v69
  %v251 = vunpack.c.l.b16 %v70
  %v252 = vunpack.c.h.b16 %v70
  %v253 = vunpack.c.l.b16 %v71
  %v254 = vunpack.c.h.b16 %v71
  %v255 = vunpack.c.l.b16 %v72
  %v256 = vunpack.c.h.b16 %v72
  %v257 = vunpack.c.l.b16 %v73
  %v258 = vunpack.c.h.b16 %v73
  %v259 = vunpack.c.l.b16 %v74
  %v260 = vunpack.c.h.b16 %v74
  %v261 = vunpack.c.l.b16 %v75
  %v262 = vunpack.c.h.b16 %v75
  %v263 = vunpack.c.l.b16 %v76
  %v264 = vunpack.c.h.b16 %v76
  %v265 = vunpack.c.l.b16 %v77
  %v266 = vunpack.c.h.b16 %v77
  %v267 = vunpack.c.l.b16 %v78
  %v268 = vunpack.c.h.b16 %v78
  %v269 = vunpack.c.l.b16 %v79
  %v270 = vunpack.c.h.b16 %v79
  %v271 = vunpack.c.l.b16 %v80
  %v272 = vunpack.c.h.b16 %v80
  %v273 = vunpack.c.l.b16 %v81
  %v274 = vunpack.c.h.b16 %v81
  %v275 = vunpack.c.l.b16 %v82
  %v276 = vunpack.c.h.b16 %v82
  %v277 = vunpack.c.l.b16 %v83
  %v278 = vunpack.c.h.b16 %v83
  %v279 = vunpack.c.l.b16 %v84
  %v280 = vunpack.c.h.b16 %v84
  %v281 = vunpack.c.l.b16 %v85
  %v282 = vunpack.c.h.b16 %v85
  %v283 = vunpack.c.l.b16 %v86
  %v284 = vunpack.c.h.b16 %v86
  %v285 = vunpack.c.l.b16 %v87
  %v286 = vunpack.c.h.b16 %v87
  %v287 = vunpack.c.l.b16 %v88
  %v288 = vunpack.c.h.b16 %v88
  %v289 = vunpack.c.l.b16 %v89
  %v290 = vunpack.c.h.b16 %v89
  %v291 = vunpack.c.l.b16 %v90
  %v292 = vunpack.c.h.b16 %v90
  %v293 = vunpack.c.l.b16 %v91
  %v294 = vunpack.c.h.b16 %v91
  %v295 = vunpack.c.l.b16 %v92
  %v296 = vunpack.c.h.b16 %v92
  %v297 = vunpack.c.l.b16 %v93
  %v298 = vunpack.c.h.b16 %v93
  %v299 = vunpack.c.l.b16 %v94
  %v300 = vunpack.c.h.b16 %v94
  %v301 = vunpack.c.l.b16 %v95
  %v302 = vunpack.c.h.b16 %v95
  %v303 = vunpack.c.l.b16 %v96
  %v304 = vunpack.c.h.b16 %v96
  %v305 = vunpack.c.l.b16 %v97
  %v306 = vunpack.c.h.b16 %v97
  %v307 = vunpack.c.l.b16 %v98
  %v308 = vunpack.c.h.b16 %v98
  %v309 = vunpack.c.l.b16 %v99
  %v310 = vunpack.c.h.b16 %v99
  %v311 = vunpack.c.l.b16 %v100
  %v312 = vunpack.c.h.b16 %v100
  %v313 = vunpack.c.l.b16 %v101
  %v314 = vunpack.c.h.b16 %v101
  %v315 = vunpack.c.l.b16 %v102
  %v316 = vunpack.c.h.b16 %v102
  %v317 = vunpack.c.l.b16 %v103
  %v318 = vunpack.c.h.b16 %v103
  %v319 = vunpack.c.l.b16 %v104
  %v320 = vunpack.c.h.b16 %v104
  %v321 = vpack.c.b16 %v181, %v177
  %v322 = vpack.c.b16 %v182, %v178
  %v323 = vpack.c.b16 %v183, %v179
  %v324 = vpack.c.b16 %v184, %v180
  %v325 = vpack.c.b16 %v189, %v185
  %v326 = vpack.c.b16 %v190, %v186
  %v327 = vpack.c.b16 %v191, %v187
  %v328 = vpack.c.b16 %v192, %v188
  %v329 = vpack.c.b16 %v197, %v193
  %v330 = vpack.c.b16 %v198, %v194
  %v331 = vpack.c.b16 %v199, %v195
  %v332 = vpack.c.b16 %v200, %v196
  %v333 = vpack.c.b16 %v205, %v201
  %v334 = vpack.c.b16 %v206, %v202
  %v335 = vpack.c.b16 %v207, %v203
  %v336 = vpack.c.b16 %v208, %v204
  %v337 = vpack.c.b16 %v213, %v209
  %v338 = vpack.c.b16 %v214, %v210
  %v339 = vpack.c.b16 %v215, %v211
  %v340 = vpack.c.b16 %v216, %v212
  %v341 = vpack.c.b16 %v221, %v217
  %v342 = vpack.c.b16 %v222, %v218
  %v343 = vpack.c.b16 %v223, %v219
  %v344 = vpack.c.b16 %v224, %v220
  %v345 = vpack.c.b16 %v229, %v225
  %v346 = vpack.c.b16 %v230, %v226
  %v347 = vpack.c.b16 %v231, %v227
  %v348 = vpack.c.b16 %v232, %v228
  %v349 = vpack.c.b16 %v237, %v233
  %v350 = vpack.c.b16 %v238, %v234
  %v351 = vpack.c.b16 %v239, %v235
  %v352 = vpack.c.b16 %v240, %v236
  %v353 = vpack.c.b16 %v245, %v241
  %v354 = vpack.c.b16 %v246, %v242
  %v355 = vpack.c.b16 %v247, %v243
  %v356 = vpack.c.b16 %v248, %v244
  %v357 = vpack.c.b16 %v253, %v249
  %v358 = vpack.c.b16 %v254, %v250
  %v359 = vpack.c.b16 %v255, %v251
  %v360 = vpack.c.b16 %v256, %v252
  %v361 = vpack.c.b16 %v261, %v257
  %v362 = vpack.c.b16 %v262, %v258
  %v363 = vpack.c.b16 %v263, %v259
  %v364 = vpack.c.b16 %v264, %v260
  %v365 = vpack.c.b16 %v269, %v265
  %v366 = vpack.c.b16 %v270, %v266
  %v367 = vpack.c.b16 %v271, %v267
  %v368 = vpack.c.b16 %v272, %v268
  %v369 = vpack.c.b16 %v277, %v273
  %v370 = vpack.c.b16 %v278, %v274
  %v371 = vpack.c.b16 %v279, %v275
  %v372 = vpack.c.b16 %v280, %v276
  %v373 = vpack.c.b16 %v285, %v281
  %v374 = vpack.c.b16 %v286, %v282
  %v375 = vpack.c.b16 %v287, %v283
  %v376 = vpack.c.b16 %v288, %v284
  %v377 = vpack.c.b16 %v293, %v289
  %v378 = vpack.c.b16 %v294, %v290
  %v379 = vpack.c.b16 %v295, %v291
  %v380 = vpack.c.b16 %v296, %v292
  %v381 = vpack.c.b16 %v301, %v297
  %v382 = vpack.c.b16 %v302, %v298
  %v383 = vpack.c.b16 %v303, %v299
  %v384 = vpack.c.b16 %v304, %v300
  %v385 = vpack.c.b16 %v309, %v305
  %v386 = vpack.c.b16 %v310, %v306
  %v387 = vpack.c.b16 %v311, %v307
  %v388 = vpack.c.b16 %v312, %v308
  %v389 = vpack.c.b16 %v317, %v313
  %v390 = vpack.c.b16 %v318, %v314
  %v391 = vpack.c.b16 %v319, %v315
  %v392 = vpack.c.b16 %v320, %v316
  %vm465 = vcmask 261120
  %v467 = vsel %vm465, %v32, 0
  %469 = vmatpush.bf16.msra.mxu0 %v349
  %470 = vmatpush.bf16.msra.mxu0 %v345
  %471 = vmatpush.bf16.msra.mxu0 %v341
  %472 = vmatpush.bf16.msra.mxu0 %v337
  %473 = vmatpush.bf16.msra.mxu0 %v333
  %474 = vmatpush.bf16.msra.mxu0 %v329
  %475 = vmatpush.bf16.msra.mxu0 %v325
  %476 = vmatpush.bf16.msra.mxu0 %v321
  %477 = vmatmul.bf16.gmra.mxu0 %v30
  %v478 = vpop.f32.mrf.mxu0
  %v479 = vadd.f32 0.0, %v478
  %v480 = vpop.f32.mrf.mxu0
  %481 = vdwg.mxu0
  %482 = vmatpush.bf16.msra.mxu0 %v381
  %483 = vmatpush.bf16.msra.mxu0 %v377
  %484 = vmatpush.bf16.msra.mxu0 %v373
  %485 = vmatpush.bf16.msra.mxu0 %v369
  %486 = vmatpush.bf16.msra.mxu0 %v365
  %487 = vmatpush.bf16.msra.mxu0 %v361
  %488 = vmatpush.bf16.msra.mxu0 %v357
  %489 = vmatpush.bf16.msra.mxu0 %v353
  %490 = vmatmul.bf16.gmra.mxu0 %v31
  %v491 = vpop.f32.mrf.mxu0
  %v492 = vadd.f32 %v479, %v491
  %v493 = vpop.f32.mrf.mxu0
  %494 = vdwg.mxu0
  %495 = vmatpush.bf16.msra.mxu0 0
  %496 = vmatpush.bf16.msra.mxu0 0
  %497 = vmatpush.bf16.msra.mxu0 0
  %498 = vmatpush.bf16.msra.mxu0 0
  %499 = vmatpush.bf16.msra.mxu0 0
  %500 = vmatpush.bf16.msra.mxu0 0
  %501 = vmatpush.bf16.msra.mxu0 %v389
  %502 = vmatpush.bf16.msra.mxu0 %v385
  %503 = vmatmul.bf16.gmra.mxu0 %v467
  %v504 = vpop.f32.mrf.mxu0
  %v505 = vadd.f32 %v492, %v504
  %v506 = vpop.f32.mrf.mxu0
  %507 = vdwg.mxu0
  %508 = vmatpush.bf16.msra.mxu0 %v350
  %509 = vmatpush.bf16.msra.mxu0 %v346
  %510 = vmatpush.bf16.msra.mxu0 %v342
  %511 = vmatpush.bf16.msra.mxu0 %v338
  %512 = vmatpush.bf16.msra.mxu0 %v334
  %513 = vmatpush.bf16.msra.mxu0 %v330
  %514 = vmatpush.bf16.msra.mxu0 %v326
  %515 = vmatpush.bf16.msra.mxu0 %v322
  %516 = vmatmul.bf16.gmra.mxu0 %v30
  %v517 = vpop.f32.mrf.mxu0
  %v518 = vadd.f32 0.0, %v517
  %v519 = vpop.f32.mrf.mxu0
  %520 = vdwg.mxu0
  %521 = vmatpush.bf16.msra.mxu0 %v382
  %522 = vmatpush.bf16.msra.mxu0 %v378
  %523 = vmatpush.bf16.msra.mxu0 %v374
  %524 = vmatpush.bf16.msra.mxu0 %v370
  %525 = vmatpush.bf16.msra.mxu0 %v366
  %526 = vmatpush.bf16.msra.mxu0 %v362
  %527 = vmatpush.bf16.msra.mxu0 %v358
  %528 = vmatpush.bf16.msra.mxu0 %v354
  %529 = vmatmul.bf16.gmra.mxu0 %v31
  %v530 = vpop.f32.mrf.mxu0
  %v531 = vadd.f32 %v518, %v530
  %v532 = vpop.f32.mrf.mxu0
  %533 = vdwg.mxu0
  %534 = vmatpush.bf16.msra.mxu0 0
  %535 = vmatpush.bf16.msra.mxu0 0
  %536 = vmatpush.bf16.msra.mxu0 0
  %537 = vmatpush.bf16.msra.mxu0 0
  %538 = vmatpush.bf16.msra.mxu0 0
  %539 = vmatpush.bf16.msra.mxu0 0
  %540 = vmatpush.bf16.msra.mxu0 %v390
  %541 = vmatpush.bf16.msra.mxu0 %v386
  %542 = vmatmul.bf16.gmra.mxu0 %v467
  %v543 = vpop.f32.mrf.mxu0
  %v544 = vadd.f32 %v531, %v543
  %v545 = vpop.f32.mrf.mxu0
  %546 = vdwg.mxu0
  %547 = vmatpush.bf16.msra.mxu0 %v351
  %548 = vmatpush.bf16.msra.mxu0 %v347
  %549 = vmatpush.bf16.msra.mxu0 %v343
  %550 = vmatpush.bf16.msra.mxu0 %v339
  %551 = vmatpush.bf16.msra.mxu0 %v335
  %552 = vmatpush.bf16.msra.mxu0 %v331
  %553 = vmatpush.bf16.msra.mxu0 %v327
  %554 = vmatpush.bf16.msra.mxu0 %v323
  %555 = vmatmul.bf16.gmra.mxu0 %v30
  %v556 = vpop.f32.mrf.mxu0
  %v557 = vadd.f32 0.0, %v556
  %v558 = vpop.f32.mrf.mxu0
  %559 = vdwg.mxu0
  %560 = vmatpush.bf16.msra.mxu0 %v383
  %561 = vmatpush.bf16.msra.mxu0 %v379
  %562 = vmatpush.bf16.msra.mxu0 %v375
  %563 = vmatpush.bf16.msra.mxu0 %v371
  %564 = vmatpush.bf16.msra.mxu0 %v367
  %565 = vmatpush.bf16.msra.mxu0 %v363
  %566 = vmatpush.bf16.msra.mxu0 %v359
  %567 = vmatpush.bf16.msra.mxu0 %v355
  %568 = vmatmul.bf16.gmra.mxu0 %v31
  %v569 = vpop.f32.mrf.mxu0
  %v570 = vadd.f32 %v557, %v569
  %v571 = vpop.f32.mrf.mxu0
  %572 = vdwg.mxu0
  %573 = vmatpush.bf16.msra.mxu0 0
  %574 = vmatpush.bf16.msra.mxu0 0
  %575 = vmatpush.bf16.msra.mxu0 0
  %576 = vmatpush.bf16.msra.mxu0 0
  %577 = vmatpush.bf16.msra.mxu0 0
  %578 = vmatpush.bf16.msra.mxu0 0
  %579 = vmatpush.bf16.msra.mxu0 %v391
  %580 = vmatpush.bf16.msra.mxu0 %v387
  %581 = vmatmul.bf16.gmra.mxu0 %v467
  %v582 = vpop.f32.mrf.mxu0
  %v583 = vadd.f32 %v570, %v582
  %v584 = vpop.f32.mrf.mxu0
  %585 = vdwg.mxu0
  %586 = vmatpush.bf16.msra.mxu0 %v352
  %587 = vmatpush.bf16.msra.mxu0 %v348
  %588 = vmatpush.bf16.msra.mxu0 %v344
  %589 = vmatpush.bf16.msra.mxu0 %v340
  %590 = vmatpush.bf16.msra.mxu0 %v336
  %591 = vmatpush.bf16.msra.mxu0 %v332
  %592 = vmatpush.bf16.msra.mxu0 %v328
  %593 = vmatpush.bf16.msra.mxu0 %v324
  %594 = vmatmul.bf16.gmra.mxu0 %v30
  %v595 = vpop.f32.mrf.mxu0
  %v596 = vadd.f32 0.0, %v595
  %v597 = vpop.f32.mrf.mxu0
  %598 = vdwg.mxu0
  %599 = vmatpush.bf16.msra.mxu0 %v384
  %600 = vmatpush.bf16.msra.mxu0 %v380
  %601 = vmatpush.bf16.msra.mxu0 %v376
  %602 = vmatpush.bf16.msra.mxu0 %v372
  %603 = vmatpush.bf16.msra.mxu0 %v368
  %604 = vmatpush.bf16.msra.mxu0 %v364
  %605 = vmatpush.bf16.msra.mxu0 %v360
  %606 = vmatpush.bf16.msra.mxu0 %v356
  %607 = vmatmul.bf16.gmra.mxu0 %v31
  %v608 = vpop.f32.mrf.mxu0
  %v609 = vadd.f32 %v596, %v608
  %v610 = vpop.f32.mrf.mxu0
  %611 = vdwg.mxu0
  %612 = vmatpush.bf16.msra.mxu0 0
  %613 = vmatpush.bf16.msra.mxu0 0
  %614 = vmatpush.bf16.msra.mxu0 0
  %615 = vmatpush.bf16.msra.mxu0 0
  %616 = vmatpush.bf16.msra.mxu0 0
  %617 = vmatpush.bf16.msra.mxu0 0
  %618 = vmatpush.bf16.msra.mxu0 %v392
  %619 = vmatpush.bf16.msra.mxu0 %v388
  %620 = vmatmul.bf16.gmra.mxu0 %v467
  %v621 = vpop.f32.mrf.mxu0
  %v622 = vadd.f32 %v609, %v621
  %v623 = vpop.f32.mrf.mxu0
  %624 = vdwg.mxu0
  %v625 = vadd.f32 %v23, %v505
  %v626 = vadd.f32 %v24, %v544
  %v627 = vadd.f32 %v25, %v583
  %v628 = vadd.f32 %v26, %v622
  %629 = vst [vmem:[#allocation2] sm:$0xff] %v625
  %630 = vst [vmem:[#allocation2 + $0x8] sm:$0xff] %v626
  %631 = vst [vmem:[#allocation2 + $0x10] sm:$0xff] %v627
  %632 = vst [vmem:[#allocation2 + $0x18] sm:$0xff] %v628
  // Predicated region
  $region18: #{vim_backbone_forward.11} parent=0 // pred_check
    %p633 = pneg %p15
  $region19: #{vim_backbone_forward.11} parent=0 // pred_check_branch
    %635 = sbr.rel (%p633) target = $region21
  $region20: #{vim_backbone_forward.11} parent=0 // pred_region
    %v636 = vld [vmem:[#allocation2] sm:$0xff]
    %v637 = vld [vmem:[#allocation2 + $0x8] sm:$0xff]
    %v638 = vld [vmem:[#allocation2 + $0x10] sm:$0xff]
    %v639 = vld [vmem:[#allocation2 + $0x18] sm:$0xff]
    %v640 = vld [vmem:[%s2] sm:$0xf]
    %v642 = vperm.slane %v640, 0
    %v643 = vperm.slane %v640, 1
    %v644 = vperm.slane %v640, 2
    %v645 = vperm.slane %v640, 3
    %v650 = vadd.f32 %v636, %v642
    %v651 = vadd.f32 %v637, %v643
    %v652 = vadd.f32 %v638, %v644
    %v653 = vadd.f32 %v639, %v645
    %654 = vst [vmem:[%s3] sm:$0xff] %v650
    %655 = vst [vmem:[%s3 + $0x8] sm:$0xff] %v651
    %656 = vst [vmem:[%s3 + $0x10] sm:$0xff] %v652
    %657 = vst [vmem:[%s3 + $0x18] sm:$0xff] %v653
  $region21: #{vim_backbone_forward.11} parent=0 // pred_fallthru
    _
  // Predicated region
  $region22: #{vim_backbone_forward.11} parent=0 // pred_check
    _
  $region23: #{vim_backbone_forward.11} parent=0 // pred_check_branch
    %659 = sbr.rel (0) target = $region25
  $region24: #{vim_backbone_forward.11} parent=0 // pred_region
    _
  $region25: #{vim_backbone_forward.11} parent=0 // pred_fallthru
    _
  // Predicated region
  $region26: #{vim_backbone_forward.11} parent=0 // pred_check
    _
  $region27: #{vim_backbone_forward.11} parent=0 // pred_check_branch
    %661 = sbr.rel (0) target = $region29
  $region28: #{vim_backbone_forward.11} parent=0 // pred_region
    _
  $region29: #{vim_backbone_forward.11} parent=0 // pred_fallthru
    _

// kernel: vim_backbone_forward.8
$region0: #{vim_backbone_forward.8}
  #allocation0 [shape = 'u32[]', space=smem, size = 0x4, offset = 0x4, fixed_abs, tag = 'smem constant byte address 0x4 - core index']
  #allocation1 [shape = 'u32[72,128]{1,0:T(1,128)}', space=vmem, size = 0x9000, scoped, tag = 'internal scratch']
  #allocation2 [shape = 'f32[32,384]{1,0:T(8,128)}', space=vmem, size = 0xc000, scoped, tag = 'scratch operand']
  %s0 = inlined_call_operand.vmem [shape: f32[32,32], index: 0, kind: input, shape index: {}]
  %s1 = inlined_call_operand.vmem [shape: bf16[32,768], index: 1, kind: input, shape index: {}]
  %s2 = inlined_call_operand.vmem [shape: f32[1,768], index: 2, kind: input, shape index: {}]
  %s3 = inlined_call_operand.vmem [shape: f32[32,768], index: 3, kind: output, shape index: {}]
  %s4 = sld [smem:[#allocation0]]
  $region98: #{vim_backbone_forward.8} parent=0
    _
  %s6 = ssub.s32 1, %s4
  %s7 = scalar_select 0, %s6, %s4
  $region1: #{vim_backbone_forward.8} parent=0
    #allocation3 [shape = 'u8[49152]{0}', space=vmem, size = 0xc000, scoped, tag = 'input window, operand 1']
    #allocation4 [shape = 'u8[98304]{0}', space=vmem, size = 0x18000, scoped, tag = 'output window, operand 0']
    loop: start=0, step=1, limit=4
    $region2: #{vim_backbone_forward.8} parent=1 // loop_pre_header
      _
    $region3: #{vim_backbone_forward.8} parent=1 // loop_header
      %s9 = sphi 0, %s13
      %p10 = scmp.ge.s32.totalorder %s9, 4
      %s16 = sphi 0, %s35
      %s17 = sphi 0, %s31
      %s18 = sphi 0, %s27
      %s19 = sphi 0, %s16
      %s20 = sphi 0, %s17
      %s21 = sphi 0, %s18
      %s22 = sphi 0, %s19
      %s23 = sphi 0, %s20
      %s24 = sphi 0, %s21
      %s40 = sphi 0, %s42
      %s43 = sphi 0, %s40
      %s44 = sphi 0, %s43
      %s60 = sphi 0, %s44
      %s68 = sphi 0, %s70
      %s71 = sphi 0, %s68
      %s72 = sphi 0, %s71
      %s88 = sphi 0, %s72
      %s94 = sphi 0, %s96
      %s97 = sphi 0, %s94
      %s98 = sphi 0, %s97
      %s114 = sphi 0, %s98
      %s122 = sphi 0, %s124
      %s125 = sphi 0, %s122
      %s126 = sphi 0, %s125
      %s142 = sphi 0, %s126
    $region4: #{vim_backbone_forward.8} parent=1 // loop_header_branch
      %12 = sbr.rel (%p10) target = $region8
    $region5: #{vim_backbone_forward.8} parent=1 // loop_body
      %s14 = ssub.s32 %s9, 1
      %s15 = ssub.s32 %s9, 2
      %s25 = sadd.s32 1, %s18
      %p26 = scmp.ge.s32.totalorder %s25, 1
      %s27 = scalar_select %p26, 0, %s25
      %s28 = sadd.s32 1, %s17
      %s29 = scalar_select %p26, %s28, %s17
      %p30 = scmp.ge.s32.totalorder %s29, 2
      %s31 = scalar_select %p30, 0, %s29
      %s32 = sadd.s32 1, %s16
      %s33 = scalar_select %p30, %s32, %s16
      %p34 = scmp.ge.s32.totalorder %s33, 1
      %s35 = scalar_select %p34, 0, %s33
      %s36 = ssub.s32 %s16, %s35
      %s37 = ssub.s32 %s18, %s27
      %s38 = sor.u32 %s36, %s37
      %p39 = scmp.eq.s32.totalorder %s38, 0
      %s41 = sadd.s32 %s40, 1
      %s42 = scalar_select %p39, %s40, %s41
      %p45 = pneg %p39
      %p46 = scmp.eq.s32.totalorder %s9, 1
      %p47 = por %p45, %p46
      %p48 = scmp.ne.s32.totalorder %s40, %s43
      %p49 = scmp.eq.s32.totalorder %s9, 0
      %p50 = por %p48, %p49
      %p51 = scmp.ne.s32.totalorder %s40, %s43
      %p52 = scmp.eq.s32.totalorder %s14, 1
      %p53 = por %p51, %p52
      %p54 = scmp.ne.s32.totalorder %s43, %s44
      %p55 = scmp.eq.s32.totalorder %s14, 0
      %p56 = por %p54, %p55
      %p57 = scmp.ne.s32.totalorder %s43, %s44
      %p58 = scmp.eq.s32.totalorder %s15, 1
      %p59 = por %p57, %p58
      %p61 = scmp.ne.s32.totalorder %s44, %s60
      %p62 = scmp.eq.s32.totalorder %s15, 0
      %p63 = por %p61, %p62
      %s64 = ssub.s32 %s18, %s27
      %s65 = ssub.s32 %s17, %s31
      %s66 = sor.u32 %s64, %s65
      %p67 = scmp.eq.s32.totalorder %s66, 0
      %s69 = sadd.s32 %s68, 1
      %s70 = scalar_select %p67, %s68, %s69
      %p73 = pneg %p67
      %p74 = scmp.eq.s32.totalorder %s9, 1
      %p75 = por %p73, %p74
      %p76 = scmp.ne.s32.totalorder %s68, %s71
      %p77 = scmp.eq.s32.totalorder %s9, 0
      %p78 = por %p76, %p77
      %p79 = scmp.ne.s32.totalorder %s68, %s71
      %p80 = scmp.eq.s32.totalorder %s14, 1
      %p81 = por %p79, %p80
      %p82 = scmp.ne.s32.totalorder %s71, %s72
      %p83 = scmp.eq.s32.totalorder %s14, 0
      %p84 = por %p82, %p83
      %p85 = scmp.ne.s32.totalorder %s71, %s72
      %p86 = scmp.eq.s32.totalorder %s15, 1
      %p87 = por %p85, %p86
      %p89 = scmp.ne.s32.totalorder %s72, %s88
      %p90 = scmp.eq.s32.totalorder %s15, 0
      %p91 = por %p89, %p90
      %s92 = ssub.s32 %s17, %s31
      %p93 = scmp.eq.s32.totalorder %s92, 0
      %s95 = sadd.s32 %s94, 1
      %s96 = scalar_select %p93, %s94, %s95
      %p99 = pneg %p93
      %p100 = scmp.eq.s32.totalorder %s9, 1
      %p101 = por %p99, %p100
      %p102 = scmp.ne.s32.totalorder %s94, %s97
      %p103 = scmp.eq.s32.totalorder %s9, 0
      %p104 = por %p102, %p103
      %p105 = scmp.ne.s32.totalorder %s94, %s97
      %p106 = scmp.eq.s32.totalorder %s14, 1
      %p107 = por %p105, %p106
      %p108 = scmp.ne.s32.totalorder %s97, %s98
      %p109 = scmp.eq.s32.totalorder %s14, 0
      %p110 = por %p108, %p109
      %p111 = scmp.ne.s32.totalorder %s97, %s98
      %p112 = scmp.eq.s32.totalorder %s15, 1
      %p113 = por %p111, %p112
      %p115 = scmp.ne.s32.totalorder %s98, %s114
      %p116 = scmp.eq.s32.totalorder %s15, 0
      %p117 = por %p115, %p116
      %s118 = ssub.s32 %s16, %s35
      %s119 = ssub.s32 %s17, %s31
      %s120 = sor.u32 %s118, %s119
      %p121 = scmp.eq.s32.totalorder %s120, 0
      %s123 = sadd.s32 %s122, 1
      %s124 = scalar_select %p121, %s122, %s123
      %p127 = pneg %p121
      %p128 = scmp.eq.s32.totalorder %s9, 1
      %p129 = por %p127, %p128
      %p130 = scmp.ne.s32.totalorder %s122, %s125
      %p131 = scmp.eq.s32.totalorder %s9, 0
      %p132 = por %p130, %p131
      %p133 = scmp.ne.s32.totalorder %s122, %s125
      %p134 = scmp.eq.s32.totalorder %s14, 1
      %p135 = por %p133, %p134
      %p136 = scmp.ne.s32.totalorder %s125, %s126
      %p137 = scmp.eq.s32.totalorder %s14, 0
      %p138 = por %p136, %p137
      %p139 = scmp.ne.s32.totalorder %s125, %s126
      %p140 = scmp.eq.s32.totalorder %s15, 1
      %p141 = por %p139, %p140
      %p143 = scmp.ne.s32.totalorder %s126, %s142
      %p144 = scmp.eq.s32.totalorder %s15, 0
      %p145 = por %p143, %p144
      %p146 = scmp.le.s32.totalorder 1, %s9
      %p147 = scmp.lt.s32.totalorder %s9, 3
      %p148 = pnand %p146, %p147
      %p149 = pneg %p148
      // Predicated region
      $region9: #{vim_backbone_forward.8} parent=5 // pred_check
        _
      $region10: #{vim_backbone_forward.8} parent=5 // pred_check_branch
        %151 = sbr.rel (%p148) target = $region12
      $region11: #{vim_backbone_forward.8} parent=5 // pred_region
        %s152 = ssub.s32 %s9, 1
        // Predicated region
        $region13: #{vim_backbone_forward.8} parent=11 // pred_check
          %p153 = pneg %p56
        $region14: #{vim_backbone_forward.8} parent=11 // pred_check_branch
          %155 = sbr.rel (%p153) target = $region16
        $region15: #{vim_backbone_forward.8} parent=11 // pred_region
          %s156 = smul.u32 4, %s19
          %p157 = scmp.lt.s32.totalorder %s156, 3
          %s158 = scalar_select %p157, %s156, 3
          %p159 = scmp.lt.s32.totalorder %s21, 0
          %s160 = scalar_select %p159, %s21, 0
          %s161 = sadd.s32 %s160, %s158
          %s162 = smul.addr %s161, 8
          %s163 = scalar_lea.vmem %s0, %s162
          %s164 = smul.u32 4, %s19
        $region16: #{vim_backbone_forward.8} parent=11 // pred_fallthru
          _
      $region12: #{vim_backbone_forward.8} parent=5 // pred_fallthru
        _
      %p165 = scmp.lt.s32.totalorder %s9, 2
      // Predicated region
      $region17: #{vim_backbone_forward.8} parent=5 // pred_check
        %p166 = pneg %p165
      $region18: #{vim_backbone_forward.8} parent=5 // pred_check_branch
        %168 = sbr.rel (%p166) target = $region20
      $region19: #{vim_backbone_forward.8} parent=5 // pred_region
        // Predicated region
        $region21: #{vim_backbone_forward.8} parent=19 // pred_check
          %p169 = pneg %p78
        $region22: #{vim_backbone_forward.8} parent=19 // pred_check_branch
          %171 = sbr.rel (%p169) target = $region24
        $region23: #{vim_backbone_forward.8} parent=19 // pred_region
          %s172 = sand.u32 %s68, 1
          %s173 = sand.u32 %s68, 1
          %s174 = smul.addr %s173, 48
          %s175 = scalar_lea.vmem [#allocation3], %s174
          %s176 = smul.u32 4, %s18
          %s177 = smul.u32 3, %s17
          %s178 = smul.addr %s176, 6
          %s179 = sadd.s32 %s177, %s178
          %s180 = smul.addr %s179, 4
          %s181 = scalar_lea.vmem %s1, %s180
          // Predicated region
          $region25: #{vim_backbone_forward.8} parent=23 // pred_check
            _
          $region26: #{vim_backbone_forward.8} parent=23 // pred_check_branch
            %183 = sbr.rel (0) target = $region28
          $region27: #{vim_backbone_forward.8} parent=23 // pred_region
            // Predicated region
            $region29: #{vim_backbone_forward.8} parent=27 // pred_check
              _
            $region30: #{vim_backbone_forward.8} parent=27 // pred_check_branch
              %185 = sbr.rel (0) target = $region32
            $region31: #{vim_backbone_forward.8} parent=27 // pred_region
              %s186 = scalar_lea.vmem %s181, 8
              %s187 = scalar_lea.vmem %s175, 8 [#allocation3]
              loop: start=0, step=1, limit=1
              $region33: #{vim_backbone_forward.8} parent=31 // loop_pre_header
                _
              $region34: #{vim_backbone_forward.8} parent=31 // loop_header
                %s189 = sphi 0, %s193
                %p190 = scmp.ge.s32.totalorder %s189, 1
                %s194 = sphi %s181, %s181
                %s195 = sphi %s175, %s175
              $region35: #{vim_backbone_forward.8} parent=31 // loop_header_branch
                %192 = sbr.rel (%p190) target = $region39
              $region36: #{vim_backbone_forward.8} parent=31 // loop_body
                %v196 = vld [vmem:[%s194] sm:$0xff]
                %197 = vst [vmem:[%s195] sm:$0xff] %v196
                %v198 = vld [vmem:[%s194 + $0x18] sm:$0xff]
                %199 = vst [vmem:[%s195 + $0xc] sm:$0xff] %v198
                %v200 = vld [vmem:[%s194 + $0x30] sm:$0xff]
                %201 = vst [vmem:[%s195 + $0x18] sm:$0xff] %v200
                %v202 = vld [vmem:[%s194 + $0x48] sm:$0xff]
                %203 = vst [vmem:[%s195 + $0x24] sm:$0xff] %v202
              $region37: #{vim_backbone_forward.8} parent=31 // loop_footer
                %s193 = sadd.s32 1, %s189
              $region38: #{vim_backbone_forward.8} parent=31 // loop_footer_branch
                %188 = sbr.rel target = $region34
              $region39: #{vim_backbone_forward.8} parent=31 // loop_exit
                _
              %s205 = ssub.s32 16, 1
              loop: start=0, step=1, limit=1
              $region40: #{vim_backbone_forward.8} parent=31 // loop_pre_header
                _
              $region41: #{vim_backbone_forward.8} parent=31 // loop_header
                %s207 = sphi 0, %s211
                %p208 = scmp.ge.s32.totalorder %s207, 1
                %s212 = sphi %s186, %s186
                %s213 = sphi %s187, %s187
              $region42: #{vim_backbone_forward.8} parent=31 // loop_header_branch
                %210 = sbr.rel (%p208) target = $region46
              $region43: #{vim_backbone_forward.8} parent=31 // loop_body
                %v214 = vld [vmem:[%s212] sm:%s205]
                %215 = vst [vmem:[%s213] sm:%s205] %v214
                %v216 = vld [vmem:[%s212 + $0x18] sm:%s205]
                %217 = vst [vmem:[%s213 + $0xc] sm:%s205] %v216
                %v218 = vld [vmem:[%s212 + $0x30] sm:%s205]
                %219 = vst [vmem:[%s213 + $0x18] sm:%s205] %v218
                %v220 = vld [vmem:[%s212 + $0x48] sm:%s205]
                %221 = vst [vmem:[%s213 + $0x24] sm:%s205] %v220
              $region44: #{vim_backbone_forward.8} parent=31 // loop_footer
                %s211 = sadd.s32 1, %s207
              $region45: #{vim_backbone_forward.8} parent=31 // loop_footer_branch
                %206 = sbr.rel target = $region41
              $region46: #{vim_backbone_forward.8} parent=31 // loop_exit
                _
            $region32: #{vim_backbone_forward.8} parent=27 // pred_fallthru
              _
          $region28: #{vim_backbone_forward.8} parent=23 // pred_fallthru
            _
          %222 = vnop
        $region24: #{vim_backbone_forward.8} parent=19 // pred_fallthru
          _
        // Predicated region
        $region47: #{vim_backbone_forward.8} parent=19 // pred_check
          %p223 = pneg %p104
        $region48: #{vim_backbone_forward.8} parent=19 // pred_check_branch
          %225 = sbr.rel (%p223) target = $region50
        $region49: #{vim_backbone_forward.8} parent=19 // pred_region
          %s226 = smul.u32 3, %s17
          %p227 = scmp.lt.s32.totalorder %s226, 5
          %s228 = scalar_select %p227, %s226, 5
          %s229 = scalar_lea.vmem %s2, %s228
          %s230 = smul.u32 3, %s17
        $region50: #{vim_backbone_forward.8} parent=19 // pred_fallthru
          _
      $region20: #{vim_backbone_forward.8} parent=5 // pred_fallthru
        _
      %p231 = scmp.le.s32.totalorder 1, %s9
      %p232 = scmp.lt.s32.totalorder %s9, 3
      %p233 = pnand %p231, %p232
      %p234 = pneg %p233
      // Predicated region
      $region51: #{vim_backbone_forward.8} parent=5 // pred_check
        _
      $region52: #{vim_backbone_forward.8} parent=5 // pred_check_branch
        %236 = sbr.rel (%p233) target = $region54
      $region53: #{vim_backbone_forward.8} parent=5 // pred_region
        %s237 = ssub.s32 %s9, 1
        %s238 = sand.u32 %s71, 1
        %s239 = sand.u32 %s71, 1
        %s240 = smul.addr %s239, 48
        %s241 = scalar_lea.vmem [#allocation3], %s240
        // Predicated region
        $region55: #{vim_backbone_forward.8} parent=53 // pred_check
          %p242 = pneg %p84
        $region56: #{vim_backbone_forward.8} parent=53 // pred_check_branch
          %244 = sbr.rel (%p242) target = $region58
        $region57: #{vim_backbone_forward.8} parent=53 // pred_region
          _
        $region58: #{vim_backbone_forward.8} parent=53 // pred_fallthru
          _
        %s245 = smul.u32 4, %s19
        %p246 = scmp.lt.s32.totalorder %s245, 3
        %s247 = scalar_select %p246, %s245, 3
        %p248 = scmp.lt.s32.totalorder %s21, 0
        %s249 = scalar_select %p248, %s21, 0
        %s250 = sadd.s32 %s249, %s247
        %s251 = smul.addr %s250, 8
        %s252 = scalar_lea.vmem %s0, %s251
        %p253 = pneg %p56
        %p254 = pneg %p53
        %s255 = sand.u32 %s71, 1
        %s256 = sand.u32 %s71, 1
        %s257 = smul.addr %s256, 48
        %s258 = scalar_lea.vmem [#allocation3], %s257
        %p259 = pneg %p84
        %p260 = pneg %p81
        %s261 = smul.u32 3, %s20
        %p262 = scmp.lt.s32.totalorder %s261, 5
        %s263 = scalar_select %p262, %s261, 5
        %s264 = scalar_lea.vmem %s2, %s263
        %p265 = pneg %p110
        %p266 = pneg %p107
        %p267 = pneg %p138
        %p268 = pneg %p135
        %s269 = sand.u32 %s125, 1
        %s270 = sand.u32 %s125, 1
        %s271 = smul.addr %s270, 96
        %s272 = scalar_lea.vmem [#allocation4], %s271
        %s273 = smul.u32 4, %s19
        %p274 = scmp.lt.s32.totalorder %s273, 3
        %s275 = scalar_select %p274, %s273, 3
        %p276 = scmp.lt.s32.totalorder %s21, 0
        %s277 = scalar_select %p276, %s21, 0
        %s278 = sadd.s32 %s277, %s275
        %s279 = smul.addr %s278, 8
        %s280 = scalar_lea.vmem %s0, %s279
        %s281 = smul.u32 4, %s19
        %s282 = smul.u32 4, %s21
        %s283 = smul.u32 3, %s20
        %s284 = smul.u32 3, %s20
        %p285 = scmp.lt.s32.totalorder %s284, 5
        %s286 = scalar_select %p285, %s284, 5
        %s287 = scalar_lea.vmem %s2, %s286
        %s288 = smul.u32 3, %s20
        %s289 = smul.u32 4, %s19
        %s290 = smul.u32 3, %s20
        %p292 = scmp.eq.s32.totalorder %s21, 0
        // Predicated region
        $region59: #{vim_backbone_forward.8} parent=53 // pred_check
          %p293 = pneg %p292
        $region60: #{vim_backbone_forward.8} parent=53 // pred_check_branch
          %295 = sbr.rel (%p293) target = $region62
        $region61: #{vim_backbone_forward.8} parent=53 // pred_region
          %296 = vst [vmem:[#allocation2] sm:$0xff] 0.0
          %297 = vst [vmem:[#allocation2 + $0x8] sm:$0xff] 0.0
          %298 = vst [vmem:[#allocation2 + $0x10] sm:$0xff] 0.0
          %299 = vst [vmem:[#allocation2 + $0x18] sm:$0xff] 0.0
          %300 = vst [vmem:[#allocation2 + $0x20] sm:$0xff] 0.0
          %301 = vst [vmem:[#allocation2 + $0x28] sm:$0xff] 0.0
          %302 = vst [vmem:[#allocation2 + $0x30] sm:$0xff] 0.0
          %303 = vst [vmem:[#allocation2 + $0x38] sm:$0xff] 0.0
          %304 = vst [vmem:[#allocation2 + $0x40] sm:$0xff] 0.0
          %305 = vst [vmem:[#allocation2 + $0x48] sm:$0xff] 0.0
          %306 = vst [vmem:[#allocation2 + $0x50] sm:$0xff] 0.0
          %307 = vst [vmem:[#allocation2 + $0x58] sm:$0xff] 0.0
        $region62: #{vim_backbone_forward.8} parent=53 // pred_fallthru
          _
        %v308 = vld [vmem:[#allocation2] sm:$0xff]
        %v309 = vld [vmem:[#allocation2 + $0x8] sm:$0xff]
        %v310 = vld [vmem:[#allocation2 + $0x10] sm:$0xff]
        %v311 = vld [vmem:[#allocation2 + $0x18] sm:$0xff]
        %v312 = vld [vmem:[#allocation2 + $0x20] sm:$0xff]
        %v313 = vld [vmem:[#allocation2 + $0x28] sm:$0xff]
        %v314 = vld [vmem:[#allocation2 + $0x30] sm:$0xff]
        %v315 = vld [vmem:[#allocation2 + $0x38] sm:$0xff]
        %v316 = vld [vmem:[#allocation2 + $0x40] sm:$0xff]
        %v317 = vld [vmem:[#allocation2 + $0x48] sm:$0xff]
        %v318 = vld [vmem:[#allocation2 + $0x50] sm:$0xff]
        %v319 = vld [vmem:[#allocation2 + $0x58] sm:$0xff]
        %v320 = vld [vmem:[%s280] sm:$0xff]
        %v321 = vld [vmem:[%s280 + $0x8] sm:$0xff]
        %v322 = vld [vmem:[%s280 + $0x10] sm:$0xff]
        %v323 = vld [vmem:[%s280 + $0x18] sm:$0xff]
        %v324 = vpack.c.bf16 %v321, %v320
        %v325 = vpack.c.bf16 %v323, %v322
        %v326 = vld [vmem:[%s241] sm:$0xff]
        %v327 = vld [vmem:[%s241 + $0x8] sm:$0xf]
        %v328 = vld [vmem:[%s241 + $0xc] sm:$0xff]
        %v329 = vld [vmem:[%s241 + $0x14] sm:$0xf]
        %v330 = vld [vmem:[%s241 + $0x18] sm:$0xff]
        %v331 = vld [vmem:[%s241 + $0x20] sm:$0xf]
        %v332 = vld [vmem:[%s241 + $0x24] sm:$0xff]
        %v333 = vld [vmem:[%s241 + $0x2c] sm:$0xf]
        %v342 = vunpack.c.l.b16 %v326
        %v343 = vunpack.c.h.b16 %v326
        %v344 = vunpack.c.l.b16 %v327
        %v345 = vunpack.c.l.b16 %v328
        %v346 = vunpack.c.h.b16 %v328
        %v347 = vunpack.c.l.b16 %v329
        %v348 = vunpack.c.l.b16 %v330
        %v349 = vunpack.c.h.b16 %v330
        %v350 = vunpack.c.l.b16 %v331
        %v351 = vunpack.c.l.b16 %v332
        %v352 = vunpack.c.h.b16 %v332
        %v353 = vunpack.c.l.b16 %v333
        %v354 = vpack.c.b16 %v345, %v342
        %v355 = vpack.c.b16 %v346, %v343
        %v356 = vpack.c.b16 %v347, %v344
        %v357 = vpack.c.b16 %v351, %v348
        %v358 = vpack.c.b16 %v352, %v349
        %v359 = vpack.c.b16 %v353, %v350
        %vm366 = vcmask 261120
        %v368 = vsel %vm366, %v324, 0
        %v371 = vsel %vm366, %v325, 0
        %373 = vmatpush.bf16.msra.mxu0 0
        %374 = vmatpush.bf16.msra.mxu0 0
        %375 = vmatpush.bf16.msra.mxu0 0
        %376 = vmatpush.bf16.msra.mxu0 0
        %377 = vmatpush.bf16.msra.mxu0 0
        %378 = vmatpush.bf16.msra.mxu0 0
        %379 = vmatpush.bf16.msra.mxu0 %v357
        %380 = vmatpush.bf16.msra.mxu0 %v354
        %381 = vmatmul.bf16.gmra.mxu0 %v368
        %v382 = vpop.f32.mrf.mxu0
        %v383 = vadd.f32 0.0, %v382
        %v384 = vpop.f32.mrf.mxu0
        %v385 = vadd.f32 0.0, %v384
        %386 = vmatmul.bf16.gmra.mxu0 %v371
        %v387 = vpop.f32.mrf.mxu0
        %v388 = vadd.f32 0.0, %v387
        %v389 = vpop.f32.mrf.mxu0
        %v390 = vadd.f32 0.0, %v389
        %391 = vdwg.mxu0
        %392 = vmatpush.bf16.msra.mxu0 0
        %393 = vmatpush.bf16.msra.mxu0 0
        %394 = vmatpush.bf16.msra.mxu0 0
        %395 = vmatpush.bf16.msra.mxu0 0
        %396 = vmatpush.bf16.msra.mxu0 0
        %397 = vmatpush.bf16.msra.mxu0 0
        %398 = vmatpush.bf16.msra.mxu0 %v358
        %399 = vmatpush.bf16.msra.mxu0 %v355
        %400 = vmatmul.bf16.gmra.mxu0 %v368
        %v401 = vpop.f32.mrf.mxu0
        %v402 = vadd.f32 0.0, %v401
        %v403 = vpop.f32.mrf.mxu0
        %v404 = vadd.f32 0.0, %v403
        %405 = vmatmul.bf16.gmra.mxu0 %v371
        %v406 = vpop.f32.mrf.mxu0
        %v407 = vadd.f32 0.0, %v406
        %v408 = vpop.f32.mrf.mxu0
        %v409 = vadd.f32 0.0, %v408
        %410 = vdwg.mxu0
        %411 = vmatpush.bf16.msra.mxu0 0
        %412 = vmatpush.bf16.msra.mxu0 0
        %413 = vmatpush.bf16.msra.mxu0 0
        %414 = vmatpush.bf16.msra.mxu0 0
        %415 = vmatpush.bf16.msra.mxu0 0
        %416 = vmatpush.bf16.msra.mxu0 0
        %417 = vmatpush.bf16.msra.mxu0 %v359
        %418 = vmatpush.bf16.msra.mxu0 %v356
        %419 = vmatmul.bf16.gmra.mxu0 %v368
        %v420 = vpop.f32.mrf.mxu0
        %v421 = vadd.f32 0.0, %v420
        %v422 = vpop.f32.mrf.mxu0
        %v423 = vadd.f32 0.0, %v422
        %424 = vmatmul.bf16.gmra.mxu0 %v371
        %v425 = vpop.f32.mrf.mxu0
        %v426 = vadd.f32 0.0, %v425
        %v427 = vpop.f32.mrf.mxu0
        %v428 = vadd.f32 0.0, %v427
        %429 = vdwg.mxu0
        %v430 = vadd.f32 %v308, %v383
        %v431 = vadd.f32 %v309, %v402
        %v432 = vadd.f32 %v310, %v421
        %v433 = vadd.f32 %v311, %v385
        %v434 = vadd.f32 %v312, %v404
        %v435 = vadd.f32 %v313, %v423
        %v436 = vadd.f32 %v314, %v388
        %v437 = vadd.f32 %v315, %v407
        %v438 = vadd.f32 %v316, %v426
        %v439 = vadd.f32 %v317, %v390
        %v440 = vadd.f32 %v318, %v409
        %v441 = vadd.f32 %v319, %v428
        %442 = vst [vmem:[#allocation2] sm:$0xff] %v430
        %443 = vst [vmem:[#allocation2 + $0x8] sm:$0xff] %v431
        %444 = vst [vmem:[#allocation2 + $0x10] sm:$0xff] %v432
        %445 = vst [vmem:[#allocation2 + $0x18] sm:$0xff] %v433
        %446 = vst [vmem:[#allocation2 + $0x20] sm:$0xff] %v434
        %447 = vst [vmem:[#allocation2 + $0x28] sm:$0xff] %v435
        %448 = vst [vmem:[#allocation2 + $0x30] sm:$0xff] %v436
        %449 = vst [vmem:[#allocation2 + $0x38] sm:$0xff] %v437
        %450 = vst [vmem:[#allocation2 + $0x40] sm:$0xff] %v438
        %451 = vst [vmem:[#allocation2 + $0x48] sm:$0xff] %v439
        %452 = vst [vmem:[#allocation2 + $0x50] sm:$0xff] %v440
        %453 = vst [vmem:[#allocation2 + $0x58] sm:$0xff] %v441
        // Predicated region
        $region63: #{vim_backbone_forward.8} parent=53 // pred_check
          %p454 = pneg %p292
        $region64: #{vim_backbone_forward.8} parent=53 // pred_check_branch
          %456 = sbr.rel (%p454) target = $region66
        $region65: #{vim_backbone_forward.8} parent=53 // pred_region
          %v457 = vld [vmem:[#allocation2] sm:$0xff]
          %v458 = vld [vmem:[#allocation2 + $0x8] sm:$0xff]
          %v459 = vld [vmem:[#allocation2 + $0x10] sm:$0xff]
          %v460 = vld [vmem:[#allocation2 + $0x18] sm:$0xff]
          %v461 = vld [vmem:[#allocation2 + $0x20] sm:$0xff]
          %v462 = vld [vmem:[#allocation2 + $0x28] sm:$0xff]
          %v463 = vld [vmem:[#allocation2 + $0x30] sm:$0xff]
          %v464 = vld [vmem:[#allocation2 + $0x38] sm:$0xff]
          %v465 = vld [vmem:[#allocation2 + $0x40] sm:$0xff]
          %v466 = vld [vmem:[#allocation2 + $0x48] sm:$0xff]
          %v467 = vld [vmem:[#allocation2 + $0x50] sm:$0xff]
          %v468 = vld [vmem:[#allocation2 + $0x58] sm:$0xff]
          %v469 = vld [vmem:[%s287] sm:$0x7]
          %v471 = vperm.slane %v469, 0
          %v472 = vperm.slane %v469, 1
          %v473 = vperm.slane %v469, 2
          %v477 = vadd.f32 %v457, %v471
          %v478 = vadd.f32 %v458, %v472
          %v479 = vadd.f32 %v459, %v473
          %v480 = vadd.f32 %v460, %v471
          %v481 = vadd.f32 %v461, %v472
          %v482 = vadd.f32 %v462, %v473
          %v483 = vadd.f32 %v463, %v471
          %v484 = vadd.f32 %v464, %v472
          %v485 = vadd.f32 %v465, %v473
          %v486 = vadd.f32 %v466, %v471
          %v487 = vadd.f32 %v467, %v472
          %v488 = vadd.f32 %v468, %v473
          %489 = vst [vmem:[%s272] sm:$0xff] %v477
          %490 = vst [vmem:[%s272 + $0x8] sm:$0xff] %v478
          %491 = vst [vmem:[%s272 + $0x10] sm:$0xff] %v479
          %492 = vst [vmem:[%s272 + $0x18] sm:$0xff] %v480
          %493 = vst [vmem:[%s272 + $0x20] sm:$0xff] %v481
          %494 = vst [vmem:[%s272 + $0x28] sm:$0xff] %v482
          %495 = vst [vmem:[%s272 + $0x30] sm:$0xff] %v483
          %496 = vst [vmem:[%s272 + $0x38] sm:$0xff] %v484
          %497 = vst [vmem:[%s272 + $0x40] sm:$0xff] %v485
          %498 = vst [vmem:[%s272 + $0x48] sm:$0xff] %v486
          %499 = vst [vmem:[%s272 + $0x50] sm:$0xff] %v487
          %500 = vst [vmem:[%s272 + $0x58] sm:$0xff] %v488
        $region66: #{vim_backbone_forward.8} parent=53 // pred_fallthru
          _
        %s501 = sand.u32 %s125, 1
        %s502 = sand.u32 %s125, 1
        %s503 = smul.addr %s502, 96
        %s504 = scalar_lea.vmem [#allocation4], %s503
        // Predicated region
        $region67: #{vim_backbone_forward.8} parent=53 // pred_check
          %p505 = pneg %p135
        $region68: #{vim_backbone_forward.8} parent=53 // pred_check_branch
          %507 = sbr.rel (%p505) target = $region70
        $region69: #{vim_backbone_forward.8} parent=53 // pred_region
          %s508 = smul.u32 4, %s19
          %s509 = smul.u32 3, %s20
          %s510 = smul.addr %s508, 6
          %s511 = sadd.s32 %s509, %s510
          %s512 = smul.addr %s511, 8
          %s513 = scalar_lea.vmem %s3, %s512
          // Predicated region
          $region71: #{vim_backbone_forward.8} parent=69 // pred_check
            _
          $region72: #{vim_backbone_forward.8} parent=69 // pred_check_branch
            %515 = sbr.rel (0) target = $region74
          $region73: #{vim_backbone_forward.8} parent=69 // pred_region
            // Predicated region
            $region75: #{vim_backbone_forward.8} parent=73 // pred_check
              _
            $region76: #{vim_backbone_forward.8} parent=73 // pred_check_branch
              %517 = sbr.rel (0) target = $region78
            $region77: #{vim_backbone_forward.8} parent=73 // pred_region
              loop: start=0, step=1, limit=1
              $region79: #{vim_backbone_forward.8} parent=77 // loop_pre_header
                _
              $region80: #{vim_backbone_forward.8} parent=77 // loop_header
                %s519 = sphi 0, %s523
                %p520 = scmp.ge.s32.totalorder %s519, 1
                %s524 = sphi %s504, %s504
                %s525 = sphi %s513, %s513
              $region81: #{vim_backbone_forward.8} parent=77 // loop_header_branch
                %522 = sbr.rel (%p520) target = $region85
              $region82: #{vim_backbone_forward.8} parent=77 // loop_body
                %v526 = vld [vmem:[%s524] sm:$0xff]
                %527 = vst [vmem:[%s525] sm:$0xff] %v526
                %v528 = vld [vmem:[%s524 + $0x8] sm:$0xff]
                %529 = vst [vmem:[%s525 + $0x8] sm:$0xff] %v528
                %v530 = vld [vmem:[%s524 + $0x10] sm:$0xff]
                %531 = vst [vmem:[%s525 + $0x10] sm:$0xff] %v530
                %v532 = vld [vmem:[%s524 + $0x18] sm:$0xff]
                %533 = vst [vmem:[%s525 + $0x30] sm:$0xff] %v532
                %v534 = vld [vmem:[%s524 + $0x20] sm:$0xff]
                %535 = vst [vmem:[%s525 + $0x38] sm:$0xff] %v534
                %v536 = vld [vmem:[%s524 + $0x28] sm:$0xff]
                %537 = vst [vmem:[%s525 + $0x40] sm:$0xff] %v536
                %v538 = vld [vmem:[%s524 + $0x30] sm:$0xff]
                %539 = vst [vmem:[%s525 + $0x60] sm:$0xff] %v538
                %v540 = vld [vmem:[%s524 + $0x38] sm:$0xff]
                %541 = vst [vmem:[%s525 + $0x68] sm:$0xff] %v540
                %v542 = vld [vmem:[%s524 + $0x40] sm:$0xff]
                %543 = vst [vmem:[%s525 + $0x70] sm:$0xff] %v542
                %v544 = vld [vmem:[%s524 + $0x48] sm:$0xff]
                %545 = vst [vmem:[%s525 + $0x90] sm:$0xff] %v544
                %v546 = vld [vmem:[%s524 + $0x50] sm:$0xff]
                %547 = vst [vmem:[%s525 + $0x98] sm:$0xff] %v546
                %v548 = vld [vmem:[%s524 + $0x58] sm:$0xff]
                %549 = vst [vmem:[%s525 + $0xa0] sm:$0xff] %v548
              $region83: #{vim_backbone_forward.8} parent=77 // loop_footer
                %s523 = sadd.s32 1, %s519
              $region84: #{vim_backbone_forward.8} parent=77 // loop_footer_branch
                %518 = sbr.rel target = $region80
              $region85: #{vim_backbone_forward.8} parent=77 // loop_exit
                _
            $region78: #{vim_backbone_forward.8} parent=73 // pred_fallthru
              _
            // Predicated region
            $region86: #{vim_backbone_forward.8} parent=73 // pred_check
              _
            $region87: #{vim_backbone_forward.8} parent=73 // pred_check_branch
              %551 = sbr.rel target = $region89
            $region88: #{vim_backbone_forward.8} parent=73 // pred_region
              _
            $region89: #{vim_backbone_forward.8} parent=73 // pred_fallthru
              _
          $region74: #{vim_backbone_forward.8} parent=69 // pred_fallthru
            _
          %552 = vnop
        $region70: #{vim_backbone_forward.8} parent=53 // pred_fallthru
          _
      $region54: #{vim_backbone_forward.8} parent=5 // pred_fallthru
        _
      %p553 = scmp.le.s32.totalorder 2, %s9
      // Predicated region
      $region90: #{vim_backbone_forward.8} parent=5 // pred_check
        %p554 = pneg %p553
      $region91: #{vim_backbone_forward.8} parent=5 // pred_check_branch
        %556 = sbr.rel (%p554) target = $region93
      $region92: #{vim_backbone_forward.8} parent=5 // pred_region
        %s557 = ssub.s32 %s9, 2
        // Predicated region
        $region94: #{vim_backbone_forward.8} parent=92 // pred_check
          %p558 = pneg %p141
        $region95: #{vim_backbone_forward.8} parent=92 // pred_check_branch
          %560 = sbr.rel (%p558) target = $region97
        $region96: #{vim_backbone_forward.8} parent=92 // pred_region
          %s561 = sand.u32 %s126, 1
          %s562 = sand.u32 %s126, 1
          %s563 = smul.addr %s562, 96
          %s564 = scalar_lea.vmem [#allocation4], %s563
        $region97: #{vim_backbone_forward.8} parent=92 // pred_fallthru
          _
      $region93: #{vim_backbone_forward.8} parent=5 // pred_fallthru
        _
    $region6: #{vim_backbone_forward.8} parent=1 // loop_footer
      %s13 = sadd.s32 1, %s9
    $region7: #{vim_backbone_forward.8} parent=1 // loop_footer_branch
      %8 = sbr.rel target = $region3
    $region8: #{vim_backbone_forward.8} parent=1 // loop_exit
      _

// kernel: vim_backbone_forward.9
$region0: #{vim_backbone_forward.9}
  #allocation0 [shape = 'u32[]', space=smem, size = 0x4, offset = 0x4, fixed_abs, tag = 'smem constant byte address 0x4 - core index']
  #allocation1 [shape = 'u32[72,128]{1,0:T(1,128)}', space=vmem, size = 0x9000, scoped, tag = 'internal scratch']
  #allocation2 [shape = 'f32[32,256]{1,0:T(8,128)}', space=vmem, size = 0x8000, scoped, tag = 'scratch operand']
  %s0 = inlined_call_operand.vmem [shape: f32[32,32], index: 0, kind: input, shape index: {}]
  %s1 = inlined_call_operand.vmem [shape: bf16[32,256], index: 1, kind: input, shape index: {}]
  %s2 = inlined_call_operand.vmem [shape: f32[1,256], index: 2, kind: input, shape index: {}]
  %s3 = inlined_call_operand.vmem [shape: f32[32,256], index: 3, kind: output, shape index: {}]
  %s4 = sld [smem:[#allocation0]]
  $region30: #{vim_backbone_forward.9} parent=0
    _
  %s6 = ssub.s32 1, %s4
  %s7 = scalar_select 0, %s6, %s4
  // Predicated region
  $region2: #{vim_backbone_forward.9} parent=0 // pred_check
    _
  $region3: #{vim_backbone_forward.9} parent=0 // pred_check_branch
    %9 = sbr.rel (0) target = $region5
  $region4: #{vim_backbone_forward.9} parent=0 // pred_region
    _
  $region5: #{vim_backbone_forward.9} parent=0 // pred_fallthru
    _
  // Predicated region
  $region6: #{vim_backbone_forward.9} parent=0 // pred_check
    _
  $region7: #{vim_backbone_forward.9} parent=0 // pred_check_branch
    %11 = sbr.rel (0) target = $region9
  $region8: #{vim_backbone_forward.9} parent=0 // pred_region
    _
  $region9: #{vim_backbone_forward.9} parent=0 // pred_fallthru
    _
  // Predicated region
  $region10: #{vim_backbone_forward.9} parent=0 // pred_check
    _
  $region11: #{vim_backbone_forward.9} parent=0 // pred_check_branch
    %13 = sbr.rel (0) target = $region13
  $region12: #{vim_backbone_forward.9} parent=0 // pred_region
    _
  $region13: #{vim_backbone_forward.9} parent=0 // pred_fallthru
    _
  %p15 = scmp.eq.s32.totalorder 0, 0
  // Predicated region
  $region14: #{vim_backbone_forward.9} parent=0 // pred_check
    %p16 = pneg %p15
  $region15: #{vim_backbone_forward.9} parent=0 // pred_check_branch
    %18 = sbr.rel (%p16) target = $region17
  $region16: #{vim_backbone_forward.9} parent=0 // pred_region
    %19 = vst [vmem:[#allocation2] sm:$0xff] 0.0
    %20 = vst [vmem:[#allocation2 + $0x8] sm:$0xff] 0.0
    %21 = vst [vmem:[#allocation2 + $0x10] sm:$0xff] 0.0
    %22 = vst [vmem:[#allocation2 + $0x18] sm:$0xff] 0.0
    %23 = vst [vmem:[#allocation2 + $0x20] sm:$0xff] 0.0
    %24 = vst [vmem:[#allocation2 + $0x28] sm:$0xff] 0.0
    %25 = vst [vmem:[#allocation2 + $0x30] sm:$0xff] 0.0
    %26 = vst [vmem:[#allocation2 + $0x38] sm:$0xff] 0.0
  $region17: #{vim_backbone_forward.9} parent=0 // pred_fallthru
    _
  %v27 = vld [vmem:[#allocation2] sm:$0xff]
  %v28 = vld [vmem:[#allocation2 + $0x8] sm:$0xff]
  %v29 = vld [vmem:[#allocation2 + $0x10] sm:$0xff]
  %v30 = vld [vmem:[#allocation2 + $0x18] sm:$0xff]
  %v31 = vld [vmem:[#allocation2 + $0x20] sm:$0xff]
  %v32 = vld [vmem:[#allocation2 + $0x28] sm:$0xff]
  %v33 = vld [vmem:[#allocation2 + $0x30] sm:$0xff]
  %v34 = vld [vmem:[#allocation2 + $0x38] sm:$0xff]
  %v35 = vld [vmem:[%s0] sm:$0xff]
  %v36 = vld [vmem:[%s0 + $0x8] sm:$0xff]
  %v37 = vld [vmem:[%s0 + $0x10] sm:$0xff]
  %v38 = vld [vmem:[%s0 + $0x18] sm:$0xff]
  %v39 = vpack.c.bf16 %v36, %v35
  %v40 = vpack.c.bf16 %v38, %v37
  %v41 = vld [vmem:[%s1] sm:$0xff]
  %v42 = vld [vmem:[%s1 + $0x8] sm:$0xff]
  %v43 = vld [vmem:[%s1 + $0x10] sm:$0xff]
  %v44 = vld [vmem:[%s1 + $0x18] sm:$0xff]
  %v49 = vunpack.c.l.b16 %v41
  %v50 = vunpack.c.h.b16 %v41
  %v51 = vunpack.c.l.b16 %v42
  %v52 = vunpack.c.h.b16 %v42
  %v53 = vunpack.c.l.b16 %v43
  %v54 = vunpack.c.h.b16 %v43
  %v55 = vunpack.c.l.b16 %v44
  %v56 = vunpack.c.h.b16 %v44
  %v57 = vpack.c.b16 %v51, %v49
  %v58 = vpack.c.b16 %v52, %v50
  %v59 = vpack.c.b16 %v55, %v53
  %v60 = vpack.c.b16 %v56, %v54
  %vm65 = vcmask 261120
  %v67 = vsel %vm65, %v39, 0
  %v70 = vsel %vm65, %v40, 0
  %72 = vmatpush.bf16.msra.mxu0 0
  %73 = vmatpush.bf16.msra.mxu0 0
  %74 = vmatpush.bf16.msra.mxu0 0
  %75 = vmatpush.bf16.msra.mxu0 0
  %76 = vmatpush.bf16.msra.mxu0 0
  %77 = vmatpush.bf16.msra.mxu0 0
  %78 = vmatpush.bf16.msra.mxu0 %v59
  %79 = vmatpush.bf16.msra.mxu0 %v57
  %80 = vmatmul.bf16.gmra.mxu0 %v67
  %v81 = vpop.f32.mrf.mxu0
  %v82 = vadd.f32 0.0, %v81
  %v83 = vpop.f32.mrf.mxu0
  %v84 = vadd.f32 0.0, %v83
  %85 = vmatmul.bf16.gmra.mxu0 %v70
  %v86 = vpop.f32.mrf.mxu0
  %v87 = vadd.f32 0.0, %v86
  %v88 = vpop.f32.mrf.mxu0
  %v89 = vadd.f32 0.0, %v88
  %90 = vdwg.mxu0
  %91 = vmatpush.bf16.msra.mxu0 0
  %92 = vmatpush.bf16.msra.mxu0 0
  %93 = vmatpush.bf16.msra.mxu0 0
  %94 = vmatpush.bf16.msra.mxu0 0
  %95 = vmatpush.bf16.msra.mxu0 0
  %96 = vmatpush.bf16.msra.mxu0 0
  %97 = vmatpush.bf16.msra.mxu0 %v60
  %98 = vmatpush.bf16.msra.mxu0 %v58
  %99 = vmatmul.bf16.gmra.mxu0 %v67
  %v100 = vpop.f32.mrf.mxu0
  %v101 = vadd.f32 0.0, %v100
  %v102 = vpop.f32.mrf.mxu0
  %v103 = vadd.f32 0.0, %v102
  %104 = vmatmul.bf16.gmra.mxu0 %v70
  %v105 = vpop.f32.mrf.mxu0
  %v106 = vadd.f32 0.0, %v105
  %v107 = vpop.f32.mrf.mxu0
  %v108 = vadd.f32 0.0, %v107
  %109 = vdwg.mxu0
  %v110 = vadd.f32 %v27, %v82
  %v111 = vadd.f32 %v28, %v101
  %v112 = vadd.f32 %v29, %v84
  %v113 = vadd.f32 %v30, %v103
  %v114 = vadd.f32 %v31, %v87
  %v115 = vadd.f32 %v32, %v106
  %v116 = vadd.f32 %v33, %v89
  %v117 = vadd.f32 %v34, %v108
  %118 = vst [vmem:[#allocation2] sm:$0xff] %v110
  %119 = vst [vmem:[#allocation2 + $0x8] sm:$0xff] %v111
  %120 = vst [vmem:[#allocation2 + $0x10] sm:$0xff] %v112
  %121 = vst [vmem:[#allocation2 + $0x18] sm:$0xff] %v113
  %122 = vst [vmem:[#allocation2 + $0x20] sm:$0xff] %v114
  %123 = vst [vmem:[#allocation2 + $0x28] sm:$0xff] %v115
  %124 = vst [vmem:[#allocation2 + $0x30] sm:$0xff] %v116
  %125 = vst [vmem:[#allocation2 + $0x38] sm:$0xff] %v117
  // Predicated region
  $region18: #{vim_backbone_forward.9} parent=0 // pred_check
    %p126 = pneg %p15
  $region19: #{vim_backbone_forward.9} parent=0 // pred_check_branch
    %128 = sbr.rel (%p126) target = $region21
  $region20: #{vim_backbone_forward.9} parent=0 // pred_region
    %v129 = vld [vmem:[#allocation2] sm:$0xff]
    %v130 = vld [vmem:[#allocation2 + $0x8] sm:$0xff]
    %v131 = vld [vmem:[#allocation2 + $0x10] sm:$0xff]
    %v132 = vld [vmem:[#allocation2 + $0x18] sm:$0xff]
    %v133 = vld [vmem:[#allocation2 + $0x20] sm:$0xff]
    %v134 = vld [vmem:[#allocation2 + $0x28] sm:$0xff]
    %v135 = vld [vmem:[#allocation2 + $0x30] sm:$0xff]
    %v136 = vld [vmem:[#allocation2 + $0x38] sm:$0xff]
    %v137 = vld [vmem:[%s2] sm:$0x3]
    %v139 = vperm.slane %v137, 0
    %v140 = vperm.slane %v137, 1
    %v143 = vadd.f32 %v129, %v139
    %v144 = vadd.f32 %v130, %v140
    %v145 = vadd.f32 %v131, %v139
    %v146 = vadd.f32 %v132, %v140
    %v147 = vadd.f32 %v133, %v139
    %v148 = vadd.f32 %v134, %v140
    %v149 = vadd.f32 %v135, %v139
    %v150 = vadd.f32 %v136, %v140
    %151 = vst [vmem:[%s3] sm:$0xff] %v143
    %152 = vst [vmem:[%s3 + $0x8] sm:$0xff] %v144
    %153 = vst [vmem:[%s3 + $0x10] sm:$0xff] %v145
    %154 = vst [vmem:[%s3 + $0x18] sm:$0xff] %v146
    %155 = vst [vmem:[%s3 + $0x20] sm:$0xff] %v147
    %156 = vst [vmem:[%s3 + $0x28] sm:$0xff] %v148
    %157 = vst [vmem:[%s3 + $0x30] sm:$0xff] %v149
    %158 = vst [vmem:[%s3 + $0x38] sm:$0xff] %v150
  $region21: #{vim_backbone_forward.9} parent=0 // pred_fallthru
    _
  // Predicated region
  $region22: #{vim_backbone_forward.9} parent=0 // pred_check
    _
  $region23: #{vim_backbone_forward.9} parent=0 // pred_check_branch
    %160 = sbr.rel (0) target = $region25
  $region24: #{vim_backbone_forward.9} parent=0 // pred_region
    _
  $region25: #{vim_backbone_forward.9} parent=0 // pred_fallthru
    _
  // Predicated region
  $region26: #{vim_backbone_forward.9} parent=0 // pred_check
    _
  $region27: #{vim_backbone_forward.9} parent=0 // pred_check_branch
    %162 = sbr.rel (0) target = $region29
  $region28: #{vim_backbone_forward.9} parent=0 // pred_region
    _
  $region29: #{vim_backbone_forward.9} parent=0 // pred_fallthru
    _

</llo_original>
